<compile_context>
chip_gen: v6e
topology: v6e:2x2x1
jax: 0.10.0
libtpu: 0.0.40
codegen_flags: <defaults>
</compile_context>

<pallas_src>
import functools

import numpy as np
import jax
import jax.numpy as jnp
from jax.experimental import pallas as pl
from jax.experimental.pallas import tpu as pltpu

BN_EPS = 1e-5
_LANE = 128


def _conv_relu_pool_stats_kernel(x_ref, w_ref, b_ref,
                                 pooled_ref, sum_ref, sq_ref,
                                 *, KH, KW, TILE_PH, PW, PH, CPAD):
    """One (batch, pooled-row-tile) grid step:
       in-kernel im2col -> conv matmul -> bias+ReLU -> 2x2 avg pool (VPU adds)
       -> per-tile BatchNorm partial sums."""
    OHT = 2 * TILE_PH            # conv-output rows needed by this tile
    OWE = 2 * PW                 # conv-output cols kept by the floor-mode pool
    t = pl.program_id(1)
    oh0 = OHT * t                # first conv-output row of this tile

    # ---- in-kernel im2col: KH*KW shifted views of the resident image (no 9x HBM blowup)
    cols = []
    for kh in range(KH):
        for kw in range(KW):
            cols.append(x_ref[pl.ds(oh0 + kh, OHT), pl.ds(kw, OWE), :])
    patches = jnp.concatenate(cols, axis=-1)             # (OHT, OWE, KH*KW*Cin)
    lhs = patches.reshape(OHT * OWE, patches.shape[-1])

    # ---- conv as a single lane-dense matmul, f32 accumulation on the MXU
    conv = jnp.dot(lhs, w_ref[...], preferred_element_type=jnp.float32)  # (OHT*OWE, CPAD)
    conv = jnp.maximum(conv + b_ref[...], 0.0)           # bias + ReLU (f32 epilogue)

    # ---- AvgPool2d(2): plain VPU adds, no pool matrix / second matmul
    cv = conv.reshape(TILE_PH, 2, OWE, CPAD)
    vsum = cv[:, 0] + cv[:, 1]                           # vertical pair sum
    hv = vsum.reshape(TILE_PH, PW, 2, CPAD)
    pooled = 0.25 * (hv[:, :, 0, :] + hv[:, :, 1, :])    # (TILE_PH, PW, CPAD)
    pooled = pooled.reshape(TILE_PH * PW, CPAD)
    pooled_ref[...] = pooled

    # ---- per-tile BN partial statistics (mask rows that only exist due to H padding)
    valid_rows = jnp.minimum(TILE_PH, PH - t * TILE_PH) * PW
    row_ids = jax.lax.broadcasted_iota(jnp.int32, (TILE_PH * PW, 1), 0)
    pm = jnp.where(row_ids < valid_rows, pooled, 0.0)
    s = jnp.sum(pm, axis=0, keepdims=True)               # (1, CPAD)
    q = jnp.sum(pm * pm, axis=0, keepdims=True)
    sum_ref[...] = jnp.broadcast_to(s, (8, CPAD))
    sq_ref[...] = jnp.broadcast_to(q, (8, CPAD))


def _bn_apply_kernel(pooled_ref, scale_ref, shift_ref, out_ref):
    # y = (x - mean) * gamma / sqrt(var + eps) + beta  folded into scale/shift
    out_ref[...] = pooled_ref[...] * scale_ref[...] + shift_ref[...]


def conv_block_forward(x_nchw, weight_oihw, bias, gamma, beta,
                       compute_dtype=jnp.bfloat16):
    """Forward of the PyTorch `Conv` block. x: (N, Cin, H, W) -> (N, Cout, PH, PW)."""
    N, Cin, H, W = x_nchw.shape
    Cout, _, KH, KW = weight_oihw.shape
    OH, OW = H - KH + 1, W - KW + 1
    PH, PW = OH // 2, OW // 2
    assert PH > 0 and PW > 0, "pooled output must be non-empty"

    CPAD = pl.cdiv(Cout, _LANE) * _LANE                  # lane-dense output channels
    OWE = 2 * PW
    # tile over pooled rows; keep the conv intermediate ~<= 8K rows x CPAD f32 (fits v7x 64MiB)
    TILE_PH = max(1, min(PH, 4096 // max(OWE, 1)))
    T = -(-PH // TILE_PH)
    PH_pad = T * TILE_PH
    H_pad = 2 * PH_pad + KH - 1
    RPT = TILE_PH * PW                                   # pooled rows per tile
    K2D = KH * KW * Cin

    # ---- cheap wrapper-side layout prep: NCHW -> NHWC, pad H for whole tiles, cast for MXU
    x_nhwc = jnp.transpose(x_nchw, (0, 2, 3, 1))
    if H_pad > H:
        x_nhwc = jnp.pad(x_nhwc, ((0, 0), (0, H_pad - H), (0, 0), (0, 0)))
    x_nhwc = x_nhwc.astype(compute_dtype)
    # weight -> (KH*KW*Cin, Cout) matching the (kh, kw, cin) patch ordering; pad Cout -> CPAD
    w2d = jnp.transpose(weight_oihw, (2, 3, 1, 0)).reshape(K2D, Cout)
    w2d = jnp.pad(w2d, ((0, 0), (0, CPAD - Cout))).astype(compute_dtype)
    b_row = jnp.pad(bias.astype(jnp.float32), (0, CPAD - Cout)).reshape(1, CPAD)

    kernel1 = functools.partial(_conv_relu_pool_stats_kernel,
                                KH=KH, KW=KW, TILE_PH=TILE_PH, PW=PW, PH=PH, CPAD=CPAD)

    itemsize = jnp.dtype(compute_dtype).itemsize
    cost = pl.CostEstimate(
        flops=2 * N * T * (2 * TILE_PH) * OWE * K2D * CPAD,
        transcendentals=0,
        bytes_accessed=(x_nhwc.size * itemsize + w2d.size * itemsize
                        + N * T * (RPT + 16) * CPAD * 4),
    )

    # ---------- kernel 1: conv + ReLU + avg-pool + BN partial stats ----------
    pooled, psum, psq = pl.pallas_call(
        kernel1,
        out_shape=(
            jax.ShapeDtypeStruct((N * T, RPT, CPAD), jnp.float32),   # pooled activations
            jax.ShapeDtypeStruct((N * T, 8, CPAD), jnp.float32),     # per-tile sum
            jax.ShapeDtypeStruct((N * T, 8, CPAD), jnp.float32),     # per-tile sum of squares
        ),
        grid_spec=pltpu.PrefetchScalarGridSpec(
            num_scalar_prefetch=0,
            grid=(N, T),                                             # t varies fastest
            in_specs=[
                # whole image resident across the t axis (index_map ignores t)
                pl.BlockSpec((None, H_pad, W, Cin), lambda n, t: (n, 0, 0, 0)),
                pl.BlockSpec((K2D, CPAD), lambda n, t: (0, 0)),      # weights: resident
                pl.BlockSpec((1, CPAD), lambda n, t: (0, 0)),        # bias: resident
            ],
            out_specs=(
                pl.BlockSpec((None, RPT, CPAD), lambda n, t: (n * T + t, 0, 0)),
                pl.BlockSpec((None, 8, CPAD), lambda n, t: (n * T + t, 0, 0)),
                pl.BlockSpec((None, 8, CPAD), lambda n, t: (n * T + t, 0, 0)),
            ),
        ),
        compiler_params=pltpu.CompilerParams(
            dimension_semantics=("parallel", "parallel"),            # megacore-shardable
            vmem_limit_bytes=32 * 1024 * 1024),                      # headroom on v7x 64MiB
        cost_estimate=cost,
    )(x_nhwc, w2d, b_row)

    # ---------- tiny cross-tile BN finalize (Cout-length vectors) ----------
    count = float(N * PH * PW)
    s = jnp.sum(psum[:, 0, :], axis=0)
    q = jnp.sum(psq[:, 0, :], axis=0)
    mean = s / count
    var = jnp.maximum(q / count - mean * mean, 0.0)       # biased (training-mode) variance
    gamma_p = jnp.pad(gamma.astype(jnp.float32), (0, CPAD - Cout))
    beta_p = jnp.pad(beta.astype(jnp.float32), (0, CPAD - Cout))
    scale = gamma_p * jax.lax.rsqrt(var + BN_EPS)
    shift = beta_p - mean * scale

    # ---------- kernel 2: apply BN affine, tiled over pooled rows ----------
    out = pl.pallas_call(
        _bn_apply_kernel,
        out_shape=jax.ShapeDtypeStruct((N * T, RPT, CPAD), jnp.float32),
        grid_spec=pltpu.PrefetchScalarGridSpec(
            num_scalar_prefetch=0,
            grid=(N * T,),
            in_specs=[
                pl.BlockSpec((None, RPT, CPAD), lambda i: (i, 0, 0)),
                pl.BlockSpec((1, CPAD), lambda i: (0, 0)),           # resident
                pl.BlockSpec((1, CPAD), lambda i: (0, 0)),           # resident
            ],
            out_specs=pl.BlockSpec((None, RPT, CPAD), lambda i: (i, 0, 0)),
        ),
        compiler_params=pltpu.CompilerParams(
            dimension_semantics=("parallel",),
            vmem_limit_bytes=32 * 1024 * 1024),
    )(pooled, scale.reshape(1, CPAD), shift.reshape(1, CPAD))

    # (N*T, RPT, CPAD) -> (N, PH_pad, PW, CPAD) -> crop pad/lane-pad -> NCHW
    out = out.reshape(N, PH_pad, PW, CPAD)[:, :PH, :, :Cout]
    return jnp.transpose(out, (0, 3, 1, 2))


def _reference(x, w, b, gamma, beta, compute_dtype):
    conv = jax.lax.conv_general_dilated(
        x.astype(compute_dtype), w.astype(compute_dtype),
        window_strides=(1, 1), padding="VALID",
        dimension_numbers=("NCHW", "OIHW", "NCHW"),
        preferred_element_type=jnp.float32)
    conv = jnp.maximum(conv + b[None, :, None, None], 0.0)
    N, C, OH, OW = conv.shape
    PH, PW = OH // 2, OW // 2
    pooled = conv[:, :, :2 * PH, :2 * PW].reshape(N, C, PH, 2, PW, 2).mean(axis=(3, 5))
    mean = pooled.mean(axis=(0, 2, 3), keepdims=True)
    var = ((pooled - mean) ** 2).mean(axis=(0, 2, 3), keepdims=True)
    return (pooled - mean) / jnp.sqrt(var + BN_EPS) * gamma[None, :, None, None] \
        + beta[None, :, None, None]


if __name__ == "__main__":
    N, Cin, H, W = 2, 4, 16, 16
    Cout, K = 8, 3

    key = jax.random.PRNGKey(0)
    kx, kw, kb = jax.random.split(key, 3)
    x = jax.random.normal(kx, (N, Cin, H, W), dtype=jnp.float32)
    # deterministic synthetic parameter init (shapes match nn.Conv2d / nn.BatchNorm2d)
    weight = jax.random.normal(kw, (Cout, Cin, K, K), dtype=jnp.float32) * 0.1
    bias = jax.random.normal(kb, (Cout,), dtype=jnp.float32) * 0.1
    gamma = jnp.ones((Cout,), jnp.float32)     # BatchNorm weight init
    beta = jnp.zeros((Cout,), jnp.float32)     # BatchNorm bias init

    fwd = jax.jit(conv_block_forward)
    out = fwd(x, weight, bias, gamma, beta)
    out = jax.block_until_ready(out)

    # reference with matching (bf16 operand, f32 accumulate) matmul precision
    ref = _reference(x, weight, bias, gamma, beta, jnp.bfloat16)
    assert out.shape == (N, Cout, (H - K + 1) // 2, (W - K + 1) // 2), out.shape
    assert np.allclose(np.asarray(out), np.asarray(ref), atol=1e-3, rtol=1e-3)
    print("KERNEL_OK")
</pallas_src>

<mosaic_0001>
module attributes {stable_mosaic.version = 11 : i64} {
  func.func @_bn_apply_kernel(%arg0: i32, %arg1: memref<1x49x128xf32, #tpu.memory_space<vmem>>, %arg2: memref<1x128xf32, #tpu.memory_space<vmem>>, %arg3: memref<1x128xf32, #tpu.memory_space<vmem>>, %arg4: memref<1x49x128xf32, #tpu.memory_space<vmem>>) attributes {dimension_semantics = [#tpu.dimension_semantics<parallel>], iteration_bounds = array<i64: 2>, scalar_prefetch = 0 : i64, scratch_operands = 0 : i64, tpu.core_type = #tpu.core_type<tc>, window_params = [{transform_indices = @transform_0, window_bounds = array<i64: 1, 49, 128>}, {pipeline_mode = #tpu.pipeline_mode<synchronous>, transform_indices = @transform_1, window_bounds = array<i64: 1, 128>}, {pipeline_mode = #tpu.pipeline_mode<synchronous>, transform_indices = @transform_2, window_bounds = array<i64: 1, 128>}, {transform_indices = @transform_3, window_bounds = array<i64: 1, 49, 128>}]} {
    %c0 = arith.constant 0 : index
    %c0_0 = arith.constant 0 : index
    %c0_1 = arith.constant 0 : index
    %0 = vector.load %arg1[%c0, %c0_0, %c0_1] : memref<1x49x128xf32, #tpu.memory_space<vmem>>, vector<1x49x128xf32>
    %1 = vector.shape_cast %0 : vector<1x49x128xf32> to vector<49x128xf32>
    %c0_2 = arith.constant 0 : index
    %c0_3 = arith.constant 0 : index
    %2 = vector.load %arg2[%c0_2, %c0_3] : memref<1x128xf32, #tpu.memory_space<vmem>>, vector<1x128xf32>
    %3 = vector.broadcast %2 : vector<1x128xf32> to vector<49x128xf32>
    %4 = arith.mulf %1, %3 : vector<49x128xf32>
    %c0_4 = arith.constant 0 : index
    %c0_5 = arith.constant 0 : index
    %5 = vector.load %arg3[%c0_4, %c0_5] : memref<1x128xf32, #tpu.memory_space<vmem>>, vector<1x128xf32>
    %6 = vector.broadcast %5 : vector<1x128xf32> to vector<49x128xf32>
    %7 = arith.addf %4, %6 : vector<49x128xf32>
    %c0_6 = arith.constant 0 : index
    %c0_7 = arith.constant 0 : index
    %c0_8 = arith.constant 0 : index
    %8 = vector.load %arg4[%c0_6, %c0_7, %c0_8] : memref<1x49x128xf32, #tpu.memory_space<vmem>>, vector<1x49x128xf32>
    %9 = vector.shape_cast %8 : vector<1x49x128xf32> to vector<49x128xf32>
    %10 = vector.shape_cast %7 : vector<49x128xf32> to vector<1x49x128xf32>
    tpu.vector_store %arg4[%c0_6, %c0_7, %c0_8], %10 {strides = array<i32>} : memref<1x49x128xf32, #tpu.memory_space<vmem>>, vector<1x49x128xf32>,
    return
  }
  func.func @transform_0(%arg0: i32) -> (i32, i32, i32) {
    %c0_i32 = arith.constant 0 : i32
    %c0_i32_0 = arith.constant 0 : i32
    %c0_i32_1 = arith.constant 0 : i32
    return %arg0, %c0_i32, %c0_i32_0 : i32, i32, i32
  }
  func.func @transform_1(%arg0: i32) -> (i32, i32) {
    %c0_i32 = arith.constant 0 : i32
    %c0_i32_0 = arith.constant 0 : i32
    %c0_i32_1 = arith.constant 0 : i32
    return %c0_i32, %c0_i32_0 : i32, i32
  }
  func.func @transform_2(%arg0: i32) -> (i32, i32) {
    %c0_i32 = arith.constant 0 : i32
    %c0_i32_0 = arith.constant 0 : i32
    %c0_i32_1 = arith.constant 0 : i32
    return %c0_i32, %c0_i32_0 : i32, i32
  }
  func.func @transform_3(%arg0: i32) -> (i32, i32, i32) {
    %c0_i32 = arith.constant 0 : i32
    %c0_i32_0 = arith.constant 0 : i32
    %c0_i32_1 = arith.constant 0 : i32
    return %arg0, %c0_i32, %c0_i32_0 : i32, i32, i32
  }
}

module attributes {stable_mosaic.version = 11 : i64} {
  func.func @_conv_relu_pool_stats_kernel(%arg0: i32, %arg1: i32, %arg2: memref<1x16x16x4xbf16, #tpu.memory_space<vmem>>, %arg3: memref<36x128xbf16, #tpu.memory_space<vmem>>, %arg4: memref<1x128xf32, #tpu.memory_space<vmem>>, %arg5: memref<1x49x128xf32, #tpu.memory_space<vmem>>, %arg6: memref<1x8x128xf32, #tpu.memory_space<vmem>>, %arg7: memref<1x8x128xf32, #tpu.memory_space<vmem>>) attributes {dimension_semantics = [#tpu.dimension_semantics<parallel>, #tpu.dimension_semantics<parallel>], iteration_bounds = array<i64: 2, 1>, scalar_prefetch = 0 : i64, scratch_operands = 0 : i64, tpu.core_type = #tpu.core_type<tc>, window_params = [{transform_indices = @transform_0, window_bounds = array<i64: 1, 16, 16, 4>}, {pipeline_mode = #tpu.pipeline_mode<synchronous>, transform_indices = @transform_1, window_bounds = array<i64: 36, 128>}, {pipeline_mode = #tpu.pipeline_mode<synchronous>, transform_indices = @transform_2, window_bounds = array<i64: 1, 128>}, {transform_indices = @transform_3, window_bounds = array<i64: 1, 49, 128>}, {transform_indices = @transform_4, window_bounds = array<i64: 1, 8, 128>}, {transform_indices = @transform_5, window_bounds = array<i64: 1, 8, 128>}]} {
    %c14_i32 = arith.constant 14 : i32
    %0 = arith.muli %c14_i32, %arg1 : i32
    %c0_i32 = arith.constant 0 : i32
    %1 = arith.addi %0, %c0_i32 : i32
    %c0 = arith.constant 0 : index
    %2 = arith.index_cast %1 : i32 to index
    %c0_0 = arith.constant 0 : index
    %c0_1 = arith.constant 0 : index
    %3 = vector.load %arg2[%c0, %2, %c0_0, %c0_1] : memref<1x16x16x4xbf16, #tpu.memory_space<vmem>>, vector<1x14x14x4xbf16>
    %4 = vector.shape_cast %3 : vector<1x14x14x4xbf16> to vector<14x14x4xbf16>
    %c0_i32_2 = arith.constant 0 : i32
    %5 = arith.addi %0, %c0_i32_2 : i32
    %c0_3 = arith.constant 0 : index
    %6 = arith.index_cast %5 : i32 to index
    %c1 = arith.constant 1 : index
    %c0_4 = arith.constant 0 : index
    %7 = vector.load %arg2[%c0_3, %6, %c1, %c0_4] : memref<1x16x16x4xbf16, #tpu.memory_space<vmem>>, vector<1x14x14x4xbf16>
    %8 = vector.shape_cast %7 : vector<1x14x14x4xbf16> to vector<14x14x4xbf16>
    %c0_i32_5 = arith.constant 0 : i32
    %9 = arith.addi %0, %c0_i32_5 : i32
    %c0_6 = arith.constant 0 : index
    %10 = arith.index_cast %9 : i32 to index
    %c2 = arith.constant 2 : index
    %c0_7 = arith.constant 0 : index
    %11 = vector.load %arg2[%c0_6, %10, %c2, %c0_7] : memref<1x16x16x4xbf16, #tpu.memory_space<vmem>>, vector<1x14x14x4xbf16>
    %12 = vector.shape_cast %11 : vector<1x14x14x4xbf16> to vector<14x14x4xbf16>
    %c1_i32 = arith.constant 1 : i32
    %13 = arith.addi %0, %c1_i32 : i32
    %c0_8 = arith.constant 0 : index
    %14 = arith.index_cast %13 : i32 to index
    %c0_9 = arith.constant 0 : index
    %c0_10 = arith.constant 0 : index
    %15 = vector.load %arg2[%c0_8, %14, %c0_9, %c0_10] : memref<1x16x16x4xbf16, #tpu.memory_space<vmem>>, vector<1x14x14x4xbf16>
    %16 = vector.shape_cast %15 : vector<1x14x14x4xbf16> to vector<14x14x4xbf16>
    %c1_i32_11 = arith.constant 1 : i32
    %17 = arith.addi %0, %c1_i32_11 : i32
    %c0_12 = arith.constant 0 : index
    %18 = arith.index_cast %17 : i32 to index
    %c1_13 = arith.constant 1 : index
    %c0_14 = arith.constant 0 : index
    %19 = vector.load %arg2[%c0_12, %18, %c1_13, %c0_14] : memref<1x16x16x4xbf16, #tpu.memory_space<vmem>>, vector<1x14x14x4xbf16>
    %20 = vector.shape_cast %19 : vector<1x14x14x4xbf16> to vector<14x14x4xbf16>
    %c1_i32_15 = arith.constant 1 : i32
    %21 = arith.addi %0, %c1_i32_15 : i32
    %c0_16 = arith.constant 0 : index
    %22 = arith.index_cast %21 : i32 to index
    %c2_17 = arith.constant 2 : index
    %c0_18 = arith.constant 0 : index
    %23 = vector.load %arg2[%c0_16, %22, %c2_17, %c0_18] : memref<1x16x16x4xbf16, #tpu.memory_space<vmem>>, vector<1x14x14x4xbf16>
    %24 = vector.shape_cast %23 : vector<1x14x14x4xbf16> to vector<14x14x4xbf16>
    %c2_i32 = arith.constant 2 : i32
    %25 = arith.addi %0, %c2_i32 : i32
    %c0_19 = arith.constant 0 : index
    %26 = arith.index_cast %25 : i32 to index
    %c0_20 = arith.constant 0 : index
    %c0_21 = arith.constant 0 : index
    %27 = vector.load %arg2[%c0_19, %26, %c0_20, %c0_21] : memref<1x16x16x4xbf16, #tpu.memory_space<vmem>>, vector<1x14x14x4xbf16>
    %28 = vector.shape_cast %27 : vector<1x14x14x4xbf16> to vector<14x14x4xbf16>
    %c2_i32_22 = arith.constant 2 : i32
    %29 = arith.addi %0, %c2_i32_22 : i32
    %c0_23 = arith.constant 0 : index
    %30 = arith.index_cast %29 : i32 to index
    %c1_24 = arith.constant 1 : index
    %c0_25 = arith.constant 0 : index
    %31 = vector.load %arg2[%c0_23, %30, %c1_24, %c0_25] : memref<1x16x16x4xbf16, #tpu.memory_space<vmem>>, vector<1x14x14x4xbf16>
    %32 = vector.shape_cast %31 : vector<1x14x14x4xbf16> to vector<14x14x4xbf16>
    %c2_i32_26 = arith.constant 2 : i32
    %33 = arith.addi %0, %c2_i32_26 : i32
    %c0_27 = arith.constant 0 : index
    %34 = arith.index_cast %33 : i32 to index
    %c2_28 = arith.constant 2 : index
    %c0_29 = arith.constant 0 : index
    %35 = vector.load %arg2[%c0_27, %34, %c2_28, %c0_29] : memref<1x16x16x4xbf16, #tpu.memory_space<vmem>>, vector<1x14x14x4xbf16>
    %36 = vector.shape_cast %35 : vector<1x14x14x4xbf16> to vector<14x14x4xbf16>
    %37 = tpu.concatenate %4, %8, %12, %16, %20, %24, %28, %32, %36 in 2 : vector<14x14x4xbf16>, vector<14x14x4xbf16>, vector<14x14x4xbf16>, vector<14x14x4xbf16>, vector<14x14x4xbf16>, vector<14x14x4xbf16>, vector<14x14x4xbf16>, vector<14x14x4xbf16>, vector<14x14x4xbf16> -> vector<14x14x36xbf16>
    %38 = vector.shape_cast %37 : vector<14x14x36xbf16> to vector<196x36xbf16>
    %c0_30 = arith.constant 0 : index
    %c0_31 = arith.constant 0 : index
    %39 = vector.load %arg3[%c0_30, %c0_31] : memref<36x128xbf16, #tpu.memory_space<vmem>>, vector<36x128xbf16>
    %cst = arith.constant dense<0.000000e+00> : vector<196x128xf32>
    %40 = tpu.matmul %38, %39, %cst {dimension_numbers = #tpu.dot_dimension_numbers<[1], [0], [0], [1], [0, 0, 1, 1], [], []>} : vector<196x36xbf16>, vector<36x128xbf16>, vector<196x128xf32> -> vector<196x128xf32>
    %c0_32 = arith.constant 0 : index
    %c0_33 = arith.constant 0 : index
    %41 = vector.load %arg4[%c0_32, %c0_33] : memref<1x128xf32, #tpu.memory_space<vmem>>, vector<1x128xf32>
    %42 = vector.broadcast %41 : vector<1x128xf32> to vector<196x128xf32>
    %43 = arith.addf %40, %42 : vector<196x128xf32>
    %cst_34 = arith.constant 0.000000e+00 : f32
    %44 = vector.broadcast %cst_34 : f32 to vector<196x128xf32>
    %45 = arith.maximumf %43, %44 : vector<196x128xf32>
    %46 = vector.shape_cast %45 : vector<196x128xf32> to vector<7x2x14x128xf32>
    %47 = vector.extract_strided_slice %46 {offsets = [0, 0, 0, 0], sizes = [7, 1, 14, 128], strides = [1, 1, 1, 1]} : vector<7x2x14x128xf32> to vector<7x1x14x128xf32>
    %48 = vector.shape_cast %47 : vector<7x1x14x128xf32> to vector<7x14x128xf32>
    %49 = vector.extract_strided_slice %46 {offsets = [0, 1, 0, 0], sizes = [7, 1, 14, 128], strides = [1, 1, 1, 1]} : vector<7x2x14x128xf32> to vector<7x1x14x128xf32>
    %50 = vector.shape_cast %49 : vector<7x1x14x128xf32> to vector<7x14x128xf32>
    %51 = arith.addf %48, %50 : vector<7x14x128xf32>
    %52 = vector.shape_cast %51 : vector<7x14x128xf32> to vector<7x7x2x128xf32>
    %53 = vector.extract_strided_slice %52 {offsets = [0, 0, 0, 0], sizes = [7, 7, 1, 128], strides = [1, 1, 1, 1]} : vector<7x7x2x128xf32> to vector<7x7x1x128xf32>
    %54 = vector.shape_cast %53 : vector<7x7x1x128xf32> to vector<7x7x128xf32>
    %55 = vector.extract_strided_slice %52 {offsets = [0, 0, 1, 0], sizes = [7, 7, 1, 128], strides = [1, 1, 1, 1]} : vector<7x7x2x128xf32> to vector<7x7x1x128xf32>
    %56 = vector.shape_cast %55 : vector<7x7x1x128xf32> to vector<7x7x128xf32>
    %57 = arith.addf %54, %56 : vector<7x7x128xf32>
    %cst_35 = arith.constant 2.500000e-01 : f32
    %58 = vector.broadcast %cst_35 : f32 to vector<7x7x128xf32>
    %59 = arith.mulf %58, %57 : vector<7x7x128xf32>
    %60 = vector.shape_cast %59 : vector<7x7x128xf32> to vector<49x128xf32>
    %c0_36 = arith.constant 0 : index
    %c0_37 = arith.constant 0 : index
    %c0_38 = arith.constant 0 : index
    %61 = vector.load %arg5[%c0_36, %c0_37, %c0_38] : memref<1x49x128xf32, #tpu.memory_space<vmem>>, vector<1x49x128xf32>
    %62 = vector.shape_cast %61 : vector<1x49x128xf32> to vector<49x128xf32>
    %63 = vector.shape_cast %60 : vector<49x128xf32> to vector<1x49x128xf32>
    tpu.vector_store %arg5[%c0_36, %c0_37, %c0_38], %63 {strides = array<i32>} : memref<1x49x128xf32, #tpu.memory_space<vmem>>, vector<1x49x128xf32>,
    %c7_i32 = arith.constant 7 : i32
    %64 = arith.muli %arg1, %c7_i32 : i32
    %c7_i32_39 = arith.constant 7 : i32
    %65 = arith.subi %c7_i32_39, %64 : i32
    %c7_i32_40 = arith.constant 7 : i32
    %66 = arith.minsi %c7_i32_40, %65 : i32
    %c7_i32_41 = arith.constant 7 : i32
    %67 = arith.muli %66, %c7_i32_41 : i32
    %68 = tpu.iota {dimensions = array<i32: 0>} : vector<49x1xi32>
    %69 = vector.broadcast %67 : i32 to vector<49x1xi32>
    %70 = arith.cmpi slt, %68, %69 : vector<49x1xi32>
    %cst_42 = arith.constant 0.000000e+00 : f32
    %71 = vector.shape_cast %70 : vector<49x1xi1> to vector<49x1xi1>
    %72 = vector.broadcast %71 : vector<49x1xi1> to vector<49x128xi1>
    %73 = vector.broadcast %cst_42 : f32 to vector<49x128xf32>
    %74 = arith.select %72, %60, %73 : vector<49x128xi1>, vector<49x128xf32>
    %cst_43 = arith.constant dense<0.000000e+00> : vector<128xf32>
    %75 = vector.multi_reduction <add>, %74, %cst_43 [0] : vector<49x128xf32> to vector<128xf32>
    %76 = vector.shape_cast %75 : vector<128xf32> to vector<1x128xf32>
    %77 = arith.mulf %74, %74 : vector<49x128xf32>
    %cst_44 = arith.constant dense<0.000000e+00> : vector<128xf32>
    %78 = vector.multi_reduction <add>, %77, %cst_44 [0] : vector<49x128xf32> to vector<128xf32>
    %79 = vector.shape_cast %78 : vector<128xf32> to vector<1x128xf32>
    %80 = vector.shape_cast %76 : vector<1x128xf32> to vector<1x128xf32>
    %81 = vector.broadcast %80 : vector<1x128xf32> to vector<8x128xf32>
    %c0_45 = arith.constant 0 : index
    %c0_46 = arith.constant 0 : index
    %c0_47 = arith.constant 0 : index
    %82 = vector.load %arg6[%c0_45, %c0_46, %c0_47] : memref<1x8x128xf32, #tpu.memory_space<vmem>>, vector<1x8x128xf32>
    %83 = vector.shape_cast %82 : vector<1x8x128xf32> to vector<8x128xf32>
    %84 = vector.shape_cast %81 : vector<8x128xf32> to vector<1x8x128xf32>
    tpu.vector_store %arg6[%c0_45, %c0_46, %c0_47], %84 {strides = array<i32>} : memref<1x8x128xf32, #tpu.memory_space<vmem>>, vector<1x8x128xf32>,
    %85 = vector.shape_cast %79 : vector<1x128xf32> to vector<1x128xf32>
    %86 = vector.broadcast %85 : vector<1x128xf32> to vector<8x128xf32>
    %c0_48 = arith.constant 0 : index
    %c0_49 = arith.constant 0 : index
    %c0_50 = arith.constant 0 : index
    %87 = vector.load %arg7[%c0_48, %c0_49, %c0_50] : memref<1x8x128xf32, #tpu.memory_space<vmem>>, vector<1x8x128xf32>
    %88 = vector.shape_cast %87 : vector<1x8x128xf32> to vector<8x128xf32>
    %89 = vector.shape_cast %86 : vector<8x128xf32> to vector<1x8x128xf32>
    tpu.vector_store %arg7[%c0_48, %c0_49, %c0_50], %89 {strides = array<i32>} : memref<1x8x128xf32, #tpu.memory_space<vmem>>, vector<1x8x128xf32>,
    return
  }
  func.func @transform_0(%arg0: i32, %arg1: i32) -> (i32, i32, i32, i32) {
    %c0_i32 = arith.constant 0 : i32
    %c0_i32_0 = arith.constant 0 : i32
    %c0_i32_1 = arith.constant 0 : i32
    %c0_i32_2 = arith.constant 0 : i32
    return %arg0, %c0_i32, %c0_i32_0, %c0_i32_1 : i32, i32, i32, i32
  }
  func.func @transform_1(%arg0: i32, %arg1: i32) -> (i32, i32) {
    %c0_i32 = arith.constant 0 : i32
    %c0_i32_0 = arith.constant 0 : i32
    %c0_i32_1 = arith.constant 0 : i32
    return %c0_i32, %c0_i32_0 : i32, i32
  }
  func.func @transform_2(%arg0: i32, %arg1: i32) -> (i32, i32) {
    %c0_i32 = arith.constant 0 : i32
    %c0_i32_0 = arith.constant 0 : i32
    %c0_i32_1 = arith.constant 0 : i32
    return %c0_i32, %c0_i32_0 : i32, i32
  }
  func.func @transform_3(%arg0: i32, %arg1: i32) -> (i32, i32, i32) {
    %c1_i32 = arith.constant 1 : i32
    %0 = arith.muli %arg0, %c1_i32 : i32
    %1 = arith.addi %0, %arg1 : i32
    %c0_i32 = arith.constant 0 : i32
    %c0_i32_0 = arith.constant 0 : i32
    %c0_i32_1 = arith.constant 0 : i32
    return %1, %c0_i32, %c0_i32_0 : i32, i32, i32
  }
  func.func @transform_4(%arg0: i32, %arg1: i32) -> (i32, i32, i32) {
    %c1_i32 = arith.constant 1 : i32
    %0 = arith.muli %arg0, %c1_i32 : i32
    %1 = arith.addi %0, %arg1 : i32
    %c0_i32 = arith.constant 0 : i32
    %c0_i32_0 = arith.constant 0 : i32
    %c0_i32_1 = arith.constant 0 : i32
    return %1, %c0_i32, %c0_i32_0 : i32, i32, i32
  }
  func.func @transform_5(%arg0: i32, %arg1: i32) -> (i32, i32, i32) {
    %c1_i32 = arith.constant 1 : i32
    %0 = arith.muli %arg0, %c1_i32 : i32
    %1 = arith.addi %0, %arg1 : i32
    %c0_i32 = arith.constant 0 : i32
    %c0_i32_0 = arith.constant 0 : i32
    %c0_i32_1 = arith.constant 0 : i32
    return %1, %c0_i32, %c0_i32_0 : i32, i32, i32
  }
}

</mosaic_0001>

<llo_original>
// kernel: conv_block_forward.3
$region0: #{conv_block_forward.3}
  #allocation0 [shape = 'u32[]', space=smem, size = 0x4, offset = 0x4, fixed_abs, tag = 'smem constant byte address 0x4 - core index']
  #allocation1 [shape = 'u32[144,128]{1,0:T(1,128)}', space=vmem, size = 0x12000, scoped, tag = 'internal scratch']
  %s0 = inlined_call_operand.vmem [shape: f32[2,49,128], index: 0, kind: input, shape index: {}]
  %s1 = inlined_call_operand.vmem [shape: f32[1,128], index: 1, kind: input, shape index: {}]
  %s2 = inlined_call_operand.vmem [shape: f32[1,128], index: 2, kind: input, shape index: {}]
  %s3 = inlined_call_operand.vmem [shape: f32[2,49,128], index: 3, kind: output, shape index: {}]
  %s4 = sld [smem:[#allocation0]]
  $region45: #{conv_block_forward.3} parent=0
    _
  %s6 = ssub.s32 1, %s4
  %s7 = scalar_select 0, %s6, %s4
  loop: start=0, step=1, limit=4
  $region2: #{conv_block_forward.3} parent=0 // loop_pre_header
    _
  $region3: #{conv_block_forward.3} parent=0 // loop_header
    %s9 = sphi 0, %s13
    %p10 = scmp.ge.s32.totalorder %s9, 4
    %s19 = sphi 0, %s21
    %s22 = sphi 0, %s19
    %s23 = sphi 0, %s22
    %s39 = sphi 0, %s23
    %s43 = sphi 0, %s43
    %s45 = sphi 0, %s43
    %s46 = sphi 0, %s45
    %s60 = sphi 0, %s46
    %s64 = sphi 0, %s64
    %s66 = sphi 0, %s64
    %s67 = sphi 0, %s66
    %s81 = sphi 0, %s67
    %s87 = sphi 0, %s89
    %s90 = sphi 0, %s87
    %s91 = sphi 0, %s90
    %s107 = sphi 0, %s91
  $region4: #{conv_block_forward.3} parent=0 // loop_header_branch
    %12 = sbr.rel (%p10) target = $region8
  $region5: #{conv_block_forward.3} parent=0 // loop_body
    %s14 = ssub.s32 %s9, 1
    %s15 = ssub.s32 %s9, 2
    %s16 = sadd.s32 %s9, 1
    %s17 = ssub.s32 %s9, %s16
    %p18 = scmp.eq.s32.totalorder %s17, 0
    %s20 = sadd.s32 %s19, 1
    %s21 = scalar_select %p18, %s19, %s20
    %p24 = pneg %p18
    %p25 = scmp.eq.s32.totalorder %s9, 1
    %p26 = por %p24, %p25
    %p27 = scmp.ne.s32.totalorder %s19, %s22
    %p28 = scmp.eq.s32.totalorder %s9, 0
    %p29 = por %p27, %p28
    %p30 = scmp.ne.s32.totalorder %s19, %s22
    %p31 = scmp.eq.s32.totalorder %s14, 1
    %p32 = por %p30, %p31
    %p33 = scmp.ne.s32.totalorder %s22, %s23
    %p34 = scmp.eq.s32.totalorder %s14, 0
    %p35 = por %p33, %p34
    %p36 = scmp.ne.s32.totalorder %s22, %s23
    %p37 = scmp.eq.s32.totalorder %s15, 1
    %p38 = por %p36, %p37
    %p40 = scmp.ne.s32.totalorder %s23, %s39
    %p41 = scmp.eq.s32.totalorder %s15, 0
    %p42 = por %p40, %p41
    %s44 = sadd.s32 %s43, 1
    %p47 = scmp.eq.s32.totalorder %s9, 1
    %p48 = scmp.ne.s32.totalorder %s43, %s45
    %p49 = scmp.eq.s32.totalorder %s9, 0
    %p50 = por %p48, %p49
    %p51 = scmp.ne.s32.totalorder %s43, %s45
    %p52 = scmp.eq.s32.totalorder %s14, 1
    %p53 = por %p51, %p52
    %p54 = scmp.ne.s32.totalorder %s45, %s46
    %p55 = scmp.eq.s32.totalorder %s14, 0
    %p56 = por %p54, %p55
    %p57 = scmp.ne.s32.totalorder %s45, %s46
    %p58 = scmp.eq.s32.totalorder %s15, 1
    %p59 = por %p57, %p58
    %p61 = scmp.ne.s32.totalorder %s46, %s60
    %p62 = scmp.eq.s32.totalorder %s15, 0
    %p63 = por %p61, %p62
    %s65 = sadd.s32 %s64, 1
    %p68 = scmp.eq.s32.totalorder %s9, 1
    %p69 = scmp.ne.s32.totalorder %s64, %s66
    %p70 = scmp.eq.s32.totalorder %s9, 0
    %p71 = por %p69, %p70
    %p72 = scmp.ne.s32.totalorder %s64, %s66
    %p73 = scmp.eq.s32.totalorder %s14, 1
    %p74 = por %p72, %p73
    %p75 = scmp.ne.s32.totalorder %s66, %s67
    %p76 = scmp.eq.s32.totalorder %s14, 0
    %p77 = por %p75, %p76
    %p78 = scmp.ne.s32.totalorder %s66, %s67
    %p79 = scmp.eq.s32.totalorder %s15, 1
    %p80 = por %p78, %p79
    %p82 = scmp.ne.s32.totalorder %s67, %s81
    %p83 = scmp.eq.s32.totalorder %s15, 0
    %p84 = por %p82, %p83
    %s85 = ssub.s32 %s9, %s16
    %p86 = scmp.eq.s32.totalorder %s85, 0
    %s88 = sadd.s32 %s87, 1
    %s89 = scalar_select %p86, %s87, %s88
    %p92 = pneg %p86
    %p93 = scmp.eq.s32.totalorder %s9, 1
    %p94 = por %p92, %p93
    %p95 = scmp.ne.s32.totalorder %s87, %s90
    %p96 = scmp.eq.s32.totalorder %s9, 0
    %p97 = por %p95, %p96
    %p98 = scmp.ne.s32.totalorder %s87, %s90
    %p99 = scmp.eq.s32.totalorder %s14, 1
    %p100 = por %p98, %p99
    %p101 = scmp.ne.s32.totalorder %s90, %s91
    %p102 = scmp.eq.s32.totalorder %s14, 0
    %p103 = por %p101, %p102
    %p104 = scmp.ne.s32.totalorder %s90, %s91
    %p105 = scmp.eq.s32.totalorder %s15, 1
    %p106 = por %p104, %p105
    %p108 = scmp.ne.s32.totalorder %s91, %s107
    %p109 = scmp.eq.s32.totalorder %s15, 0
    %p110 = por %p108, %p109
    %p111 = scmp.le.s32.totalorder 1, %s9
    %p112 = scmp.lt.s32.totalorder %s9, 3
    %p113 = pnand %p111, %p112
    %p114 = pneg %p113
    // Predicated region
    $region9: #{conv_block_forward.3} parent=5 // pred_check
      _
    $region10: #{conv_block_forward.3} parent=5 // pred_check_branch
      %116 = sbr.rel (%p113) target = $region12
    $region11: #{conv_block_forward.3} parent=5 // pred_region
      %s117 = ssub.s32 %s9, 1
      // Predicated region
      $region13: #{conv_block_forward.3} parent=11 // pred_check
        %p118 = pneg %p56
      $region14: #{conv_block_forward.3} parent=11 // pred_check_branch
        %120 = sbr.rel (%p118) target = $region16
      $region15: #{conv_block_forward.3} parent=11 // pred_region
        _
      $region16: #{conv_block_forward.3} parent=11 // pred_fallthru
        _
      // Predicated region
      $region17: #{conv_block_forward.3} parent=11 // pred_check
        %p121 = pneg %p77
      $region18: #{conv_block_forward.3} parent=11 // pred_check_branch
        %123 = sbr.rel (%p121) target = $region20
      $region19: #{conv_block_forward.3} parent=11 // pred_region
        _
      $region20: #{conv_block_forward.3} parent=11 // pred_fallthru
        _
    $region12: #{conv_block_forward.3} parent=5 // pred_fallthru
      _
    %p124 = scmp.lt.s32.totalorder %s9, 2
    // Predicated region
    $region21: #{conv_block_forward.3} parent=5 // pred_check
      %p125 = pneg %p124
    $region22: #{conv_block_forward.3} parent=5 // pred_check_branch
      %127 = sbr.rel (%p125) target = $region24
    $region23: #{conv_block_forward.3} parent=5 // pred_region
      // Predicated region
      $region25: #{conv_block_forward.3} parent=23 // pred_check
        %p128 = pneg %p29
      $region26: #{conv_block_forward.3} parent=23 // pred_check_branch
        %130 = sbr.rel (%p128) target = $region28
      $region27: #{conv_block_forward.3} parent=23 // pred_region
        %p131 = scmp.lt.s32.totalorder %s9, 1
        %s132 = scalar_select %p131, %s9, 1
        %s133 = smul.addr %s132, 7
        %s134 = smul.addr %s133, 8
        %s135 = scalar_lea.vmem %s0, %s134
      $region28: #{conv_block_forward.3} parent=23 // pred_fallthru
        _
    $region24: #{conv_block_forward.3} parent=5 // pred_fallthru
      _
    %p136 = scmp.le.s32.totalorder 1, %s9
    %p137 = scmp.lt.s32.totalorder %s9, 3
    %p138 = pnand %p136, %p137
    %p139 = pneg %p138
    // Predicated region
    $region29: #{conv_block_forward.3} parent=5 // pred_check
      _
    $region30: #{conv_block_forward.3} parent=5 // pred_check_branch
      %141 = sbr.rel (%p138) target = $region32
    $region31: #{conv_block_forward.3} parent=5 // pred_region
      %s142 = ssub.s32 %s9, 1
      %p143 = scmp.lt.s32.totalorder %s14, 1
      %s144 = scalar_select %p143, %s14, 1
      %s145 = smul.addr %s144, 7
      %s146 = smul.addr %s145, 8
      %s147 = scalar_lea.vmem %s0, %s146
      %p148 = pneg %p35
      %p149 = pneg %p32
      %p150 = pneg %p56
      %p151 = pneg %p53
      %p152 = pneg %p77
      %p153 = pneg %p74
      %p154 = pneg %p103
      %p155 = pneg %p100
      %p156 = scmp.lt.s32.totalorder %s14, 1
      %s157 = scalar_select %p156, %s14, 1
      %s158 = smul.addr %s157, 7
      %s159 = smul.addr %s158, 8
      %s160 = scalar_lea.vmem %s3, %s159
      %p161 = scmp.lt.s32.totalorder %s14, 1
      %s162 = scalar_select %p161, %s14, 1
      %s163 = smul.addr %s162, 7
      %s164 = smul.addr %s163, 8
      %s165 = scalar_lea.vmem %s0, %s164
      %p166 = scmp.lt.s32.totalorder %s14, 1
      %s167 = scalar_select %p166, %s14, 1
      %s168 = smul.addr %s167, 7
      %s169 = smul.addr %s168, 8
      %s170 = scalar_lea.vmem %s3, %s169
      %v171 = vld [vmem:[%s165] sm:$0xff]
      %v172 = vld [vmem:[%s165 + $0x8] sm:$0xff]
      %v173 = vld [vmem:[%s165 + $0x10] sm:$0xff]
      %v174 = vld [vmem:[%s165 + $0x18] sm:$0xff]
      %v175 = vld [vmem:[%s165 + $0x20] sm:$0xff]
      %v176 = vld [vmem:[%s165 + $0x28] sm:$0xff]
      %v177 = vld [vmem:[%s165 + $0x30] sm:$0x1]
      %v178 = vld [vmem:[%s1] sm:$0x1]
      %v180 = vlaneseq
      %v181 = vshrl.u32 %v180, 7
      %v182 = vsub.s32 0, %v181
      %v183 = vrot.slane %v178, %v182
      %v185 = vmul.f32 %v171, %v183
      %v186 = vmul.f32 %v172, %v183
      %v187 = vmul.f32 %v173, %v183
      %v188 = vmul.f32 %v174, %v183
      %v189 = vmul.f32 %v175, %v183
      %v190 = vmul.f32 %v176, %v183
      %v191 = vmul.f32 %v177, %v183
      %v192 = vld [vmem:[%s2] sm:$0x1]
      %v194 = vlaneseq
      %v195 = vshrl.u32 %v194, 7
      %v196 = vsub.s32 0, %v195
      %v197 = vrot.slane %v192, %v196
      %v199 = vadd.f32 %v185, %v197
      %v200 = vadd.f32 %v186, %v197
      %v201 = vadd.f32 %v187, %v197
      %v202 = vadd.f32 %v188, %v197
      %v203 = vadd.f32 %v189, %v197
      %v204 = vadd.f32 %v190, %v197
      %v205 = vadd.f32 %v191, %v197
      %206 = vst [vmem:[%s170] sm:$0xff] %v199
      %207 = vst [vmem:[%s170 + $0x8] sm:$0xff] %v200
      %208 = vst [vmem:[%s170 + $0x10] sm:$0xff] %v201
      %209 = vst [vmem:[%s170 + $0x18] sm:$0xff] %v202
      %210 = vst [vmem:[%s170 + $0x20] sm:$0xff] %v203
      %211 = vst [vmem:[%s170 + $0x28] sm:$0xff] %v204
      %212 = vst [vmem:[%s170 + $0x30] sm:$0x1] %v205
      %p213 = scmp.lt.s32.totalorder %s14, 1
      %s214 = scalar_select %p213, %s14, 1
      %s215 = smul.addr %s214, 7
      %s216 = smul.addr %s215, 8
      %s217 = scalar_lea.vmem %s3, %s216
      // Predicated region
      $region33: #{conv_block_forward.3} parent=31 // pred_check
        %p218 = pneg %p100
      $region34: #{conv_block_forward.3} parent=31 // pred_check_branch
        %220 = sbr.rel (%p218) target = $region36
      $region35: #{conv_block_forward.3} parent=31 // pred_region
        _
      $region36: #{conv_block_forward.3} parent=31 // pred_fallthru
        _
    $region32: #{conv_block_forward.3} parent=5 // pred_fallthru
      _
    %p221 = scmp.le.s32.totalorder 2, %s9
    // Predicated region
    $region37: #{conv_block_forward.3} parent=5 // pred_check
      %p222 = pneg %p221
    $region38: #{conv_block_forward.3} parent=5 // pred_check_branch
      %224 = sbr.rel (%p222) target = $region40
    $region39: #{conv_block_forward.3} parent=5 // pred_region
      %s225 = ssub.s32 %s9, 2
      // Predicated region
      $region41: #{conv_block_forward.3} parent=39 // pred_check
        %p226 = pneg %p106
      $region42: #{conv_block_forward.3} parent=39 // pred_check_branch
        %228 = sbr.rel (%p226) target = $region44
      $region43: #{conv_block_forward.3} parent=39 // pred_region
        %p229 = scmp.lt.s32.totalorder %s15, 1
        %s230 = scalar_select %p229, %s15, 1
        %s231 = smul.addr %s230, 7
        %s232 = smul.addr %s231, 8
        %s233 = scalar_lea.vmem %s3, %s232
      $region44: #{conv_block_forward.3} parent=39 // pred_fallthru
        _
    $region40: #{conv_block_forward.3} parent=5 // pred_fallthru
      _
  $region6: #{conv_block_forward.3} parent=0 // loop_footer
    %s13 = sadd.s32 1, %s9
  $region7: #{conv_block_forward.3} parent=0 // loop_footer_branch
    %8 = sbr.rel target = $region3
  $region8: #{conv_block_forward.3} parent=0 // loop_exit
    _

// kernel: conv_block_forward.2
$region0: #{conv_block_forward.2}
  #allocation0 [shape = 'u32[]', space=smem, size = 0x4, offset = 0x4, fixed_abs, tag = 'smem constant byte address 0x4 - core index']
  #allocation1 [shape = 'u32[144,128]{1,0:T(1,128)}', space=vmem, size = 0x12000, scoped, tag = 'internal scratch']
  %s0 = inlined_call_operand.vmem [shape: bf16[2,16,16,4], index: 0, kind: input, shape index: {}]
  %s1 = inlined_call_operand.vmem [shape: bf16[36,128], index: 1, kind: input, shape index: {}]
  %s2 = inlined_call_operand.vmem [shape: f32[1,128], index: 2, kind: input, shape index: {}]
  %s3 = inlined_call_operand.vmem [shape: f32[2,49,128], index: 3, kind: output, shape index: {0}]
  %s4 = inlined_call_operand.vmem [shape: f32[2,8,128], index: 4, kind: output, shape index: {1}]
  %s5 = inlined_call_operand.vmem [shape: f32[2,8,128], index: 5, kind: output, shape index: {2}]
  %6 = xla_tuple %s3, %s4, %s5
  %s7 = sld [smem:[#allocation0]]
  $region61: #{conv_block_forward.2} parent=0
    _
  %s9 = ssub.s32 1, %s7
  %s10 = scalar_select 0, %s9, %s7
  loop: start=0, step=1, limit=4
  $region2: #{conv_block_forward.2} parent=0 // loop_pre_header
    _
  $region3: #{conv_block_forward.2} parent=0 // loop_header
    %s12 = sphi 0, %s16
    %p13 = scmp.ge.s32.totalorder %s12, 4
    %s19 = sphi 0, %s31
    %s20 = sphi 0, %s27
    %s21 = sphi 0, %s19
    %s22 = sphi 0, %s20
    %s23 = sphi 0, %s21
    %s24 = sphi 0, %s22
    %s34 = sphi 0, %s36
    %s37 = sphi 0, %s34
    %s38 = sphi 0, %s37
    %s54 = sphi 0, %s38
    %s58 = sphi 0, %s58
    %s60 = sphi 0, %s58
    %s61 = sphi 0, %s60
    %s75 = sphi 0, %s61
    %s79 = sphi 0, %s79
    %s81 = sphi 0, %s79
    %s82 = sphi 0, %s81
    %s96 = sphi 0, %s82
    %s104 = sphi 0, %s106
    %s107 = sphi 0, %s104
    %s108 = sphi 0, %s107
    %s124 = sphi 0, %s108
    %s132 = sphi 0, %s134
    %s135 = sphi 0, %s132
    %s136 = sphi 0, %s135
    %s152 = sphi 0, %s136
    %s160 = sphi 0, %s162
    %s163 = sphi 0, %s160
    %s164 = sphi 0, %s163
    %s180 = sphi 0, %s164
  $region4: #{conv_block_forward.2} parent=0 // loop_header_branch
    %15 = sbr.rel (%p13) target = $region8
  $region5: #{conv_block_forward.2} parent=0 // loop_body
    %s17 = ssub.s32 %s12, 1
    %s18 = ssub.s32 %s12, 2
    %s25 = sadd.s32 1, %s20
    %p26 = scmp.ge.s32.totalorder %s25, 1
    %s27 = scalar_select %p26, 0, %s25
    %s28 = sadd.s32 1, %s19
    %s29 = scalar_select %p26, %s28, %s19
    %p30 = scmp.ge.s32.totalorder %s29, 2
    %s31 = scalar_select %p30, 0, %s29
    %s32 = ssub.s32 %s19, %s31
    %p33 = scmp.eq.s32.totalorder %s32, 0
    %s35 = sadd.s32 %s34, 1
    %s36 = scalar_select %p33, %s34, %s35
    %p39 = pneg %p33
    %p40 = scmp.eq.s32.totalorder %s12, 1
    %p41 = por %p39, %p40
    %p42 = scmp.ne.s32.totalorder %s34, %s37
    %p43 = scmp.eq.s32.totalorder %s12, 0
    %p44 = por %p42, %p43
    %p45 = scmp.ne.s32.totalorder %s34, %s37
    %p46 = scmp.eq.s32.totalorder %s17, 1
    %p47 = por %p45, %p46
    %p48 = scmp.ne.s32.totalorder %s37, %s38
    %p49 = scmp.eq.s32.totalorder %s17, 0
    %p50 = por %p48, %p49
    %p51 = scmp.ne.s32.totalorder %s37, %s38
    %p52 = scmp.eq.s32.totalorder %s18, 1
    %p53 = por %p51, %p52
    %p55 = scmp.ne.s32.totalorder %s38, %s54
    %p56 = scmp.eq.s32.totalorder %s18, 0
    %p57 = por %p55, %p56
    %s59 = sadd.s32 %s58, 1
    %p62 = scmp.eq.s32.totalorder %s12, 1
    %p63 = scmp.ne.s32.totalorder %s58, %s60
    %p64 = scmp.eq.s32.totalorder %s12, 0
    %p65 = por %p63, %p64
    %p66 = scmp.ne.s32.totalorder %s58, %s60
    %p67 = scmp.eq.s32.totalorder %s17, 1
    %p68 = por %p66, %p67
    %p69 = scmp.ne.s32.totalorder %s60, %s61
    %p70 = scmp.eq.s32.totalorder %s17, 0
    %p71 = por %p69, %p70
    %p72 = scmp.ne.s32.totalorder %s60, %s61
    %p73 = scmp.eq.s32.totalorder %s18, 1
    %p74 = por %p72, %p73
    %p76 = scmp.ne.s32.totalorder %s61, %s75
    %p77 = scmp.eq.s32.totalorder %s18, 0
    %p78 = por %p76, %p77
    %s80 = sadd.s32 %s79, 1
    %p83 = scmp.eq.s32.totalorder %s12, 1
    %p84 = scmp.ne.s32.totalorder %s79, %s81
    %p85 = scmp.eq.s32.totalorder %s12, 0
    %p86 = por %p84, %p85
    %p87 = scmp.ne.s32.totalorder %s79, %s81
    %p88 = scmp.eq.s32.totalorder %s17, 1
    %p89 = por %p87, %p88
    %p90 = scmp.ne.s32.totalorder %s81, %s82
    %p91 = scmp.eq.s32.totalorder %s17, 0
    %p92 = por %p90, %p91
    %p93 = scmp.ne.s32.totalorder %s81, %s82
    %p94 = scmp.eq.s32.totalorder %s18, 1
    %p95 = por %p93, %p94
    %p97 = scmp.ne.s32.totalorder %s82, %s96
    %p98 = scmp.eq.s32.totalorder %s18, 0
    %p99 = por %p97, %p98
    %s100 = sadd.s32 %s19, %s20
    %s101 = sadd.s32 %s31, %s27
    %s102 = ssub.s32 %s100, %s101
    %p103 = scmp.eq.s32.totalorder %s102, 0
    %s105 = sadd.s32 %s104, 1
    %s106 = scalar_select %p103, %s104, %s105
    %p109 = pneg %p103
    %p110 = scmp.eq.s32.totalorder %s12, 1
    %p111 = por %p109, %p110
    %p112 = scmp.ne.s32.totalorder %s104, %s107
    %p113 = scmp.eq.s32.totalorder %s12, 0
    %p114 = por %p112, %p113
    %p115 = scmp.ne.s32.totalorder %s104, %s107
    %p116 = scmp.eq.s32.totalorder %s17, 1
    %p117 = por %p115, %p116
    %p118 = scmp.ne.s32.totalorder %s107, %s108
    %p119 = scmp.eq.s32.totalorder %s17, 0
    %p120 = por %p118, %p119
    %p121 = scmp.ne.s32.totalorder %s107, %s108
    %p122 = scmp.eq.s32.totalorder %s18, 1
    %p123 = por %p121, %p122
    %p125 = scmp.ne.s32.totalorder %s108, %s124
    %p126 = scmp.eq.s32.totalorder %s18, 0
    %p127 = por %p125, %p126
    %s128 = sadd.s32 %s19, %s20
    %s129 = sadd.s32 %s31, %s27
    %s130 = ssub.s32 %s128, %s129
    %p131 = scmp.eq.s32.totalorder %s130, 0
    %s133 = sadd.s32 %s132, 1
    %s134 = scalar_select %p131, %s132, %s133
    %p137 = pneg %p131
    %p138 = scmp.eq.s32.totalorder %s12, 1
    %p139 = por %p137, %p138
    %p140 = scmp.ne.s32.totalorder %s132, %s135
    %p141 = scmp.eq.s32.totalorder %s12, 0
    %p142 = por %p140, %p141
    %p143 = scmp.ne.s32.totalorder %s132, %s135
    %p144 = scmp.eq.s32.totalorder %s17, 1
    %p145 = por %p143, %p144
    %p146 = scmp.ne.s32.totalorder %s135, %s136
    %p147 = scmp.eq.s32.totalorder %s17, 0
    %p148 = por %p146, %p147
    %p149 = scmp.ne.s32.totalorder %s135, %s136
    %p150 = scmp.eq.s32.totalorder %s18, 1
    %p151 = por %p149, %p150
    %p153 = scmp.ne.s32.totalorder %s136, %s152
    %p154 = scmp.eq.s32.totalorder %s18, 0
    %p155 = por %p153, %p154
    %s156 = sadd.s32 %s19, %s20
    %s157 = sadd.s32 %s31, %s27
    %s158 = ssub.s32 %s156, %s157
    %p159 = scmp.eq.s32.totalorder %s158, 0
    %s161 = sadd.s32 %s160, 1
    %s162 = scalar_select %p159, %s160, %s161
    %p165 = pneg %p159
    %p166 = scmp.eq.s32.totalorder %s12, 1
    %p167 = por %p165, %p166
    %p168 = scmp.ne.s32.totalorder %s160, %s163
    %p169 = scmp.eq.s32.totalorder %s12, 0
    %p170 = por %p168, %p169
    %p171 = scmp.ne.s32.totalorder %s160, %s163
    %p172 = scmp.eq.s32.totalorder %s17, 1
    %p173 = por %p171, %p172
    %p174 = scmp.ne.s32.totalorder %s163, %s164
    %p175 = scmp.eq.s32.totalorder %s17, 0
    %p176 = por %p174, %p175
    %p177 = scmp.ne.s32.totalorder %s163, %s164
    %p178 = scmp.eq.s32.totalorder %s18, 1
    %p179 = por %p177, %p178
    %p181 = scmp.ne.s32.totalorder %s164, %s180
    %p182 = scmp.eq.s32.totalorder %s18, 0
    %p183 = por %p181, %p182
    %p184 = scmp.le.s32.totalorder 1, %s12
    %p185 = scmp.lt.s32.totalorder %s12, 3
    %p186 = pnand %p184, %p185
    %p187 = pneg %p186
    // Predicated region
    $region9: #{conv_block_forward.2} parent=5 // pred_check
      _
    $region10: #{conv_block_forward.2} parent=5 // pred_check_branch
      %189 = sbr.rel (%p186) target = $region12
    $region11: #{conv_block_forward.2} parent=5 // pred_region
      %s190 = ssub.s32 %s12, 1
      // Predicated region
      $region13: #{conv_block_forward.2} parent=11 // pred_check
        %p191 = pneg %p71
      $region14: #{conv_block_forward.2} parent=11 // pred_check_branch
        %193 = sbr.rel (%p191) target = $region16
      $region15: #{conv_block_forward.2} parent=11 // pred_region
        _
      $region16: #{conv_block_forward.2} parent=11 // pred_fallthru
        _
      // Predicated region
      $region17: #{conv_block_forward.2} parent=11 // pred_check
        %p194 = pneg %p92
      $region18: #{conv_block_forward.2} parent=11 // pred_check_branch
        %196 = sbr.rel (%p194) target = $region20
      $region19: #{conv_block_forward.2} parent=11 // pred_region
        _
      $region20: #{conv_block_forward.2} parent=11 // pred_fallthru
        _
    $region12: #{conv_block_forward.2} parent=5 // pred_fallthru
      _
    %p197 = scmp.lt.s32.totalorder %s12, 2
    // Predicated region
    $region21: #{conv_block_forward.2} parent=5 // pred_check
      %p198 = pneg %p197
    $region22: #{conv_block_forward.2} parent=5 // pred_check_branch
      %200 = sbr.rel (%p198) target = $region24
    $region23: #{conv_block_forward.2} parent=5 // pred_region
      // Predicated region
      $region25: #{conv_block_forward.2} parent=23 // pred_check
        %p201 = pneg %p44
      $region26: #{conv_block_forward.2} parent=23 // pred_check_branch
        %203 = sbr.rel (%p201) target = $region28
      $region27: #{conv_block_forward.2} parent=23 // pred_region
        %p204 = scmp.lt.s32.totalorder %s19, 1
        %s205 = scalar_select %p204, %s19, 1
        %s206 = smul.addr %s205, 32
        %s207 = smul.addr %s206, 4
        %s208 = scalar_lea.vmem %s0, %s207
      $region28: #{conv_block_forward.2} parent=23 // pred_fallthru
        _
    $region24: #{conv_block_forward.2} parent=5 // pred_fallthru
      _
    %p209 = scmp.le.s32.totalorder 1, %s12
    %p210 = scmp.lt.s32.totalorder %s12, 3
    %p211 = pnand %p209, %p210
    %p212 = pneg %p211
    // Predicated region
    $region29: #{conv_block_forward.2} parent=5 // pred_check
      _
    $region30: #{conv_block_forward.2} parent=5 // pred_check_branch
      %214 = sbr.rel (%p211) target = $region32
    $region31: #{conv_block_forward.2} parent=5 // pred_region
      %s215 = ssub.s32 %s12, 1
      %p216 = scmp.lt.s32.totalorder %s21, 1
      %s217 = scalar_select %p216, %s21, 1
      %s218 = smul.addr %s217, 32
      %s219 = smul.addr %s218, 4
      %s220 = scalar_lea.vmem %s0, %s219
      %p221 = pneg %p50
      %p222 = pneg %p47
      %p223 = pneg %p71
      %p224 = pneg %p68
      %p225 = pneg %p92
      %p226 = pneg %p89
      %p227 = pneg %p120
      %p228 = pneg %p117
      %s229 = sadd.s32 %s21, %s22
      %p230 = scmp.lt.s32.totalorder %s229, 1
      %s231 = scalar_select %p230, %s229, 1
      %s232 = smul.addr %s231, 7
      %s233 = smul.addr %s232, 8
      %s234 = scalar_lea.vmem %s3, %s233
      %p235 = pneg %p148
      %p236 = pneg %p145
      %s237 = sadd.s32 %s21, %s22
      %p238 = scmp.lt.s32.totalorder %s237, 1
      %s239 = scalar_select %p238, %s237, 1
      %s240 = smul.addr %s239, 8
      %s241 = scalar_lea.vmem %s4, %s240
      %p242 = pneg %p176
      %p243 = pneg %p173
      %s244 = sadd.s32 %s21, %s22
      %p245 = scmp.lt.s32.totalorder %s244, 1
      %s246 = scalar_select %p245, %s244, 1
      %s247 = smul.addr %s246, 8
      %s248 = scalar_lea.vmem %s5, %s247
      %p249 = scmp.lt.s32.totalorder %s21, 1
      %s250 = scalar_select %p249, %s21, 1
      %s251 = smul.addr %s250, 32
      %s252 = smul.addr %s251, 4
      %s253 = scalar_lea.vmem %s0, %s252
      %s254 = sadd.s32 %s21, %s22
      %p255 = scmp.lt.s32.totalorder %s254, 1
      %s256 = scalar_select %p255, %s254, 1
      %s257 = smul.addr %s256, 7
      %s258 = smul.addr %s257, 8
      %s259 = scalar_lea.vmem %s3, %s258
      %s260 = sadd.s32 %s21, %s22
      %s261 = sadd.s32 %s21, %s22
      %p262 = scmp.lt.s32.totalorder %s261, 1
      %s263 = scalar_select %p262, %s261, 1
      %s264 = smul.addr %s263, 8
      %s265 = scalar_lea.vmem %s4, %s264
      %s266 = sadd.s32 %s21, %s22
      %s267 = sadd.s32 %s21, %s22
      %p268 = scmp.lt.s32.totalorder %s267, 1
      %s269 = scalar_select %p268, %s267, 1
      %s270 = smul.addr %s269, 8
      %s271 = scalar_lea.vmem %s5, %s270
      %s272 = sadd.s32 %s21, %s22
      %s274 = smul.u32 %s22, 14
      %s275 = smul.u32 %s274, 2
      %s276 = smul.addr %s275, 4
      %s277 = scalar_lea.vmem %s253, %s276
      %v278 = vld [vmem:[%s277] sm:$0xf]
      %v279 = vld [vmem:[%s277 + $0x4] sm:$0x7]
      %v280 = vld [vmem:[%s277 + $0x8] sm:$0xf]
      %v281 = vld [vmem:[%s277 + $0xc] sm:$0x7]
      %v282 = vld [vmem:[%s277 + $0x10] sm:$0xf]
      %v283 = vld [vmem:[%s277 + $0x14] sm:$0x7]
      %v284 = vld [vmem:[%s277 + $0x18] sm:$0xf]
      %v285 = vld [vmem:[%s277 + $0x1c] sm:$0x7]
      %v286 = vld [vmem:[%s277 + $0x20] sm:$0xf]
      %v287 = vld [vmem:[%s277 + $0x24] sm:$0x7]
      %v288 = vld [vmem:[%s277 + $0x28] sm:$0xf]
      %v289 = vld [vmem:[%s277 + $0x2c] sm:$0x7]
      %v290 = vld [vmem:[%s277 + $0x30] sm:$0xf]
      %v291 = vld [vmem:[%s277 + $0x34] sm:$0x7]
      %v292 = vld [vmem:[%s277 + $0x38] sm:$0xf]
      %v293 = vld [vmem:[%s277 + $0x3c] sm:$0x7]
      %v294 = vld [vmem:[%s277 + $0x40] sm:$0xf]
      %v295 = vld [vmem:[%s277 + $0x44] sm:$0x7]
      %v296 = vld [vmem:[%s277 + $0x48] sm:$0xf]
      %v297 = vld [vmem:[%s277 + $0x4c] sm:$0x7]
      %v298 = vld [vmem:[%s277 + $0x50] sm:$0xf]
      %v299 = vld [vmem:[%s277 + $0x54] sm:$0x7]
      %v300 = vld [vmem:[%s277 + $0x58] sm:$0xf]
      %v301 = vld [vmem:[%s277 + $0x5c] sm:$0x7]
      %v302 = vld [vmem:[%s277 + $0x60] sm:$0xf]
      %v303 = vld [vmem:[%s277 + $0x64] sm:$0x7]
      %v304 = vld [vmem:[%s277 + $0x68] sm:$0xf]
      %v305 = vld [vmem:[%s277 + $0x6c] sm:$0x7]
      %v306 = vld [vmem:[%s277 + $0x4] sm:$0xf]
      %v307 = vld [vmem:[%s277 + $0xc] sm:$0xf]
      %v308 = vld [vmem:[%s277 + $0x14] sm:$0xf]
      %v309 = vld [vmem:[%s277 + $0x1c] sm:$0xf]
      %v310 = vld [vmem:[%s277 + $0x24] sm:$0xf]
      %v311 = vld [vmem:[%s277 + $0x2c] sm:$0xf]
      %v312 = vld [vmem:[%s277 + $0x34] sm:$0xf]
      %v313 = vld [vmem:[%s277 + $0x3c] sm:$0xf]
      %v314 = vld [vmem:[%s277 + $0x44] sm:$0xf]
      %v315 = vld [vmem:[%s277 + $0x4c] sm:$0xf]
      %v316 = vld [vmem:[%s277 + $0x54] sm:$0xf]
      %v317 = vld [vmem:[%s277 + $0x5c] sm:$0xf]
      %v318 = vld [vmem:[%s277 + $0x64] sm:$0xf]
      %v319 = vld [vmem:[%s277 + $0x6c] sm:$0xf]
      %v320 = vld [vmem:[%s277] sm:$0xe]
      %v321 = vld [vmem:[%s277 + $0x8] sm:$0xe]
      %v322 = vld [vmem:[%s277 + $0x10] sm:$0xe]
      %v323 = vld [vmem:[%s277 + $0x18] sm:$0xe]
      %v324 = vld [vmem:[%s277 + $0x20] sm:$0xe]
      %v325 = vld [vmem:[%s277 + $0x28] sm:$0xe]
      %v326 = vld [vmem:[%s277 + $0x30] sm:$0xe]
      %v327 = vld [vmem:[%s277 + $0x38] sm:$0xe]
      %v328 = vld [vmem:[%s277 + $0x40] sm:$0xe]
      %v329 = vld [vmem:[%s277 + $0x48] sm:$0xe]
      %v330 = vld [vmem:[%s277 + $0x50] sm:$0xe]
      %v331 = vld [vmem:[%s277 + $0x58] sm:$0xe]
      %v332 = vld [vmem:[%s277 + $0x60] sm:$0xe]
      %v333 = vld [vmem:[%s277 + $0x68] sm:$0xe]
      %s334 = sadd.s32 %s274, 1
      %s335 = smul.u32 %s334, 2
      %s336 = smul.addr %s335, 4
      %s337 = scalar_lea.vmem %s253, %s336
      %v338 = vld [vmem:[%s337] sm:$0xf]
      %v339 = vld [vmem:[%s337 + $0x4] sm:$0x7]
      %v340 = vld [vmem:[%s337 + $0x8] sm:$0xf]
      %v341 = vld [vmem:[%s337 + $0xc] sm:$0x7]
      %v342 = vld [vmem:[%s337 + $0x10] sm:$0xf]
      %v343 = vld [vmem:[%s337 + $0x14] sm:$0x7]
      %v344 = vld [vmem:[%s337 + $0x18] sm:$0xf]
      %v345 = vld [vmem:[%s337 + $0x1c] sm:$0x7]
      %v346 = vld [vmem:[%s337 + $0x20] sm:$0xf]
      %v347 = vld [vmem:[%s337 + $0x24] sm:$0x7]
      %v348 = vld [vmem:[%s337 + $0x28] sm:$0xf]
      %v349 = vld [vmem:[%s337 + $0x2c] sm:$0x7]
      %v350 = vld [vmem:[%s337 + $0x30] sm:$0xf]
      %v351 = vld [vmem:[%s337 + $0x34] sm:$0x7]
      %v352 = vld [vmem:[%s337 + $0x38] sm:$0xf]
      %v353 = vld [vmem:[%s337 + $0x3c] sm:$0x7]
      %v354 = vld [vmem:[%s337 + $0x40] sm:$0xf]
      %v355 = vld [vmem:[%s337 + $0x44] sm:$0x7]
      %v356 = vld [vmem:[%s337 + $0x48] sm:$0xf]
      %v357 = vld [vmem:[%s337 + $0x4c] sm:$0x7]
      %v358 = vld [vmem:[%s337 + $0x50] sm:$0xf]
      %v359 = vld [vmem:[%s337 + $0x54] sm:$0x7]
      %v360 = vld [vmem:[%s337 + $0x58] sm:$0xf]
      %v361 = vld [vmem:[%s337 + $0x5c] sm:$0x7]
      %v362 = vld [vmem:[%s337 + $0x60] sm:$0xf]
      %v363 = vld [vmem:[%s337 + $0x64] sm:$0x7]
      %v364 = vld [vmem:[%s337 + $0x68] sm:$0xf]
      %v365 = vld [vmem:[%s337 + $0x6c] sm:$0x7]
      %v366 = vld [vmem:[%s337 + $0x4] sm:$0xf]
      %v367 = vld [vmem:[%s337 + $0xc] sm:$0xf]
      %v368 = vld [vmem:[%s337 + $0x14] sm:$0xf]
      %v369 = vld [vmem:[%s337 + $0x1c] sm:$0xf]
      %v370 = vld [vmem:[%s337 + $0x24] sm:$0xf]
      %v371 = vld [vmem:[%s337 + $0x2c] sm:$0xf]
      %v372 = vld [vmem:[%s337 + $0x34] sm:$0xf]
      %v373 = vld [vmem:[%s337 + $0x3c] sm:$0xf]
      %v374 = vld [vmem:[%s337 + $0x44] sm:$0xf]
      %v375 = vld [vmem:[%s337 + $0x4c] sm:$0xf]
      %v376 = vld [vmem:[%s337 + $0x54] sm:$0xf]
      %v377 = vld [vmem:[%s337 + $0x5c] sm:$0xf]
      %v378 = vld [vmem:[%s337 + $0x64] sm:$0xf]
      %v379 = vld [vmem:[%s337 + $0x6c] sm:$0xf]
      %v380 = vld [vmem:[%s337] sm:$0xe]
      %v381 = vld [vmem:[%s337 + $0x8] sm:$0xe]
      %v382 = vld [vmem:[%s337 + $0x10] sm:$0xe]
      %v383 = vld [vmem:[%s337 + $0x18] sm:$0xe]
      %v384 = vld [vmem:[%s337 + $0x20] sm:$0xe]
      %v385 = vld [vmem:[%s337 + $0x28] sm:$0xe]
      %v386 = vld [vmem:[%s337 + $0x30] sm:$0xe]
      %v387 = vld [vmem:[%s337 + $0x38] sm:$0xe]
      %v388 = vld [vmem:[%s337 + $0x40] sm:$0xe]
      %v389 = vld [vmem:[%s337 + $0x48] sm:$0xe]
      %v390 = vld [vmem:[%s337 + $0x50] sm:$0xe]
      %v391 = vld [vmem:[%s337 + $0x58] sm:$0xe]
      %v392 = vld [vmem:[%s337 + $0x60] sm:$0xe]
      %v393 = vld [vmem:[%s337 + $0x68] sm:$0xe]
      %s394 = sadd.s32 %s274, 2
      %s395 = smul.u32 %s394, 2
      %s396 = smul.addr %s395, 4
      %s397 = scalar_lea.vmem %s253, %s396
      %v398 = vld [vmem:[%s397] sm:$0xf]
      %v399 = vld [vmem:[%s397 + $0x4] sm:$0x7]
      %v400 = vld [vmem:[%s397 + $0x8] sm:$0xf]
      %v401 = vld [vmem:[%s397 + $0xc] sm:$0x7]
      %v402 = vld [vmem:[%s397 + $0x10] sm:$0xf]
      %v403 = vld [vmem:[%s397 + $0x14] sm:$0x7]
      %v404 = vld [vmem:[%s397 + $0x18] sm:$0xf]
      %v405 = vld [vmem:[%s397 + $0x1c] sm:$0x7]
      %v406 = vld [vmem:[%s397 + $0x20] sm:$0xf]
      %v407 = vld [vmem:[%s397 + $0x24] sm:$0x7]
      %v408 = vld [vmem:[%s397 + $0x28] sm:$0xf]
      %v409 = vld [vmem:[%s397 + $0x2c] sm:$0x7]
      %v410 = vld [vmem:[%s397 + $0x30] sm:$0xf]
      %v411 = vld [vmem:[%s397 + $0x34] sm:$0x7]
      %v412 = vld [vmem:[%s397 + $0x38] sm:$0xf]
      %v413 = vld [vmem:[%s397 + $0x3c] sm:$0x7]
      %v414 = vld [vmem:[%s397 + $0x40] sm:$0xf]
      %v415 = vld [vmem:[%s397 + $0x44] sm:$0x7]
      %v416 = vld [vmem:[%s397 + $0x48] sm:$0xf]
      %v417 = vld [vmem:[%s397 + $0x4c] sm:$0x7]
      %v418 = vld [vmem:[%s397 + $0x50] sm:$0xf]
      %v419 = vld [vmem:[%s397 + $0x54] sm:$0x7]
      %v420 = vld [vmem:[%s397 + $0x58] sm:$0xf]
      %v421 = vld [vmem:[%s397 + $0x5c] sm:$0x7]
      %v422 = vld [vmem:[%s397 + $0x60] sm:$0xf]
      %v423 = vld [vmem:[%s397 + $0x64] sm:$0x7]
      %v424 = vld [vmem:[%s397 + $0x68] sm:$0xf]
      %v425 = vld [vmem:[%s397 + $0x6c] sm:$0x7]
      %v426 = vld [vmem:[%s397 + $0x4] sm:$0xf]
      %v427 = vld [vmem:[%s397 + $0xc] sm:$0xf]
      %v428 = vld [vmem:[%s397 + $0x14] sm:$0xf]
      %v429 = vld [vmem:[%s397 + $0x1c] sm:$0xf]
      %v430 = vld [vmem:[%s397 + $0x24] sm:$0xf]
      %v431 = vld [vmem:[%s397 + $0x2c] sm:$0xf]
      %v432 = vld [vmem:[%s397 + $0x34] sm:$0xf]
      %v433 = vld [vmem:[%s397 + $0x3c] sm:$0xf]
      %v434 = vld [vmem:[%s397 + $0x44] sm:$0xf]
      %v435 = vld [vmem:[%s397 + $0x4c] sm:$0xf]
      %v436 = vld [vmem:[%s397 + $0x54] sm:$0xf]
      %v437 = vld [vmem:[%s397 + $0x5c] sm:$0xf]
      %v438 = vld [vmem:[%s397 + $0x64] sm:$0xf]
      %v439 = vld [vmem:[%s397 + $0x6c] sm:$0xf]
      %v440 = vld [vmem:[%s397] sm:$0xe]
      %v441 = vld [vmem:[%s397 + $0x8] sm:$0xe]
      %v442 = vld [vmem:[%s397 + $0x10] sm:$0xe]
      %v443 = vld [vmem:[%s397 + $0x18] sm:$0xe]
      %v444 = vld [vmem:[%s397 + $0x20] sm:$0xe]
      %v445 = vld [vmem:[%s397 + $0x28] sm:$0xe]
      %v446 = vld [vmem:[%s397 + $0x30] sm:$0xe]
      %v447 = vld [vmem:[%s397 + $0x38] sm:$0xe]
      %v448 = vld [vmem:[%s397 + $0x40] sm:$0xe]
      %v449 = vld [vmem:[%s397 + $0x48] sm:$0xe]
      %v450 = vld [vmem:[%s397 + $0x50] sm:$0xe]
      %v451 = vld [vmem:[%s397 + $0x58] sm:$0xe]
      %v452 = vld [vmem:[%s397 + $0x60] sm:$0xe]
      %v453 = vld [vmem:[%s397 + $0x68] sm:$0xe]
      %v482 = vunpack.c.l.b16 %v278
      %v483 = vunpack.c.l.b16 %v279
      %v484 = vunpack.c.l.b16 %v280
      %v485 = vunpack.c.l.b16 %v281
      %v486 = vunpack.c.l.b16 %v282
      %v487 = vunpack.c.l.b16 %v283
      %v488 = vunpack.c.l.b16 %v284
      %v489 = vunpack.c.l.b16 %v285
      %v490 = vunpack.c.l.b16 %v286
      %v491 = vunpack.c.l.b16 %v287
      %v492 = vunpack.c.l.b16 %v288
      %v493 = vunpack.c.l.b16 %v289
      %v494 = vunpack.c.l.b16 %v290
      %v495 = vunpack.c.l.b16 %v291
      %v496 = vunpack.c.l.b16 %v292
      %v497 = vunpack.c.l.b16 %v293
      %v498 = vunpack.c.l.b16 %v294
      %v499 = vunpack.c.l.b16 %v295
      %v500 = vunpack.c.l.b16 %v296
      %v501 = vunpack.c.l.b16 %v297
      %v502 = vunpack.c.l.b16 %v298
      %v503 = vunpack.c.l.b16 %v299
      %v504 = vunpack.c.l.b16 %v300
      %v505 = vunpack.c.l.b16 %v301
      %v506 = vunpack.c.l.b16 %v302
      %v507 = vunpack.c.l.b16 %v303
      %v508 = vunpack.c.l.b16 %v304
      %v509 = vunpack.c.l.b16 %v305
      %v510 = vpack.c.b16 %v483, %v482
      %v511 = vpack.c.b16 %v485, %v484
      %v512 = vpack.c.b16 %v487, %v486
      %v513 = vpack.c.b16 %v489, %v488
      %v514 = vpack.c.b16 %v491, %v490
      %v515 = vpack.c.b16 %v493, %v492
      %v516 = vpack.c.b16 %v495, %v494
      %v517 = vpack.c.b16 %v497, %v496
      %v518 = vpack.c.b16 %v499, %v498
      %v519 = vpack.c.b16 %v501, %v500
      %v520 = vpack.c.b16 %v503, %v502
      %v521 = vpack.c.b16 %v505, %v504
      %v522 = vpack.c.b16 %v507, %v506
      %v523 = vpack.c.b16 %v509, %v508
      %v538 = vunpack.c.l.b16 %v306
      %v539 = vunpack.c.l.b16 %v307
      %v540 = vunpack.c.l.b16 %v308
      %v541 = vunpack.c.l.b16 %v309
      %v542 = vunpack.c.l.b16 %v310
      %v543 = vunpack.c.l.b16 %v311
      %v544 = vunpack.c.l.b16 %v312
      %v545 = vunpack.c.l.b16 %v313
      %v546 = vunpack.c.l.b16 %v314
      %v547 = vunpack.c.l.b16 %v315
      %v548 = vunpack.c.l.b16 %v316
      %v549 = vunpack.c.l.b16 %v317
      %v550 = vunpack.c.l.b16 %v318
      %v551 = vunpack.c.l.b16 %v319
      %v552 = vpack.c.b16 %v538, %v482
      %v553 = vpack.c.b16 %v539, %v484
      %v554 = vpack.c.b16 %v540, %v486
      %v555 = vpack.c.b16 %v541, %v488
      %v556 = vpack.c.b16 %v542, %v490
      %v557 = vpack.c.b16 %v543, %v492
      %v558 = vpack.c.b16 %v544, %v494
      %v559 = vpack.c.b16 %v545, %v496
      %v560 = vpack.c.b16 %v546, %v498
      %v561 = vpack.c.b16 %v547, %v500
      %v562 = vpack.c.b16 %v548, %v502
      %v563 = vpack.c.b16 %v549, %v504
      %v564 = vpack.c.b16 %v550, %v506
      %v565 = vpack.c.b16 %v551, %v508
      %v567 = vshrl.u32 %v552, 16
      %v569 = vshll.u32 %v552, 16
      %v571 = vrot.slane %v569, 1
      %v572 = vor.u32 %v567, %v571
      %v574 = vshrl.u32 %v553, 16
      %v576 = vshll.u32 %v553, 16
      %v578 = vrot.slane %v576, 1
      %v579 = vor.u32 %v574, %v578
      %v581 = vshrl.u32 %v554, 16
      %v583 = vshll.u32 %v554, 16
      %v585 = vrot.slane %v583, 1
      %v586 = vor.u32 %v581, %v585
      %v588 = vshrl.u32 %v555, 16
      %v590 = vshll.u32 %v555, 16
      %v592 = vrot.slane %v590, 1
      %v593 = vor.u32 %v588, %v592
      %v595 = vshrl.u32 %v556, 16
      %v597 = vshll.u32 %v556, 16
      %v599 = vrot.slane %v597, 1
      %v600 = vor.u32 %v595, %v599
      %v602 = vshrl.u32 %v557, 16
      %v604 = vshll.u32 %v557, 16
      %v606 = vrot.slane %v604, 1
      %v607 = vor.u32 %v602, %v606
      %v609 = vshrl.u32 %v558, 16
      %v611 = vshll.u32 %v558, 16
      %v613 = vrot.slane %v611, 1
      %v614 = vor.u32 %v609, %v613
      %v616 = vshrl.u32 %v559, 16
      %v618 = vshll.u32 %v559, 16
      %v620 = vrot.slane %v618, 1
      %v621 = vor.u32 %v616, %v620
      %v623 = vshrl.u32 %v560, 16
      %v625 = vshll.u32 %v560, 16
      %v627 = vrot.slane %v625, 1
      %v628 = vor.u32 %v623, %v627
      %v630 = vshrl.u32 %v561, 16
      %v632 = vshll.u32 %v561, 16
      %v634 = vrot.slane %v632, 1
      %v635 = vor.u32 %v630, %v634
      %v637 = vshrl.u32 %v562, 16
      %v639 = vshll.u32 %v562, 16
      %v641 = vrot.slane %v639, 1
      %v642 = vor.u32 %v637, %v641
      %v644 = vshrl.u32 %v563, 16
      %v646 = vshll.u32 %v563, 16
      %v648 = vrot.slane %v646, 1
      %v649 = vor.u32 %v644, %v648
      %v651 = vshrl.u32 %v564, 16
      %v653 = vshll.u32 %v564, 16
      %v655 = vrot.slane %v653, 1
      %v656 = vor.u32 %v651, %v655
      %v658 = vshrl.u32 %v565, 16
      %v660 = vshll.u32 %v565, 16
      %v662 = vrot.slane %v660, 1
      %v663 = vor.u32 %v658, %v662
      %664 = vrot.lane.b32.xlu0 %v572, 4
      %v665 = vpop.permute.xlu0 %664
      %666 = vrot.lane.b32.xlu0 %v579, 4
      %v667 = vpop.permute.xlu0 %666
      %668 = vrot.lane.b32.xlu0 %v586, 4
      %v669 = vpop.permute.xlu0 %668
      %670 = vrot.lane.b32.xlu0 %v593, 4
      %v671 = vpop.permute.xlu0 %670
      %672 = vrot.lane.b32.xlu0 %v600, 4
      %v673 = vpop.permute.xlu0 %672
      %674 = vrot.lane.b32.xlu0 %v607, 4
      %v675 = vpop.permute.xlu0 %674
      %676 = vrot.lane.b32.xlu0 %v614, 4
      %v677 = vpop.permute.xlu0 %676
      %678 = vrot.lane.b32.xlu0 %v621, 4
      %v679 = vpop.permute.xlu0 %678
      %680 = vrot.lane.b32.xlu0 %v628, 4
      %v681 = vpop.permute.xlu0 %680
      %682 = vrot.lane.b32.xlu0 %v635, 4
      %v683 = vpop.permute.xlu0 %682
      %684 = vrot.lane.b32.xlu0 %v642, 4
      %v685 = vpop.permute.xlu0 %684
      %686 = vrot.lane.b32.xlu0 %v649, 4
      %v687 = vpop.permute.xlu0 %686
      %688 = vrot.lane.b32.xlu0 %v656, 4
      %v689 = vpop.permute.xlu0 %688
      %690 = vrot.lane.b32.xlu0 %v663, 4
      %v691 = vpop.permute.xlu0 %690
      %v706 = vunpack.c.l.b16 %v320
      %v707 = vunpack.c.l.b16 %v321
      %v708 = vunpack.c.l.b16 %v322
      %v709 = vunpack.c.l.b16 %v323
      %v710 = vunpack.c.l.b16 %v324
      %v711 = vunpack.c.l.b16 %v325
      %v712 = vunpack.c.l.b16 %v326
      %v713 = vunpack.c.l.b16 %v327
      %v714 = vunpack.c.l.b16 %v328
      %v715 = vunpack.c.l.b16 %v329
      %v716 = vunpack.c.l.b16 %v330
      %v717 = vunpack.c.l.b16 %v331
      %v718 = vunpack.c.l.b16 %v332
      %v719 = vunpack.c.l.b16 %v333
      %v720 = vpack.c.b16 %v538, %v706
      %v721 = vpack.c.b16 %v539, %v707
      %v722 = vpack.c.b16 %v540, %v708
      %v723 = vpack.c.b16 %v541, %v709
      %v724 = vpack.c.b16 %v542, %v710
      %v725 = vpack.c.b16 %v543, %v711
      %v726 = vpack.c.b16 %v544, %v712
      %v727 = vpack.c.b16 %v545, %v713
      %v728 = vpack.c.b16 %v546, %v714
      %v729 = vpack.c.b16 %v547, %v715
      %v730 = vpack.c.b16 %v548, %v716
      %v731 = vpack.c.b16 %v549, %v717
      %v732 = vpack.c.b16 %v550, %v718
      %v733 = vpack.c.b16 %v551, %v719
      %v734 = vrot.slane %v720, 1
      %v735 = vrot.slane %v721, 1
      %v736 = vrot.slane %v722, 1
      %v737 = vrot.slane %v723, 1
      %v738 = vrot.slane %v724, 1
      %v739 = vrot.slane %v725, 1
      %v740 = vrot.slane %v726, 1
      %v741 = vrot.slane %v727, 1
      %v742 = vrot.slane %v728, 1
      %v743 = vrot.slane %v729, 1
      %v744 = vrot.slane %v730, 1
      %v745 = vrot.slane %v731, 1
      %v746 = vrot.slane %v732, 1
      %v747 = vrot.slane %v733, 1
      %748 = vrot.lane.b32.xlu0 %v734, 8
      %v749 = vpop.permute.xlu0 %748
      %750 = vrot.lane.b32.xlu0 %v735, 8
      %v751 = vpop.permute.xlu0 %750
      %752 = vrot.lane.b32.xlu0 %v736, 8
      %v753 = vpop.permute.xlu0 %752
      %754 = vrot.lane.b32.xlu0 %v737, 8
      %v755 = vpop.permute.xlu0 %754
      %756 = vrot.lane.b32.xlu0 %v738, 8
      %v757 = vpop.permute.xlu0 %756
      %758 = vrot.lane.b32.xlu0 %v739, 8
      %v759 = vpop.permute.xlu0 %758
      %760 = vrot.lane.b32.xlu0 %v740, 8
      %v761 = vpop.permute.xlu0 %760
      %762 = vrot.lane.b32.xlu0 %v741, 8
      %v763 = vpop.permute.xlu0 %762
      %764 = vrot.lane.b32.xlu0 %v742, 8
      %v765 = vpop.permute.xlu0 %764
      %766 = vrot.lane.b32.xlu0 %v743, 8
      %v767 = vpop.permute.xlu0 %766
      %768 = vrot.lane.b32.xlu0 %v744, 8
      %v769 = vpop.permute.xlu0 %768
      %770 = vrot.lane.b32.xlu0 %v745, 8
      %v771 = vpop.permute.xlu0 %770
      %772 = vrot.lane.b32.xlu0 %v746, 8
      %v773 = vpop.permute.xlu0 %772
      %774 = vrot.lane.b32.xlu0 %v747, 8
      %v775 = vpop.permute.xlu0 %774
      %v804 = vunpack.c.l.b16 %v338
      %v805 = vunpack.c.l.b16 %v339
      %v806 = vunpack.c.l.b16 %v340
      %v807 = vunpack.c.l.b16 %v341
      %v808 = vunpack.c.l.b16 %v342
      %v809 = vunpack.c.l.b16 %v343
      %v810 = vunpack.c.l.b16 %v344
      %v811 = vunpack.c.l.b16 %v345
      %v812 = vunpack.c.l.b16 %v346
      %v813 = vunpack.c.l.b16 %v347
      %v814 = vunpack.c.l.b16 %v348
      %v815 = vunpack.c.l.b16 %v349
      %v816 = vunpack.c.l.b16 %v350
      %v817 = vunpack.c.l.b16 %v351
      %v818 = vunpack.c.l.b16 %v352
      %v819 = vunpack.c.l.b16 %v353
      %v820 = vunpack.c.l.b16 %v354
      %v821 = vunpack.c.l.b16 %v355
      %v822 = vunpack.c.l.b16 %v356
      %v823 = vunpack.c.l.b16 %v357
      %v824 = vunpack.c.l.b16 %v358
      %v825 = vunpack.c.l.b16 %v359
      %v826 = vunpack.c.l.b16 %v360
      %v827 = vunpack.c.l.b16 %v361
      %v828 = vunpack.c.l.b16 %v362
      %v829 = vunpack.c.l.b16 %v363
      %v830 = vunpack.c.l.b16 %v364
      %v831 = vunpack.c.l.b16 %v365
      %v832 = vpack.c.b16 %v805, %v804
      %v833 = vpack.c.b16 %v807, %v806
      %v834 = vpack.c.b16 %v809, %v808
      %v835 = vpack.c.b16 %v811, %v810
      %v836 = vpack.c.b16 %v813, %v812
      %v837 = vpack.c.b16 %v815, %v814
      %v838 = vpack.c.b16 %v817, %v816
      %v839 = vpack.c.b16 %v819, %v818
      %v840 = vpack.c.b16 %v821, %v820
      %v841 = vpack.c.b16 %v823, %v822
      %v842 = vpack.c.b16 %v825, %v824
      %v843 = vpack.c.b16 %v827, %v826
      %v844 = vpack.c.b16 %v829, %v828
      %v845 = vpack.c.b16 %v831, %v830
      %846 = vrot.lane.b32.xlu0 %v832, 12
      %v847 = vpop.permute.xlu0 %846
      %848 = vrot.lane.b32.xlu0 %v833, 12
      %v849 = vpop.permute.xlu0 %848
      %850 = vrot.lane.b32.xlu0 %v834, 12
      %v851 = vpop.permute.xlu0 %850
      %852 = vrot.lane.b32.xlu0 %v835, 12
      %v853 = vpop.permute.xlu0 %852
      %854 = vrot.lane.b32.xlu0 %v836, 12
      %v855 = vpop.permute.xlu0 %854
      %856 = vrot.lane.b32.xlu0 %v837, 12
      %v857 = vpop.permute.xlu0 %856
      %858 = vrot.lane.b32.xlu0 %v838, 12
      %v859 = vpop.permute.xlu0 %858
      %860 = vrot.lane.b32.xlu0 %v839, 12
      %v861 = vpop.permute.xlu0 %860
      %862 = vrot.lane.b32.xlu0 %v840, 12
      %v863 = vpop.permute.xlu0 %862
      %864 = vrot.lane.b32.xlu0 %v841, 12
      %v865 = vpop.permute.xlu0 %864
      %866 = vrot.lane.b32.xlu0 %v842, 12
      %v867 = vpop.permute.xlu0 %866
      %868 = vrot.lane.b32.xlu0 %v843, 12
      %v869 = vpop.permute.xlu0 %868
      %870 = vrot.lane.b32.xlu0 %v844, 12
      %v871 = vpop.permute.xlu0 %870
      %872 = vrot.lane.b32.xlu0 %v845, 12
      %v873 = vpop.permute.xlu0 %872
      %v888 = vunpack.c.l.b16 %v366
      %v889 = vunpack.c.l.b16 %v367
      %v890 = vunpack.c.l.b16 %v368
      %v891 = vunpack.c.l.b16 %v369
      %v892 = vunpack.c.l.b16 %v370
      %v893 = vunpack.c.l.b16 %v371
      %v894 = vunpack.c.l.b16 %v372
      %v895 = vunpack.c.l.b16 %v373
      %v896 = vunpack.c.l.b16 %v374
      %v897 = vunpack.c.l.b16 %v375
      %v898 = vunpack.c.l.b16 %v376
      %v899 = vunpack.c.l.b16 %v377
      %v900 = vunpack.c.l.b16 %v378
      %v901 = vunpack.c.l.b16 %v379
      %v902 = vpack.c.b16 %v888, %v804
      %v903 = vpack.c.b16 %v889, %v806
      %v904 = vpack.c.b16 %v890, %v808
      %v905 = vpack.c.b16 %v891, %v810
      %v906 = vpack.c.b16 %v892, %v812
      %v907 = vpack.c.b16 %v893, %v814
      %v908 = vpack.c.b16 %v894, %v816
      %v909 = vpack.c.b16 %v895, %v818
      %v910 = vpack.c.b16 %v896, %v820
      %v911 = vpack.c.b16 %v897, %v822
      %v912 = vpack.c.b16 %v898, %v824
      %v913 = vpack.c.b16 %v899, %v826
      %v914 = vpack.c.b16 %v900, %v828
      %v915 = vpack.c.b16 %v901, %v830
      %v917 = vshrl.u32 %v902, 16
      %v919 = vshll.u32 %v902, 16
      %v921 = vrot.slane %v919, 1
      %v922 = vor.u32 %v917, %v921
      %v924 = vshrl.u32 %v903, 16
      %v926 = vshll.u32 %v903, 16
      %v928 = vrot.slane %v926, 1
      %v929 = vor.u32 %v924, %v928
      %v931 = vshrl.u32 %v904, 16
      %v933 = vshll.u32 %v904, 16
      %v935 = vrot.slane %v933, 1
      %v936 = vor.u32 %v931, %v935
      %v938 = vshrl.u32 %v905, 16
      %v940 = vshll.u32 %v905, 16
      %v942 = vrot.slane %v940, 1
      %v943 = vor.u32 %v938, %v942
      %v945 = vshrl.u32 %v906, 16
      %v947 = vshll.u32 %v906, 16
      %v949 = vrot.slane %v947, 1
      %v950 = vor.u32 %v945, %v949
      %v952 = vshrl.u32 %v907, 16
      %v954 = vshll.u32 %v907, 16
      %v956 = vrot.slane %v954, 1
      %v957 = vor.u32 %v952, %v956
      %v959 = vshrl.u32 %v908, 16
      %v961 = vshll.u32 %v908, 16
      %v963 = vrot.slane %v961, 1
      %v964 = vor.u32 %v959, %v963
      %v966 = vshrl.u32 %v909, 16
      %v968 = vshll.u32 %v909, 16
      %v970 = vrot.slane %v968, 1
      %v971 = vor.u32 %v966, %v970
      %v973 = vshrl.u32 %v910, 16
      %v975 = vshll.u32 %v910, 16
      %v977 = vrot.slane %v975, 1
      %v978 = vor.u32 %v973, %v977
      %v980 = vshrl.u32 %v911, 16
      %v982 = vshll.u32 %v911, 16
      %v984 = vrot.slane %v982, 1
      %v985 = vor.u32 %v980, %v984
      %v987 = vshrl.u32 %v912, 16
      %v989 = vshll.u32 %v912, 16
      %v991 = vrot.slane %v989, 1
      %v992 = vor.u32 %v987, %v991
      %v994 = vshrl.u32 %v913, 16
      %v996 = vshll.u32 %v913, 16
      %v998 = vrot.slane %v996, 1
      %v999 = vor.u32 %v994, %v998
      %v1001 = vshrl.u32 %v914, 16
      %v1003 = vshll.u32 %v914, 16
      %v1005 = vrot.slane %v1003, 1
      %v1006 = vor.u32 %v1001, %v1005
      %v1008 = vshrl.u32 %v915, 16
      %v1010 = vshll.u32 %v915, 16
      %v1012 = vrot.slane %v1010, 1
      %v1013 = vor.u32 %v1008, %v1012
      %1014 = vrot.lane.b32.xlu0 %v922, 16
      %v1015 = vpop.permute.xlu0 %1014
      %1016 = vrot.lane.b32.xlu0 %v929, 16
      %v1017 = vpop.permute.xlu0 %1016
      %1018 = vrot.lane.b32.xlu0 %v936, 16
      %v1019 = vpop.permute.xlu0 %1018
      %1020 = vrot.lane.b32.xlu0 %v943, 16
      %v1021 = vpop.permute.xlu0 %1020
      %1022 = vrot.lane.b32.xlu0 %v950, 16
      %v1023 = vpop.permute.xlu0 %1022
      %1024 = vrot.lane.b32.xlu0 %v957, 16
      %v1025 = vpop.permute.xlu0 %1024
      %1026 = vrot.lane.b32.xlu0 %v964, 16
      %v1027 = vpop.permute.xlu0 %1026
      %1028 = vrot.lane.b32.xlu0 %v971, 16
      %v1029 = vpop.permute.xlu0 %1028
      %1030 = vrot.lane.b32.xlu0 %v978, 16
      %v1031 = vpop.permute.xlu0 %1030
      %1032 = vrot.lane.b32.xlu0 %v985, 16
      %v1033 = vpop.permute.xlu0 %1032
      %1034 = vrot.lane.b32.xlu0 %v992, 16
      %v1035 = vpop.permute.xlu0 %1034
      %1036 = vrot.lane.b32.xlu0 %v999, 16
      %v1037 = vpop.permute.xlu0 %1036
      %1038 = vrot.lane.b32.xlu0 %v1006, 16
      %v1039 = vpop.permute.xlu0 %1038
      %1040 = vrot.lane.b32.xlu0 %v1013, 16
      %v1041 = vpop.permute.xlu0 %1040
      %v1056 = vunpack.c.l.b16 %v380
      %v1057 = vunpack.c.l.b16 %v381
      %v1058 = vunpack.c.l.b16 %v382
      %v1059 = vunpack.c.l.b16 %v383
      %v1060 = vunpack.c.l.b16 %v384
      %v1061 = vunpack.c.l.b16 %v385
      %v1062 = vunpack.c.l.b16 %v386
      %v1063 = vunpack.c.l.b16 %v387
      %v1064 = vunpack.c.l.b16 %v388
      %v1065 = vunpack.c.l.b16 %v389
      %v1066 = vunpack.c.l.b16 %v390
      %v1067 = vunpack.c.l.b16 %v391
      %v1068 = vunpack.c.l.b16 %v392
      %v1069 = vunpack.c.l.b16 %v393
      %v1070 = vpack.c.b16 %v888, %v1056
      %v1071 = vpack.c.b16 %v889, %v1057
      %v1072 = vpack.c.b16 %v890, %v1058
      %v1073 = vpack.c.b16 %v891, %v1059
      %v1074 = vpack.c.b16 %v892, %v1060
      %v1075 = vpack.c.b16 %v893, %v1061
      %v1076 = vpack.c.b16 %v894, %v1062
      %v1077 = vpack.c.b16 %v895, %v1063
      %v1078 = vpack.c.b16 %v896, %v1064
      %v1079 = vpack.c.b16 %v897, %v1065
      %v1080 = vpack.c.b16 %v898, %v1066
      %v1081 = vpack.c.b16 %v899, %v1067
      %v1082 = vpack.c.b16 %v900, %v1068
      %v1083 = vpack.c.b16 %v901, %v1069
      %v1084 = vrot.slane %v1070, 1
      %v1085 = vrot.slane %v1071, 1
      %v1086 = vrot.slane %v1072, 1
      %v1087 = vrot.slane %v1073, 1
      %v1088 = vrot.slane %v1074, 1
      %v1089 = vrot.slane %v1075, 1
      %v1090 = vrot.slane %v1076, 1
      %v1091 = vrot.slane %v1077, 1
      %v1092 = vrot.slane %v1078, 1
      %v1093 = vrot.slane %v1079, 1
      %v1094 = vrot.slane %v1080, 1
      %v1095 = vrot.slane %v1081, 1
      %v1096 = vrot.slane %v1082, 1
      %v1097 = vrot.slane %v1083, 1
      %1098 = vrot.lane.b32.xlu0 %v1084, 20
      %v1099 = vpop.permute.xlu0 %1098
      %1100 = vrot.lane.b32.xlu0 %v1085, 20
      %v1101 = vpop.permute.xlu0 %1100
      %1102 = vrot.lane.b32.xlu0 %v1086, 20
      %v1103 = vpop.permute.xlu0 %1102
      %1104 = vrot.lane.b32.xlu0 %v1087, 20
      %v1105 = vpop.permute.xlu0 %1104
      %1106 = vrot.lane.b32.xlu0 %v1088, 20
      %v1107 = vpop.permute.xlu0 %1106
      %1108 = vrot.lane.b32.xlu0 %v1089, 20
      %v1109 = vpop.permute.xlu0 %1108
      %1110 = vrot.lane.b32.xlu0 %v1090, 20
      %v1111 = vpop.permute.xlu0 %1110
      %1112 = vrot.lane.b32.xlu0 %v1091, 20
      %v1113 = vpop.permute.xlu0 %1112
      %1114 = vrot.lane.b32.xlu0 %v1092, 20
      %v1115 = vpop.permute.xlu0 %1114
      %1116 = vrot.lane.b32.xlu0 %v1093, 20
      %v1117 = vpop.permute.xlu0 %1116
      %1118 = vrot.lane.b32.xlu0 %v1094, 20
      %v1119 = vpop.permute.xlu0 %1118
      %1120 = vrot.lane.b32.xlu0 %v1095, 20
      %v1121 = vpop.permute.xlu0 %1120
      %1122 = vrot.lane.b32.xlu0 %v1096, 20
      %v1123 = vpop.permute.xlu0 %1122
      %1124 = vrot.lane.b32.xlu0 %v1097, 20
      %v1125 = vpop.permute.xlu0 %1124
      %v1154 = vunpack.c.l.b16 %v398
      %v1155 = vunpack.c.l.b16 %v399
      %v1156 = vunpack.c.l.b16 %v400
      %v1157 = vunpack.c.l.b16 %v401
      %v1158 = vunpack.c.l.b16 %v402
      %v1159 = vunpack.c.l.b16 %v403
      %v1160 = vunpack.c.l.b16 %v404
      %v1161 = vunpack.c.l.b16 %v405
      %v1162 = vunpack.c.l.b16 %v406
      %v1163 = vunpack.c.l.b16 %v407
      %v1164 = vunpack.c.l.b16 %v408
      %v1165 = vunpack.c.l.b16 %v409
      %v1166 = vunpack.c.l.b16 %v410
      %v1167 = vunpack.c.l.b16 %v411
      %v1168 = vunpack.c.l.b16 %v412
      %v1169 = vunpack.c.l.b16 %v413
      %v1170 = vunpack.c.l.b16 %v414
      %v1171 = vunpack.c.l.b16 %v415
      %v1172 = vunpack.c.l.b16 %v416
      %v1173 = vunpack.c.l.b16 %v417
      %v1174 = vunpack.c.l.b16 %v418
      %v1175 = vunpack.c.l.b16 %v419
      %v1176 = vunpack.c.l.b16 %v420
      %v1177 = vunpack.c.l.b16 %v421
      %v1178 = vunpack.c.l.b16 %v422
      %v1179 = vunpack.c.l.b16 %v423
      %v1180 = vunpack.c.l.b16 %v424
      %v1181 = vunpack.c.l.b16 %v425
      %v1182 = vpack.c.b16 %v1155, %v1154
      %v1183 = vpack.c.b16 %v1157, %v1156
      %v1184 = vpack.c.b16 %v1159, %v1158
      %v1185 = vpack.c.b16 %v1161, %v1160
      %v1186 = vpack.c.b16 %v1163, %v1162
      %v1187 = vpack.c.b16 %v1165, %v1164
      %v1188 = vpack.c.b16 %v1167, %v1166
      %v1189 = vpack.c.b16 %v1169, %v1168
      %v1190 = vpack.c.b16 %v1171, %v1170
      %v1191 = vpack.c.b16 %v1173, %v1172
      %v1192 = vpack.c.b16 %v1175, %v1174
      %v1193 = vpack.c.b16 %v1177, %v1176
      %v1194 = vpack.c.b16 %v1179, %v1178
      %v1195 = vpack.c.b16 %v1181, %v1180
      %1196 = vrot.lane.b32.xlu0 %v1182, 24
      %v1197 = vpop.permute.xlu0 %1196
      %1198 = vrot.lane.b32.xlu0 %v1183, 24
      %v1199 = vpop.permute.xlu0 %1198
      %1200 = vrot.lane.b32.xlu0 %v1184, 24
      %v1201 = vpop.permute.xlu0 %1200
      %1202 = vrot.lane.b32.xlu0 %v1185, 24
      %v1203 = vpop.permute.xlu0 %1202
      %1204 = vrot.lane.b32.xlu0 %v1186, 24
      %v1205 = vpop.permute.xlu0 %1204
      %1206 = vrot.lane.b32.xlu0 %v1187, 24
      %v1207 = vpop.permute.xlu0 %1206
      %1208 = vrot.lane.b32.xlu0 %v1188, 24
      %v1209 = vpop.permute.xlu0 %1208
      %1210 = vrot.lane.b32.xlu0 %v1189, 24
      %v1211 = vpop.permute.xlu0 %1210
      %1212 = vrot.lane.b32.xlu0 %v1190, 24
      %v1213 = vpop.permute.xlu0 %1212
      %1214 = vrot.lane.b32.xlu0 %v1191, 24
      %v1215 = vpop.permute.xlu0 %1214
      %1216 = vrot.lane.b32.xlu0 %v1192, 24
      %v1217 = vpop.permute.xlu0 %1216
      %1218 = vrot.lane.b32.xlu0 %v1193, 24
      %v1219 = vpop.permute.xlu0 %1218
      %1220 = vrot.lane.b32.xlu0 %v1194, 24
      %v1221 = vpop.permute.xlu0 %1220
      %1222 = vrot.lane.b32.xlu0 %v1195, 24
      %v1223 = vpop.permute.xlu0 %1222
      %v1238 = vunpack.c.l.b16 %v426
      %v1239 = vunpack.c.l.b16 %v427
      %v1240 = vunpack.c.l.b16 %v428
      %v1241 = vunpack.c.l.b16 %v429
      %v1242 = vunpack.c.l.b16 %v430
      %v1243 = vunpack.c.l.b16 %v431
      %v1244 = vunpack.c.l.b16 %v432
      %v1245 = vunpack.c.l.b16 %v433
      %v1246 = vunpack.c.l.b16 %v434
      %v1247 = vunpack.c.l.b16 %v435
      %v1248 = vunpack.c.l.b16 %v436
      %v1249 = vunpack.c.l.b16 %v437
      %v1250 = vunpack.c.l.b16 %v438
      %v1251 = vunpack.c.l.b16 %v439
      %v1252 = vpack.c.b16 %v1238, %v1154
      %v1253 = vpack.c.b16 %v1239, %v1156
      %v1254 = vpack.c.b16 %v1240, %v1158
      %v1255 = vpack.c.b16 %v1241, %v1160
      %v1256 = vpack.c.b16 %v1242, %v1162
      %v1257 = vpack.c.b16 %v1243, %v1164
      %v1258 = vpack.c.b16 %v1244, %v1166
      %v1259 = vpack.c.b16 %v1245, %v1168
      %v1260 = vpack.c.b16 %v1246, %v1170
      %v1261 = vpack.c.b16 %v1247, %v1172
      %v1262 = vpack.c.b16 %v1248, %v1174
      %v1263 = vpack.c.b16 %v1249, %v1176
      %v1264 = vpack.c.b16 %v1250, %v1178
      %v1265 = vpack.c.b16 %v1251, %v1180
      %v1267 = vshrl.u32 %v1252, 16
      %v1269 = vshll.u32 %v1252, 16
      %v1271 = vrot.slane %v1269, 1
      %v1272 = vor.u32 %v1267, %v1271
      %v1274 = vshrl.u32 %v1253, 16
      %v1276 = vshll.u32 %v1253, 16
      %v1278 = vrot.slane %v1276, 1
      %v1279 = vor.u32 %v1274, %v1278
      %v1281 = vshrl.u32 %v1254, 16
      %v1283 = vshll.u32 %v1254, 16
      %v1285 = vrot.slane %v1283, 1
      %v1286 = vor.u32 %v1281, %v1285
      %v1288 = vshrl.u32 %v1255, 16
      %v1290 = vshll.u32 %v1255, 16
      %v1292 = vrot.slane %v1290, 1
      %v1293 = vor.u32 %v1288, %v1292
      %v1295 = vshrl.u32 %v1256, 16
      %v1297 = vshll.u32 %v1256, 16
      %v1299 = vrot.slane %v1297, 1
      %v1300 = vor.u32 %v1295, %v1299
      %v1302 = vshrl.u32 %v1257, 16
      %v1304 = vshll.u32 %v1257, 16
      %v1306 = vrot.slane %v1304, 1
      %v1307 = vor.u32 %v1302, %v1306
      %v1309 = vshrl.u32 %v1258, 16
      %v1311 = vshll.u32 %v1258, 16
      %v1313 = vrot.slane %v1311, 1
      %v1314 = vor.u32 %v1309, %v1313
      %v1316 = vshrl.u32 %v1259, 16
      %v1318 = vshll.u32 %v1259, 16
      %v1320 = vrot.slane %v1318, 1
      %v1321 = vor.u32 %v1316, %v1320
      %v1323 = vshrl.u32 %v1260, 16
      %v1325 = vshll.u32 %v1260, 16
      %v1327 = vrot.slane %v1325, 1
      %v1328 = vor.u32 %v1323, %v1327
      %v1330 = vshrl.u32 %v1261, 16
      %v1332 = vshll.u32 %v1261, 16
      %v1334 = vrot.slane %v1332, 1
      %v1335 = vor.u32 %v1330, %v1334
      %v1337 = vshrl.u32 %v1262, 16
      %v1339 = vshll.u32 %v1262, 16
      %v1341 = vrot.slane %v1339, 1
      %v1342 = vor.u32 %v1337, %v1341
      %v1344 = vshrl.u32 %v1263, 16
      %v1346 = vshll.u32 %v1263, 16
      %v1348 = vrot.slane %v1346, 1
      %v1349 = vor.u32 %v1344, %v1348
      %v1351 = vshrl.u32 %v1264, 16
      %v1353 = vshll.u32 %v1264, 16
      %v1355 = vrot.slane %v1353, 1
      %v1356 = vor.u32 %v1351, %v1355
      %v1358 = vshrl.u32 %v1265, 16
      %v1360 = vshll.u32 %v1265, 16
      %v1362 = vrot.slane %v1360, 1
      %v1363 = vor.u32 %v1358, %v1362
      %1364 = vrot.lane.b32.xlu0 %v1272, 28
      %v1365 = vpop.permute.xlu0 %1364
      %1366 = vrot.lane.b32.xlu0 %v1279, 28
      %v1367 = vpop.permute.xlu0 %1366
      %1368 = vrot.lane.b32.xlu0 %v1286, 28
      %v1369 = vpop.permute.xlu0 %1368
      %1370 = vrot.lane.b32.xlu0 %v1293, 28
      %v1371 = vpop.permute.xlu0 %1370
      %1372 = vrot.lane.b32.xlu0 %v1300, 28
      %v1373 = vpop.permute.xlu0 %1372
      %1374 = vrot.lane.b32.xlu0 %v1307, 28
      %v1375 = vpop.permute.xlu0 %1374
      %1376 = vrot.lane.b32.xlu0 %v1314, 28
      %v1377 = vpop.permute.xlu0 %1376
      %1378 = vrot.lane.b32.xlu0 %v1321, 28
      %v1379 = vpop.permute.xlu0 %1378
      %1380 = vrot.lane.b32.xlu0 %v1328, 28
      %v1381 = vpop.permute.xlu0 %1380
      %1382 = vrot.lane.b32.xlu0 %v1335, 28
      %v1383 = vpop.permute.xlu0 %1382
      %1384 = vrot.lane.b32.xlu0 %v1342, 28
      %v1385 = vpop.permute.xlu0 %1384
      %1386 = vrot.lane.b32.xlu0 %v1349, 28
      %v1387 = vpop.permute.xlu0 %1386
      %1388 = vrot.lane.b32.xlu0 %v1356, 28
      %v1389 = vpop.permute.xlu0 %1388
      %1390 = vrot.lane.b32.xlu0 %v1363, 28
      %v1391 = vpop.permute.xlu0 %1390
      %v1406 = vunpack.c.l.b16 %v440
      %v1407 = vunpack.c.l.b16 %v441
      %v1408 = vunpack.c.l.b16 %v442
      %v1409 = vunpack.c.l.b16 %v443
      %v1410 = vunpack.c.l.b16 %v444
      %v1411 = vunpack.c.l.b16 %v445
      %v1412 = vunpack.c.l.b16 %v446
      %v1413 = vunpack.c.l.b16 %v447
      %v1414 = vunpack.c.l.b16 %v448
      %v1415 = vunpack.c.l.b16 %v449
      %v1416 = vunpack.c.l.b16 %v450
      %v1417 = vunpack.c.l.b16 %v451
      %v1418 = vunpack.c.l.b16 %v452
      %v1419 = vunpack.c.l.b16 %v453
      %v1420 = vpack.c.b16 %v1238, %v1406
      %v1421 = vpack.c.b16 %v1239, %v1407
      %v1422 = vpack.c.b16 %v1240, %v1408
      %v1423 = vpack.c.b16 %v1241, %v1409
      %v1424 = vpack.c.b16 %v1242, %v1410
      %v1425 = vpack.c.b16 %v1243, %v1411
      %v1426 = vpack.c.b16 %v1244, %v1412
      %v1427 = vpack.c.b16 %v1245, %v1413
      %v1428 = vpack.c.b16 %v1246, %v1414
      %v1429 = vpack.c.b16 %v1247, %v1415
      %v1430 = vpack.c.b16 %v1248, %v1416
      %v1431 = vpack.c.b16 %v1249, %v1417
      %v1432 = vpack.c.b16 %v1250, %v1418
      %v1433 = vpack.c.b16 %v1251, %v1419
      %v1434 = vrot.slane %v1420, 1
      %v1435 = vrot.slane %v1421, 1
      %v1436 = vrot.slane %v1422, 1
      %v1437 = vrot.slane %v1423, 1
      %v1438 = vrot.slane %v1424, 1
      %v1439 = vrot.slane %v1425, 1
      %v1440 = vrot.slane %v1426, 1
      %v1441 = vrot.slane %v1427, 1
      %v1442 = vrot.slane %v1428, 1
      %v1443 = vrot.slane %v1429, 1
      %v1444 = vrot.slane %v1430, 1
      %v1445 = vrot.slane %v1431, 1
      %v1446 = vrot.slane %v1432, 1
      %v1447 = vrot.slane %v1433, 1
      %1448 = vrot.lane.b32.xlu0 %v1434, 32
      %v1449 = vpop.permute.xlu0 %1448
      %1450 = vrot.lane.b32.xlu0 %v1435, 32
      %v1451 = vpop.permute.xlu0 %1450
      %1452 = vrot.lane.b32.xlu0 %v1436, 32
      %v1453 = vpop.permute.xlu0 %1452
      %1454 = vrot.lane.b32.xlu0 %v1437, 32
      %v1455 = vpop.permute.xlu0 %1454
      %1456 = vrot.lane.b32.xlu0 %v1438, 32
      %v1457 = vpop.permute.xlu0 %1456
      %1458 = vrot.lane.b32.xlu0 %v1439, 32
      %v1459 = vpop.permute.xlu0 %1458
      %1460 = vrot.lane.b32.xlu0 %v1440, 32
      %v1461 = vpop.permute.xlu0 %1460
      %1462 = vrot.lane.b32.xlu0 %v1441, 32
      %v1463 = vpop.permute.xlu0 %1462
      %1464 = vrot.lane.b32.xlu0 %v1442, 32
      %v1465 = vpop.permute.xlu0 %1464
      %1466 = vrot.lane.b32.xlu0 %v1443, 32
      %v1467 = vpop.permute.xlu0 %1466
      %1468 = vrot.lane.b32.xlu0 %v1444, 32
      %v1469 = vpop.permute.xlu0 %1468
      %1470 = vrot.lane.b32.xlu0 %v1445, 32
      %v1471 = vpop.permute.xlu0 %1470
      %1472 = vrot.lane.b32.xlu0 %v1446, 32
      %v1473 = vpop.permute.xlu0 %1472
      %1474 = vrot.lane.b32.xlu0 %v1447, 32
      %v1475 = vpop.permute.xlu0 %1474
      %vm1476 = vcmask 31744
      %v1479 = vsel %vm1476, %v510, %v665
      %v1482 = vsel %vm1476, %v511, %v667
      %v1485 = vsel %vm1476, %v512, %v669
      %v1488 = vsel %vm1476, %v513, %v671
      %v1491 = vsel %vm1476, %v514, %v673
      %v1494 = vsel %vm1476, %v515, %v675
      %v1497 = vsel %vm1476, %v516, %v677
      %v1500 = vsel %vm1476, %v517, %v679
      %v1503 = vsel %vm1476, %v518, %v681
      %v1506 = vsel %vm1476, %v519, %v683
      %v1509 = vsel %vm1476, %v520, %v685
      %v1512 = vsel %vm1476, %v521, %v687
      %v1515 = vsel %vm1476, %v522, %v689
      %v1518 = vsel %vm1476, %v523, %v691
      %vm1519 = vcmask 64512
      %v1521 = vsel %vm1519, %v1479, %v749
      %v1523 = vsel %vm1519, %v1482, %v751
      %v1525 = vsel %vm1519, %v1485, %v753
      %v1527 = vsel %vm1519, %v1488, %v755
      %v1529 = vsel %vm1519, %v1491, %v757
      %v1531 = vsel %vm1519, %v1494, %v759
      %v1533 = vsel %vm1519, %v1497, %v761
      %v1535 = vsel %vm1519, %v1500, %v763
      %v1537 = vsel %vm1519, %v1503, %v765
      %v1539 = vsel %vm1519, %v1506, %v767
      %v1541 = vsel %vm1519, %v1509, %v769
      %v1543 = vsel %vm1519, %v1512, %v771
      %v1545 = vsel %vm1519, %v1515, %v773
      %v1547 = vsel %vm1519, %v1518, %v775
      %vm1548 = vcmask 97280
      %v1550 = vsel %vm1548, %v1521, %v847
      %v1552 = vsel %vm1548, %v1523, %v849
      %v1554 = vsel %vm1548, %v1525, %v851
      %v1556 = vsel %vm1548, %v1527, %v853
      %v1558 = vsel %vm1548, %v1529, %v855
      %v1560 = vsel %vm1548, %v1531, %v857
      %v1562 = vsel %vm1548, %v1533, %v859
      %v1564 = vsel %vm1548, %v1535, %v861
      %v1566 = vsel %vm1548, %v1537, %v863
      %v1568 = vsel %vm1548, %v1539, %v865
      %v1570 = vsel %vm1548, %v1541, %v867
      %v1572 = vsel %vm1548, %v1543, %v869
      %v1574 = vsel %vm1548, %v1545, %v871
      %v1576 = vsel %vm1548, %v1547, %v873
      %vm1577 = vcmask 130048
      %v1579 = vsel %vm1577, %v1550, %v1015
      %v1581 = vsel %vm1577, %v1552, %v1017
      %v1583 = vsel %vm1577, %v1554, %v1019
      %v1585 = vsel %vm1577, %v1556, %v1021
      %v1587 = vsel %vm1577, %v1558, %v1023
      %v1589 = vsel %vm1577, %v1560, %v1025
      %v1591 = vsel %vm1577, %v1562, %v1027
      %v1593 = vsel %vm1577, %v1564, %v1029
      %v1595 = vsel %vm1577, %v1566, %v1031
      %v1597 = vsel %vm1577, %v1568, %v1033
      %v1599 = vsel %vm1577, %v1570, %v1035
      %v1601 = vsel %vm1577, %v1572, %v1037
      %v1603 = vsel %vm1577, %v1574, %v1039
      %v1605 = vsel %vm1577, %v1576, %v1041
      %vm1606 = vcmask 162816
      %v1608 = vsel %vm1606, %v1579, %v1099
      %v1610 = vsel %vm1606, %v1581, %v1101
      %v1612 = vsel %vm1606, %v1583, %v1103
      %v1614 = vsel %vm1606, %v1585, %v1105
      %v1616 = vsel %vm1606, %v1587, %v1107
      %v1618 = vsel %vm1606, %v1589, %v1109
      %v1620 = vsel %vm1606, %v1591, %v1111
      %v1622 = vsel %vm1606, %v1593, %v1113
      %v1624 = vsel %vm1606, %v1595, %v1115
      %v1626 = vsel %vm1606, %v1597, %v1117
      %v1628 = vsel %vm1606, %v1599, %v1119
      %v1630 = vsel %vm1606, %v1601, %v1121
      %v1632 = vsel %vm1606, %v1603, %v1123
      %v1634 = vsel %vm1606, %v1605, %v1125
      %vm1635 = vcmask 195584
      %v1637 = vsel %vm1635, %v1608, %v1197
      %v1639 = vsel %vm1635, %v1610, %v1199
      %v1641 = vsel %vm1635, %v1612, %v1201
      %v1643 = vsel %vm1635, %v1614, %v1203
      %v1645 = vsel %vm1635, %v1616, %v1205
      %v1647 = vsel %vm1635, %v1618, %v1207
      %v1649 = vsel %vm1635, %v1620, %v1209
      %v1651 = vsel %vm1635, %v1622, %v1211
      %v1653 = vsel %vm1635, %v1624, %v1213
      %v1655 = vsel %vm1635, %v1626, %v1215
      %v1657 = vsel %vm1635, %v1628, %v1217
      %v1659 = vsel %vm1635, %v1630, %v1219
      %v1661 = vsel %vm1635, %v1632, %v1221
      %v1663 = vsel %vm1635, %v1634, %v1223
      %vm1664 = vcmask 228352
      %v1666 = vsel %vm1664, %v1637, %v1365
      %v1668 = vsel %vm1664, %v1639, %v1367
      %v1670 = vsel %vm1664, %v1641, %v1369
      %v1672 = vsel %vm1664, %v1643, %v1371
      %v1674 = vsel %vm1664, %v1645, %v1373
      %v1676 = vsel %vm1664, %v1647, %v1375
      %v1678 = vsel %vm1664, %v1649, %v1377
      %v1680 = vsel %vm1664, %v1651, %v1379
      %v1682 = vsel %vm1664, %v1653, %v1381
      %v1684 = vsel %vm1664, %v1655, %v1383
      %v1686 = vsel %vm1664, %v1657, %v1385
      %v1688 = vsel %vm1664, %v1659, %v1387
      %v1690 = vsel %vm1664, %v1661, %v1389
      %v1692 = vsel %vm1664, %v1663, %v1391
      %vm1693 = vcmask 261120
      %v1695 = vsel %vm1693, %v1666, %v1449
      %v1697 = vsel %vm1693, %v1668, %v1451
      %v1699 = vsel %vm1693, %v1670, %v1453
      %v1701 = vsel %vm1693, %v1672, %v1455
      %v1703 = vsel %vm1693, %v1674, %v1457
      %v1705 = vsel %vm1693, %v1676, %v1459
      %v1707 = vsel %vm1693, %v1678, %v1461
      %v1709 = vsel %vm1693, %v1680, %v1463
      %v1711 = vsel %vm1693, %v1682, %v1465
      %v1713 = vsel %vm1693, %v1684, %v1467
      %v1715 = vsel %vm1693, %v1686, %v1469
      %v1717 = vsel %vm1693, %v1688, %v1471
      %v1719 = vsel %vm1693, %v1690, %v1473
      %v1721 = vsel %vm1693, %v1692, %v1475
      %v1736 = vcombine.high %v1695, %v1695
      %v1738 = vunpack.c.l.s4 1966171168
      %v1739 = vunpack.c.0.s8 %v1738
      %v1740 = vlaneseq
      %v1741 = vshrl.u32 %v1740, 7
      %v1742 = vsub.s32 %v1739, %v1741
      %v1743 = vrot.slane %v1695, %v1742
      %v1745 = vunpack.c.l.s4 1966171168
      %v1746 = vunpack.c.0.s8 %v1745
      %v1747 = vlaneseq
      %v1748 = vshrl.u32 %v1747, 7
      %v1749 = vsub.s32 %v1746, %v1748
      %v1750 = vrot.slane %v1736, %v1749
      %v1751 = vcombine.high %v1743, %v1743
      %v1752 = vcombine.high %v1750, %v1750
      %v1754 = vunpack.c.l.s4 1966171168
      %v1755 = vunpack.c.0.s8 %v1754
      %v1756 = vlaneseq
      %v1757 = vshrl.u32 %v1756, 7
      %v1758 = vsub.s32 %v1755, %v1757
      %v1759 = vrot.slane %v1743, %v1758
      %v1761 = vunpack.c.l.s4 1966171168
      %v1762 = vunpack.c.0.s8 %v1761
      %v1763 = vlaneseq
      %v1764 = vshrl.u32 %v1763, 7
      %v1765 = vsub.s32 %v1762, %v1764
      %v1766 = vrot.slane %v1750, %v1765
      %v1768 = vunpack.c.l.s4 1966171168
      %v1769 = vunpack.c.0.s8 %v1768
      %v1770 = vlaneseq
      %v1771 = vshrl.u32 %v1770, 7
      %v1772 = vsub.s32 %v1769, %v1771
      %v1773 = vrot.slane %v1751, %v1772
      %v1775 = vunpack.c.l.s4 1966171168
      %v1776 = vunpack.c.0.s8 %v1775
      %v1777 = vlaneseq
      %v1778 = vshrl.u32 %v1777, 7
      %v1779 = vsub.s32 %v1776, %v1778
      %v1780 = vrot.slane %v1752, %v1779
      %v1781 = vcombine.high %v1759, %v1759
      %v1782 = vcombine.high %v1766, %v1766
      %v1783 = vcombine.high %v1773, %v1773
      %v1784 = vcombine.high %v1697, %v1697
      %v1786 = vunpack.c.l.s4 1966171168
      %v1787 = vunpack.c.0.s8 %v1786
      %v1788 = vlaneseq
      %v1789 = vshrl.u32 %v1788, 7
      %v1790 = vsub.s32 %v1787, %v1789
      %v1791 = vrot.slane %v1697, %v1790
      %v1793 = vunpack.c.l.s4 1966171168
      %v1794 = vunpack.c.0.s8 %v1793
      %v1795 = vlaneseq
      %v1796 = vshrl.u32 %v1795, 7
      %v1797 = vsub.s32 %v1794, %v1796
      %v1798 = vrot.slane %v1784, %v1797
      %v1799 = vcombine.high %v1791, %v1791
      %v1800 = vcombine.high %v1798, %v1798
      %v1802 = vunpack.c.l.s4 1966171168
      %v1803 = vunpack.c.0.s8 %v1802
      %v1804 = vlaneseq
      %v1805 = vshrl.u32 %v1804, 7
      %v1806 = vsub.s32 %v1803, %v1805
      %v1807 = vrot.slane %v1791, %v1806
      %v1809 = vunpack.c.l.s4 1966171168
      %v1810 = vunpack.c.0.s8 %v1809
      %v1811 = vlaneseq
      %v1812 = vshrl.u32 %v1811, 7
      %v1813 = vsub.s32 %v1810, %v1812
      %v1814 = vrot.slane %v1798, %v1813
      %v1816 = vunpack.c.l.s4 1966171168
      %v1817 = vunpack.c.0.s8 %v1816
      %v1818 = vlaneseq
      %v1819 = vshrl.u32 %v1818, 7
      %v1820 = vsub.s32 %v1817, %v1819
      %v1821 = vrot.slane %v1799, %v1820
      %v1823 = vunpack.c.l.s4 1966171168
      %v1824 = vunpack.c.0.s8 %v1823
      %v1825 = vlaneseq
      %v1826 = vshrl.u32 %v1825, 7
      %v1827 = vsub.s32 %v1824, %v1826
      %v1828 = vrot.slane %v1800, %v1827
      %v1829 = vcombine.high %v1807, %v1807
      %v1830 = vcombine.high %v1814, %v1814
      %v1831 = vcombine.high %v1821, %v1821
      %v1832 = vcombine.high %v1699, %v1699
      %v1834 = vunpack.c.l.s4 1966171168
      %v1835 = vunpack.c.0.s8 %v1834
      %v1836 = vlaneseq
      %v1837 = vshrl.u32 %v1836, 7
      %v1838 = vsub.s32 %v1835, %v1837
      %v1839 = vrot.slane %v1699, %v1838
      %v1841 = vunpack.c.l.s4 1966171168
      %v1842 = vunpack.c.0.s8 %v1841
      %v1843 = vlaneseq
      %v1844 = vshrl.u32 %v1843, 7
      %v1845 = vsub.s32 %v1842, %v1844
      %v1846 = vrot.slane %v1832, %v1845
      %v1847 = vcombine.high %v1839, %v1839
      %v1848 = vcombine.high %v1846, %v1846
      %v1850 = vunpack.c.l.s4 1966171168
      %v1851 = vunpack.c.0.s8 %v1850
      %v1852 = vlaneseq
      %v1853 = vshrl.u32 %v1852, 7
      %v1854 = vsub.s32 %v1851, %v1853
      %v1855 = vrot.slane %v1839, %v1854
      %v1857 = vunpack.c.l.s4 1966171168
      %v1858 = vunpack.c.0.s8 %v1857
      %v1859 = vlaneseq
      %v1860 = vshrl.u32 %v1859, 7
      %v1861 = vsub.s32 %v1858, %v1860
      %v1862 = vrot.slane %v1846, %v1861
      %v1864 = vunpack.c.l.s4 1966171168
      %v1865 = vunpack.c.0.s8 %v1864
      %v1866 = vlaneseq
      %v1867 = vshrl.u32 %v1866, 7
      %v1868 = vsub.s32 %v1865, %v1867
      %v1869 = vrot.slane %v1847, %v1868
      %v1871 = vunpack.c.l.s4 1966171168
      %v1872 = vunpack.c.0.s8 %v1871
      %v1873 = vlaneseq
      %v1874 = vshrl.u32 %v1873, 7
      %v1875 = vsub.s32 %v1872, %v1874
      %v1876 = vrot.slane %v1848, %v1875
      %v1877 = vcombine.high %v1855, %v1855
      %v1878 = vcombine.high %v1862, %v1862
      %v1879 = vcombine.high %v1869, %v1869
      %v1880 = vcombine.high %v1701, %v1701
      %v1882 = vunpack.c.l.s4 1966171168
      %v1883 = vunpack.c.0.s8 %v1882
      %v1884 = vlaneseq
      %v1885 = vshrl.u32 %v1884, 7
      %v1886 = vsub.s32 %v1883, %v1885
      %v1887 = vrot.slane %v1701, %v1886
      %v1889 = vunpack.c.l.s4 1966171168
      %v1890 = vunpack.c.0.s8 %v1889
      %v1891 = vlaneseq
      %v1892 = vshrl.u32 %v1891, 7
      %v1893 = vsub.s32 %v1890, %v1892
      %v1894 = vrot.slane %v1880, %v1893
      %v1895 = vcombine.high %v1887, %v1887
      %v1896 = vcombine.high %v1894, %v1894
      %v1898 = vunpack.c.l.s4 1966171168
      %v1899 = vunpack.c.0.s8 %v1898
      %v1900 = vlaneseq
      %v1901 = vshrl.u32 %v1900, 7
      %v1902 = vsub.s32 %v1899, %v1901
      %v1903 = vrot.slane %v1887, %v1902
      %v1905 = vunpack.c.l.s4 1966171168
      %v1906 = vunpack.c.0.s8 %v1905
      %v1907 = vlaneseq
      %v1908 = vshrl.u32 %v1907, 7
      %v1909 = vsub.s32 %v1906, %v1908
      %v1910 = vrot.slane %v1894, %v1909
      %v1912 = vunpack.c.l.s4 1966171168
      %v1913 = vunpack.c.0.s8 %v1912
      %v1914 = vlaneseq
      %v1915 = vshrl.u32 %v1914, 7
      %v1916 = vsub.s32 %v1913, %v1915
      %v1917 = vrot.slane %v1895, %v1916
      %v1919 = vunpack.c.l.s4 1966171168
      %v1920 = vunpack.c.0.s8 %v1919
      %v1921 = vlaneseq
      %v1922 = vshrl.u32 %v1921, 7
      %v1923 = vsub.s32 %v1920, %v1922
      %v1924 = vrot.slane %v1896, %v1923
      %v1925 = vcombine.high %v1903, %v1903
      %v1926 = vcombine.high %v1910, %v1910
      %v1927 = vcombine.high %v1917, %v1917
      %v1928 = vcombine.high %v1703, %v1703
      %v1930 = vunpack.c.l.s4 1966171168
      %v1931 = vunpack.c.0.s8 %v1930
      %v1932 = vlaneseq
      %v1933 = vshrl.u32 %v1932, 7
      %v1934 = vsub.s32 %v1931, %v1933
      %v1935 = vrot.slane %v1703, %v1934
      %v1937 = vunpack.c.l.s4 1966171168
      %v1938 = vunpack.c.0.s8 %v1937
      %v1939 = vlaneseq
      %v1940 = vshrl.u32 %v1939, 7
      %v1941 = vsub.s32 %v1938, %v1940
      %v1942 = vrot.slane %v1928, %v1941
      %v1943 = vcombine.high %v1935, %v1935
      %v1944 = vcombine.high %v1942, %v1942
      %v1946 = vunpack.c.l.s4 1966171168
      %v1947 = vunpack.c.0.s8 %v1946
      %v1948 = vlaneseq
      %v1949 = vshrl.u32 %v1948, 7
      %v1950 = vsub.s32 %v1947, %v1949
      %v1951 = vrot.slane %v1935, %v1950
      %v1953 = vunpack.c.l.s4 1966171168
      %v1954 = vunpack.c.0.s8 %v1953
      %v1955 = vlaneseq
      %v1956 = vshrl.u32 %v1955, 7
      %v1957 = vsub.s32 %v1954, %v1956
      %v1958 = vrot.slane %v1942, %v1957
      %v1960 = vunpack.c.l.s4 1966171168
      %v1961 = vunpack.c.0.s8 %v1960
      %v1962 = vlaneseq
      %v1963 = vshrl.u32 %v1962, 7
      %v1964 = vsub.s32 %v1961, %v1963
      %v1965 = vrot.slane %v1943, %v1964
      %v1967 = vunpack.c.l.s4 1966171168
      %v1968 = vunpack.c.0.s8 %v1967
      %v1969 = vlaneseq
      %v1970 = vshrl.u32 %v1969, 7
      %v1971 = vsub.s32 %v1968, %v1970
      %v1972 = vrot.slane %v1944, %v1971
      %v1973 = vcombine.high %v1951, %v1951
      %v1974 = vcombine.high %v1958, %v1958
      %v1975 = vcombine.high %v1965, %v1965
      %v1976 = vcombine.high %v1705, %v1705
      %v1978 = vunpack.c.l.s4 1966171168
      %v1979 = vunpack.c.0.s8 %v1978
      %v1980 = vlaneseq
      %v1981 = vshrl.u32 %v1980, 7
      %v1982 = vsub.s32 %v1979, %v1981
      %v1983 = vrot.slane %v1705, %v1982
      %v1985 = vunpack.c.l.s4 1966171168
      %v1986 = vunpack.c.0.s8 %v1985
      %v1987 = vlaneseq
      %v1988 = vshrl.u32 %v1987, 7
      %v1989 = vsub.s32 %v1986, %v1988
      %v1990 = vrot.slane %v1976, %v1989
      %v1991 = vcombine.high %v1983, %v1983
      %v1992 = vcombine.high %v1990, %v1990
      %v1994 = vunpack.c.l.s4 1966171168
      %v1995 = vunpack.c.0.s8 %v1994
      %v1996 = vlaneseq
      %v1997 = vshrl.u32 %v1996, 7
      %v1998 = vsub.s32 %v1995, %v1997
      %v1999 = vrot.slane %v1983, %v1998
      %v2001 = vunpack.c.l.s4 1966171168
      %v2002 = vunpack.c.0.s8 %v2001
      %v2003 = vlaneseq
      %v2004 = vshrl.u32 %v2003, 7
      %v2005 = vsub.s32 %v2002, %v2004
      %v2006 = vrot.slane %v1990, %v2005
      %v2008 = vunpack.c.l.s4 1966171168
      %v2009 = vunpack.c.0.s8 %v2008
      %v2010 = vlaneseq
      %v2011 = vshrl.u32 %v2010, 7
      %v2012 = vsub.s32 %v2009, %v2011
      %v2013 = vrot.slane %v1991, %v2012
      %v2015 = vunpack.c.l.s4 1966171168
      %v2016 = vunpack.c.0.s8 %v2015
      %v2017 = vlaneseq
      %v2018 = vshrl.u32 %v2017, 7
      %v2019 = vsub.s32 %v2016, %v2018
      %v2020 = vrot.slane %v1992, %v2019
      %v2021 = vcombine.high %v1999, %v1999
      %v2022 = vcombine.high %v2006, %v2006
      %v2023 = vcombine.high %v2013, %v2013
      %v2024 = vcombine.high %v1707, %v1707
      %v2026 = vunpack.c.l.s4 1966171168
      %v2027 = vunpack.c.0.s8 %v2026
      %v2028 = vlaneseq
      %v2029 = vshrl.u32 %v2028, 7
      %v2030 = vsub.s32 %v2027, %v2029
      %v2031 = vrot.slane %v1707, %v2030
      %v2033 = vunpack.c.l.s4 1966171168
      %v2034 = vunpack.c.0.s8 %v2033
      %v2035 = vlaneseq
      %v2036 = vshrl.u32 %v2035, 7
      %v2037 = vsub.s32 %v2034, %v2036
      %v2038 = vrot.slane %v2024, %v2037
      %v2039 = vcombine.high %v2031, %v2031
      %v2040 = vcombine.high %v2038, %v2038
      %v2042 = vunpack.c.l.s4 1966171168
      %v2043 = vunpack.c.0.s8 %v2042
      %v2044 = vlaneseq
      %v2045 = vshrl.u32 %v2044, 7
      %v2046 = vsub.s32 %v2043, %v2045
      %v2047 = vrot.slane %v2031, %v2046
      %v2049 = vunpack.c.l.s4 1966171168
      %v2050 = vunpack.c.0.s8 %v2049
      %v2051 = vlaneseq
      %v2052 = vshrl.u32 %v2051, 7
      %v2053 = vsub.s32 %v2050, %v2052
      %v2054 = vrot.slane %v2038, %v2053
      %v2056 = vunpack.c.l.s4 1966171168
      %v2057 = vunpack.c.0.s8 %v2056
      %v2058 = vlaneseq
      %v2059 = vshrl.u32 %v2058, 7
      %v2060 = vsub.s32 %v2057, %v2059
      %v2061 = vrot.slane %v2039, %v2060
      %v2063 = vunpack.c.l.s4 1966171168
      %v2064 = vunpack.c.0.s8 %v2063
      %v2065 = vlaneseq
      %v2066 = vshrl.u32 %v2065, 7
      %v2067 = vsub.s32 %v2064, %v2066
      %v2068 = vrot.slane %v2040, %v2067
      %v2069 = vcombine.high %v2047, %v2047
      %v2070 = vcombine.high %v2054, %v2054
      %v2071 = vcombine.high %v2061, %v2061
      %v2072 = vcombine.high %v1709, %v1709
      %v2074 = vunpack.c.l.s4 1966171168
      %v2075 = vunpack.c.0.s8 %v2074
      %v2076 = vlaneseq
      %v2077 = vshrl.u32 %v2076, 7
      %v2078 = vsub.s32 %v2075, %v2077
      %v2079 = vrot.slane %v1709, %v2078
      %v2081 = vunpack.c.l.s4 1966171168
      %v2082 = vunpack.c.0.s8 %v2081
      %v2083 = vlaneseq
      %v2084 = vshrl.u32 %v2083, 7
      %v2085 = vsub.s32 %v2082, %v2084
      %v2086 = vrot.slane %v2072, %v2085
      %v2087 = vcombine.high %v2079, %v2079
      %v2088 = vcombine.high %v2086, %v2086
      %v2090 = vunpack.c.l.s4 1966171168
      %v2091 = vunpack.c.0.s8 %v2090
      %v2092 = vlaneseq
      %v2093 = vshrl.u32 %v2092, 7
      %v2094 = vsub.s32 %v2091, %v2093
      %v2095 = vrot.slane %v2079, %v2094
      %v2097 = vunpack.c.l.s4 1966171168
      %v2098 = vunpack.c.0.s8 %v2097
      %v2099 = vlaneseq
      %v2100 = vshrl.u32 %v2099, 7
      %v2101 = vsub.s32 %v2098, %v2100
      %v2102 = vrot.slane %v2086, %v2101
      %v2104 = vunpack.c.l.s4 1966171168
      %v2105 = vunpack.c.0.s8 %v2104
      %v2106 = vlaneseq
      %v2107 = vshrl.u32 %v2106, 7
      %v2108 = vsub.s32 %v2105, %v2107
      %v2109 = vrot.slane %v2087, %v2108
      %v2111 = vunpack.c.l.s4 1966171168
      %v2112 = vunpack.c.0.s8 %v2111
      %v2113 = vlaneseq
      %v2114 = vshrl.u32 %v2113, 7
      %v2115 = vsub.s32 %v2112, %v2114
      %v2116 = vrot.slane %v2088, %v2115
      %v2117 = vcombine.high %v2095, %v2095
      %v2118 = vcombine.high %v2102, %v2102
      %v2119 = vcombine.high %v2109, %v2109
      %v2120 = vcombine.high %v1711, %v1711
      %v2122 = vunpack.c.l.s4 1966171168
      %v2123 = vunpack.c.0.s8 %v2122
      %v2124 = vlaneseq
      %v2125 = vshrl.u32 %v2124, 7
      %v2126 = vsub.s32 %v2123, %v2125
      %v2127 = vrot.slane %v1711, %v2126
      %v2129 = vunpack.c.l.s4 1966171168
      %v2130 = vunpack.c.0.s8 %v2129
      %v2131 = vlaneseq
      %v2132 = vshrl.u32 %v2131, 7
      %v2133 = vsub.s32 %v2130, %v2132
      %v2134 = vrot.slane %v2120, %v2133
      %v2135 = vcombine.high %v2127, %v2127
      %v2136 = vcombine.high %v2134, %v2134
      %v2138 = vunpack.c.l.s4 1966171168
      %v2139 = vunpack.c.0.s8 %v2138
      %v2140 = vlaneseq
      %v2141 = vshrl.u32 %v2140, 7
      %v2142 = vsub.s32 %v2139, %v2141
      %v2143 = vrot.slane %v2127, %v2142
      %v2145 = vunpack.c.l.s4 1966171168
      %v2146 = vunpack.c.0.s8 %v2145
      %v2147 = vlaneseq
      %v2148 = vshrl.u32 %v2147, 7
      %v2149 = vsub.s32 %v2146, %v2148
      %v2150 = vrot.slane %v2134, %v2149
      %v2152 = vunpack.c.l.s4 1966171168
      %v2153 = vunpack.c.0.s8 %v2152
      %v2154 = vlaneseq
      %v2155 = vshrl.u32 %v2154, 7
      %v2156 = vsub.s32 %v2153, %v2155
      %v2157 = vrot.slane %v2135, %v2156
      %v2159 = vunpack.c.l.s4 1966171168
      %v2160 = vunpack.c.0.s8 %v2159
      %v2161 = vlaneseq
      %v2162 = vshrl.u32 %v2161, 7
      %v2163 = vsub.s32 %v2160, %v2162
      %v2164 = vrot.slane %v2136, %v2163
      %v2165 = vcombine.high %v2143, %v2143
      %v2166 = vcombine.high %v2150, %v2150
      %v2167 = vcombine.high %v2157, %v2157
      %v2168 = vcombine.high %v1713, %v1713
      %v2170 = vunpack.c.l.s4 1966171168
      %v2171 = vunpack.c.0.s8 %v2170
      %v2172 = vlaneseq
      %v2173 = vshrl.u32 %v2172, 7
      %v2174 = vsub.s32 %v2171, %v2173
      %v2175 = vrot.slane %v1713, %v2174
      %v2177 = vunpack.c.l.s4 1966171168
      %v2178 = vunpack.c.0.s8 %v2177
      %v2179 = vlaneseq
      %v2180 = vshrl.u32 %v2179, 7
      %v2181 = vsub.s32 %v2178, %v2180
      %v2182 = vrot.slane %v2168, %v2181
      %v2183 = vcombine.high %v2175, %v2175
      %v2184 = vcombine.high %v2182, %v2182
      %v2186 = vunpack.c.l.s4 1966171168
      %v2187 = vunpack.c.0.s8 %v2186
      %v2188 = vlaneseq
      %v2189 = vshrl.u32 %v2188, 7
      %v2190 = vsub.s32 %v2187, %v2189
      %v2191 = vrot.slane %v2175, %v2190
      %v2193 = vunpack.c.l.s4 1966171168
      %v2194 = vunpack.c.0.s8 %v2193
      %v2195 = vlaneseq
      %v2196 = vshrl.u32 %v2195, 7
      %v2197 = vsub.s32 %v2194, %v2196
      %v2198 = vrot.slane %v2182, %v2197
      %v2200 = vunpack.c.l.s4 1966171168
      %v2201 = vunpack.c.0.s8 %v2200
      %v2202 = vlaneseq
      %v2203 = vshrl.u32 %v2202, 7
      %v2204 = vsub.s32 %v2201, %v2203
      %v2205 = vrot.slane %v2183, %v2204
      %v2207 = vunpack.c.l.s4 1966171168
      %v2208 = vunpack.c.0.s8 %v2207
      %v2209 = vlaneseq
      %v2210 = vshrl.u32 %v2209, 7
      %v2211 = vsub.s32 %v2208, %v2210
      %v2212 = vrot.slane %v2184, %v2211
      %v2213 = vcombine.high %v2191, %v2191
      %v2214 = vcombine.high %v2198, %v2198
      %v2215 = vcombine.high %v2205, %v2205
      %v2216 = vcombine.high %v1715, %v1715
      %v2218 = vunpack.c.l.s4 1966171168
      %v2219 = vunpack.c.0.s8 %v2218
      %v2220 = vlaneseq
      %v2221 = vshrl.u32 %v2220, 7
      %v2222 = vsub.s32 %v2219, %v2221
      %v2223 = vrot.slane %v1715, %v2222
      %v2225 = vunpack.c.l.s4 1966171168
      %v2226 = vunpack.c.0.s8 %v2225
      %v2227 = vlaneseq
      %v2228 = vshrl.u32 %v2227, 7
      %v2229 = vsub.s32 %v2226, %v2228
      %v2230 = vrot.slane %v2216, %v2229
      %v2231 = vcombine.high %v2223, %v2223
      %v2232 = vcombine.high %v2230, %v2230
      %v2234 = vunpack.c.l.s4 1966171168
      %v2235 = vunpack.c.0.s8 %v2234
      %v2236 = vlaneseq
      %v2237 = vshrl.u32 %v2236, 7
      %v2238 = vsub.s32 %v2235, %v2237
      %v2239 = vrot.slane %v2223, %v2238
      %v2241 = vunpack.c.l.s4 1966171168
      %v2242 = vunpack.c.0.s8 %v2241
      %v2243 = vlaneseq
      %v2244 = vshrl.u32 %v2243, 7
      %v2245 = vsub.s32 %v2242, %v2244
      %v2246 = vrot.slane %v2230, %v2245
      %v2248 = vunpack.c.l.s4 1966171168
      %v2249 = vunpack.c.0.s8 %v2248
      %v2250 = vlaneseq
      %v2251 = vshrl.u32 %v2250, 7
      %v2252 = vsub.s32 %v2249, %v2251
      %v2253 = vrot.slane %v2231, %v2252
      %v2255 = vunpack.c.l.s4 1966171168
      %v2256 = vunpack.c.0.s8 %v2255
      %v2257 = vlaneseq
      %v2258 = vshrl.u32 %v2257, 7
      %v2259 = vsub.s32 %v2256, %v2258
      %v2260 = vrot.slane %v2232, %v2259
      %v2261 = vcombine.high %v2239, %v2239
      %v2262 = vcombine.high %v2246, %v2246
      %v2263 = vcombine.high %v2253, %v2253
      %v2264 = vcombine.high %v1717, %v1717
      %v2266 = vunpack.c.l.s4 1966171168
      %v2267 = vunpack.c.0.s8 %v2266
      %v2268 = vlaneseq
      %v2269 = vshrl.u32 %v2268, 7
      %v2270 = vsub.s32 %v2267, %v2269
      %v2271 = vrot.slane %v1717, %v2270
      %v2273 = vunpack.c.l.s4 1966171168
      %v2274 = vunpack.c.0.s8 %v2273
      %v2275 = vlaneseq
      %v2276 = vshrl.u32 %v2275, 7
      %v2277 = vsub.s32 %v2274, %v2276
      %v2278 = vrot.slane %v2264, %v2277
      %v2279 = vcombine.high %v2271, %v2271
      %v2280 = vcombine.high %v2278, %v2278
      %v2282 = vunpack.c.l.s4 1966171168
      %v2283 = vunpack.c.0.s8 %v2282
      %v2284 = vlaneseq
      %v2285 = vshrl.u32 %v2284, 7
      %v2286 = vsub.s32 %v2283, %v2285
      %v2287 = vrot.slane %v2271, %v2286
      %v2289 = vunpack.c.l.s4 1966171168
      %v2290 = vunpack.c.0.s8 %v2289
      %v2291 = vlaneseq
      %v2292 = vshrl.u32 %v2291, 7
      %v2293 = vsub.s32 %v2290, %v2292
      %v2294 = vrot.slane %v2278, %v2293
      %v2296 = vunpack.c.l.s4 1966171168
      %v2297 = vunpack.c.0.s8 %v2296
      %v2298 = vlaneseq
      %v2299 = vshrl.u32 %v2298, 7
      %v2300 = vsub.s32 %v2297, %v2299
      %v2301 = vrot.slane %v2279, %v2300
      %v2303 = vunpack.c.l.s4 1966171168
      %v2304 = vunpack.c.0.s8 %v2303
      %v2305 = vlaneseq
      %v2306 = vshrl.u32 %v2305, 7
      %v2307 = vsub.s32 %v2304, %v2306
      %v2308 = vrot.slane %v2280, %v2307
      %v2309 = vcombine.high %v2287, %v2287
      %v2310 = vcombine.high %v2294, %v2294
      %v2311 = vcombine.high %v2301, %v2301
      %v2312 = vcombine.high %v1719, %v1719
      %v2314 = vunpack.c.l.s4 1966171168
      %v2315 = vunpack.c.0.s8 %v2314
      %v2316 = vlaneseq
      %v2317 = vshrl.u32 %v2316, 7
      %v2318 = vsub.s32 %v2315, %v2317
      %v2319 = vrot.slane %v1719, %v2318
      %v2321 = vunpack.c.l.s4 1966171168
      %v2322 = vunpack.c.0.s8 %v2321
      %v2323 = vlaneseq
      %v2324 = vshrl.u32 %v2323, 7
      %v2325 = vsub.s32 %v2322, %v2324
      %v2326 = vrot.slane %v2312, %v2325
      %v2327 = vcombine.high %v2319, %v2319
      %v2328 = vcombine.high %v2326, %v2326
      %v2330 = vunpack.c.l.s4 1966171168
      %v2331 = vunpack.c.0.s8 %v2330
      %v2332 = vlaneseq
      %v2333 = vshrl.u32 %v2332, 7
      %v2334 = vsub.s32 %v2331, %v2333
      %v2335 = vrot.slane %v2319, %v2334
      %v2337 = vunpack.c.l.s4 1966171168
      %v2338 = vunpack.c.0.s8 %v2337
      %v2339 = vlaneseq
      %v2340 = vshrl.u32 %v2339, 7
      %v2341 = vsub.s32 %v2338, %v2340
      %v2342 = vrot.slane %v2326, %v2341
      %v2344 = vunpack.c.l.s4 1966171168
      %v2345 = vunpack.c.0.s8 %v2344
      %v2346 = vlaneseq
      %v2347 = vshrl.u32 %v2346, 7
      %v2348 = vsub.s32 %v2345, %v2347
      %v2349 = vrot.slane %v2327, %v2348
      %v2351 = vunpack.c.l.s4 1966171168
      %v2352 = vunpack.c.0.s8 %v2351
      %v2353 = vlaneseq
      %v2354 = vshrl.u32 %v2353, 7
      %v2355 = vsub.s32 %v2352, %v2354
      %v2356 = vrot.slane %v2328, %v2355
      %v2357 = vcombine.high %v2335, %v2335
      %v2358 = vcombine.high %v2342, %v2342
      %v2359 = vcombine.high %v2349, %v2349
      %v2360 = vcombine.high %v1721, %v1721
      %v2362 = vunpack.c.l.s4 1966171168
      %v2363 = vunpack.c.0.s8 %v2362
      %v2364 = vlaneseq
      %v2365 = vshrl.u32 %v2364, 7
      %v2366 = vsub.s32 %v2363, %v2365
      %v2367 = vrot.slane %v1721, %v2366
      %v2369 = vunpack.c.l.s4 1966171168
      %v2370 = vunpack.c.0.s8 %v2369
      %v2371 = vlaneseq
      %v2372 = vshrl.u32 %v2371, 7
      %v2373 = vsub.s32 %v2370, %v2372
      %v2374 = vrot.slane %v2360, %v2373
      %v2375 = vcombine.high %v2367, %v2367
      %v2376 = vcombine.high %v2374, %v2374
      %v2378 = vunpack.c.l.s4 1966171168
      %v2379 = vunpack.c.0.s8 %v2378
      %v2380 = vlaneseq
      %v2381 = vshrl.u32 %v2380, 7
      %v2382 = vsub.s32 %v2379, %v2381
      %v2383 = vrot.slane %v2367, %v2382
      %v2385 = vunpack.c.l.s4 1966171168
      %v2386 = vunpack.c.0.s8 %v2385
      %v2387 = vlaneseq
      %v2388 = vshrl.u32 %v2387, 7
      %v2389 = vsub.s32 %v2386, %v2388
      %v2390 = vrot.slane %v2374, %v2389
      %v2392 = vunpack.c.l.s4 1966171168
      %v2393 = vunpack.c.0.s8 %v2392
      %v2394 = vlaneseq
      %v2395 = vshrl.u32 %v2394, 7
      %v2396 = vsub.s32 %v2393, %v2395
      %v2397 = vrot.slane %v2375, %v2396
      %v2399 = vunpack.c.l.s4 1966171168
      %v2400 = vunpack.c.0.s8 %v2399
      %v2401 = vlaneseq
      %v2402 = vshrl.u32 %v2401, 7
      %v2403 = vsub.s32 %v2400, %v2402
      %v2404 = vrot.slane %v2376, %v2403
      %v2405 = vcombine.high %v2383, %v2383
      %v2406 = vcombine.high %v2390, %v2390
      %v2407 = vcombine.high %v2397, %v2397
      %v2408 = vld [vmem:[%s1] sm:$0xf]
      %v2409 = vld [vmem:[%s1 + $0x4] sm:$0xf]
      %v2410 = vld [vmem:[%s1 + $0x8] sm:$0xf]
      %v2411 = vld [vmem:[%s1 + $0xc] sm:$0xf]
      %v2412 = vld [vmem:[%s1 + $0x10] sm:$0x3]
      %v2413 = vld [vmem:[%s2] sm:$0x1]
      %v2415 = vlaneseq
      %v2416 = vshrl.u32 %v2415, 7
      %v2417 = vsub.s32 0, %v2416
      %v2418 = vrot.slane %v2413, %v2417
      %v2420 = vcombine.low %v1759, %v1773
      %v2421 = vcombine.low %v1781, %v1783
      %v2422 = vcombine.low %v1766, %v1780
      %v2423 = vcombine.low %v1782, %v1807
      %v2425 = vunpack.c.l.s4 1966171168
      %v2426 = vunpack.c.0.s8 %v2425
      %v2427 = vlaneseq
      %v2428 = vshrl.u32 %v2427, 7
      %v2429 = vsub.s32 %v2426, %v2428
      %v2430 = vrot.slane %v2420, %v2429
      %v2432 = vunpack.c.l.s4 1966171168
      %v2433 = vunpack.c.0.s8 %v2432
      %v2434 = vlaneseq
      %v2435 = vshrl.u32 %v2434, 7
      %v2436 = vsub.s32 %v2433, %v2435
      %v2437 = vrot.slane %v2421, %v2436
      %v2439 = vunpack.c.l.s4 1966171168
      %v2440 = vunpack.c.0.s8 %v2439
      %v2441 = vlaneseq
      %v2442 = vshrl.u32 %v2441, 7
      %v2443 = vsub.s32 %v2440, %v2442
      %v2444 = vrot.slane %v2422, %v2443
      %v2446 = vunpack.c.l.s4 1966171168
      %v2447 = vunpack.c.0.s8 %v2446
      %v2448 = vlaneseq
      %v2449 = vshrl.u32 %v2448, 7
      %v2450 = vsub.s32 %v2447, %v2449
      %v2451 = vrot.slane %v2423, %v2450
      %v2452 = vcombine.low %v2430, %v2437
      %v2453 = vcombine.low %v2444, %v2451
      %v2455 = vunpack.c.l.s4 1966171168
      %v2456 = vunpack.c.0.s8 %v2455
      %v2457 = vlaneseq
      %v2458 = vshrl.u32 %v2457, 7
      %v2459 = vsub.s32 %v2456, %v2458
      %v2460 = vrot.slane %v2452, %v2459
      %v2462 = vunpack.c.l.s4 1966171168
      %v2463 = vunpack.c.0.s8 %v2462
      %v2464 = vlaneseq
      %v2465 = vshrl.u32 %v2464, 7
      %v2466 = vsub.s32 %v2463, %v2465
      %v2467 = vrot.slane %v2453, %v2466
      %v2468 = vcombine.low %v2460, %v2467
      %v2469 = vcombine.low %v1821, %v1829
      %v2470 = vcombine.low %v1831, %v1814
      %v2471 = vcombine.low %v1828, %v1830
      %v2472 = vcombine.low %v1855, %v1869
      %v2474 = vunpack.c.l.s4 1966171168
      %v2475 = vunpack.c.0.s8 %v2474
      %v2476 = vlaneseq
      %v2477 = vshrl.u32 %v2476, 7
      %v2478 = vsub.s32 %v2475, %v2477
      %v2479 = vrot.slane %v2469, %v2478
      %v2481 = vunpack.c.l.s4 1966171168
      %v2482 = vunpack.c.0.s8 %v2481
      %v2483 = vlaneseq
      %v2484 = vshrl.u32 %v2483, 7
      %v2485 = vsub.s32 %v2482, %v2484
      %v2486 = vrot.slane %v2470, %v2485
      %v2488 = vunpack.c.l.s4 1966171168
      %v2489 = vunpack.c.0.s8 %v2488
      %v2490 = vlaneseq
      %v2491 = vshrl.u32 %v2490, 7
      %v2492 = vsub.s32 %v2489, %v2491
      %v2493 = vrot.slane %v2471, %v2492
      %v2495 = vunpack.c.l.s4 1966171168
      %v2496 = vunpack.c.0.s8 %v2495
      %v2497 = vlaneseq
      %v2498 = vshrl.u32 %v2497, 7
      %v2499 = vsub.s32 %v2496, %v2498
      %v2500 = vrot.slane %v2472, %v2499
      %v2501 = vcombine.low %v2479, %v2486
      %v2502 = vcombine.low %v2493, %v2500
      %v2504 = vunpack.c.l.s4 1966171168
      %v2505 = vunpack.c.0.s8 %v2504
      %v2506 = vlaneseq
      %v2507 = vshrl.u32 %v2506, 7
      %v2508 = vsub.s32 %v2505, %v2507
      %v2509 = vrot.slane %v2501, %v2508
      %v2511 = vunpack.c.l.s4 1966171168
      %v2512 = vunpack.c.0.s8 %v2511
      %v2513 = vlaneseq
      %v2514 = vshrl.u32 %v2513, 7
      %v2515 = vsub.s32 %v2512, %v2514
      %v2516 = vrot.slane %v2502, %v2515
      %v2517 = vcombine.low %v2509, %v2516
      %v2518 = vcombine.low %v1877, %v1879
      %v2519 = vcombine.low %v1862, %v1876
      %v2520 = vcombine.low %v1878, %v1903
      %v2521 = vcombine.low %v1917, %v1925
      %v2523 = vunpack.c.l.s4 1966171168
      %v2524 = vunpack.c.0.s8 %v2523
      %v2525 = vlaneseq
      %v2526 = vshrl.u32 %v2525, 7
      %v2527 = vsub.s32 %v2524, %v2526
      %v2528 = vrot.slane %v2518, %v2527
      %v2530 = vunpack.c.l.s4 1966171168
      %v2531 = vunpack.c.0.s8 %v2530
      %v2532 = vlaneseq
      %v2533 = vshrl.u32 %v2532, 7
      %v2534 = vsub.s32 %v2531, %v2533
      %v2535 = vrot.slane %v2519, %v2534
      %v2537 = vunpack.c.l.s4 1966171168
      %v2538 = vunpack.c.0.s8 %v2537
      %v2539 = vlaneseq
      %v2540 = vshrl.u32 %v2539, 7
      %v2541 = vsub.s32 %v2538, %v2540
      %v2542 = vrot.slane %v2520, %v2541
      %v2544 = vunpack.c.l.s4 1966171168
      %v2545 = vunpack.c.0.s8 %v2544
      %v2546 = vlaneseq
      %v2547 = vshrl.u32 %v2546, 7
      %v2548 = vsub.s32 %v2545, %v2547
      %v2549 = vrot.slane %v2521, %v2548
      %v2550 = vcombine.low %v2528, %v2535
      %v2551 = vcombine.low %v2542, %v2549
      %v2553 = vunpack.c.l.s4 1966171168
      %v2554 = vunpack.c.0.s8 %v2553
      %v2555 = vlaneseq
      %v2556 = vshrl.u32 %v2555, 7
      %v2557 = vsub.s32 %v2554, %v2556
      %v2558 = vrot.slane %v2550, %v2557
      %v2560 = vunpack.c.l.s4 1966171168
      %v2561 = vunpack.c.0.s8 %v2560
      %v2562 = vlaneseq
      %v2563 = vshrl.u32 %v2562, 7
      %v2564 = vsub.s32 %v2561, %v2563
      %v2565 = vrot.slane %v2551, %v2564
      %v2566 = vcombine.low %v2558, %v2565
      %v2567 = vcombine.low %v1927, %v1910
      %v2568 = vcombine.low %v1924, %v1926
      %v2569 = vcombine.low %v1951, %v1965
      %v2570 = vcombine.low %v1973, %v1975
      %v2572 = vunpack.c.l.s4 1966171168
      %v2573 = vunpack.c.0.s8 %v2572
      %v2574 = vlaneseq
      %v2575 = vshrl.u32 %v2574, 7
      %v2576 = vsub.s32 %v2573, %v2575
      %v2577 = vrot.slane %v2567, %v2576
      %v2579 = vunpack.c.l.s4 1966171168
      %v2580 = vunpack.c.0.s8 %v2579
      %v2581 = vlaneseq
      %v2582 = vshrl.u32 %v2581, 7
      %v2583 = vsub.s32 %v2580, %v2582
      %v2584 = vrot.slane %v2568, %v2583
      %v2586 = vunpack.c.l.s4 1966171168
      %v2587 = vunpack.c.0.s8 %v2586
      %v2588 = vlaneseq
      %v2589 = vshrl.u32 %v2588, 7
      %v2590 = vsub.s32 %v2587, %v2589
      %v2591 = vrot.slane %v2569, %v2590
      %v2593 = vunpack.c.l.s4 1966171168
      %v2594 = vunpack.c.0.s8 %v2593
      %v2595 = vlaneseq
      %v2596 = vshrl.u32 %v2595, 7
      %v2597 = vsub.s32 %v2594, %v2596
      %v2598 = vrot.slane %v2570, %v2597
      %v2599 = vcombine.low %v2577, %v2584
      %v2600 = vcombine.low %v2591, %v2598
      %v2602 = vunpack.c.l.s4 1966171168
      %v2603 = vunpack.c.0.s8 %v2602
      %v2604 = vlaneseq
      %v2605 = vshrl.u32 %v2604, 7
      %v2606 = vsub.s32 %v2603, %v2605
      %v2607 = vrot.slane %v2599, %v2606
      %v2609 = vunpack.c.l.s4 1966171168
      %v2610 = vunpack.c.0.s8 %v2609
      %v2611 = vlaneseq
      %v2612 = vshrl.u32 %v2611, 7
      %v2613 = vsub.s32 %v2610, %v2612
      %v2614 = vrot.slane %v2600, %v2613
      %v2615 = vcombine.low %v2607, %v2614
      %v2616 = vcombine.low %v1958, %v1972
      %v2617 = vcombine.low %v1974, %v1999
      %v2618 = vcombine.low %v2013, %v2021
      %v2619 = vcombine.low %v2023, %v2006
      %v2621 = vunpack.c.l.s4 1966171168
      %v2622 = vunpack.c.0.s8 %v2621
      %v2623 = vlaneseq
      %v2624 = vshrl.u32 %v2623, 7
      %v2625 = vsub.s32 %v2622, %v2624
      %v2626 = vrot.slane %v2616, %v2625
      %v2628 = vunpack.c.l.s4 1966171168
      %v2629 = vunpack.c.0.s8 %v2628
      %v2630 = vlaneseq
      %v2631 = vshrl.u32 %v2630, 7
      %v2632 = vsub.s32 %v2629, %v2631
      %v2633 = vrot.slane %v2617, %v2632
      %v2635 = vunpack.c.l.s4 1966171168
      %v2636 = vunpack.c.0.s8 %v2635
      %v2637 = vlaneseq
      %v2638 = vshrl.u32 %v2637, 7
      %v2639 = vsub.s32 %v2636, %v2638
      %v2640 = vrot.slane %v2618, %v2639
      %v2642 = vunpack.c.l.s4 1966171168
      %v2643 = vunpack.c.0.s8 %v2642
      %v2644 = vlaneseq
      %v2645 = vshrl.u32 %v2644, 7
      %v2646 = vsub.s32 %v2643, %v2645
      %v2647 = vrot.slane %v2619, %v2646
      %v2648 = vcombine.low %v2626, %v2633
      %v2649 = vcombine.low %v2640, %v2647
      %v2651 = vunpack.c.l.s4 1966171168
      %v2652 = vunpack.c.0.s8 %v2651
      %v2653 = vlaneseq
      %v2654 = vshrl.u32 %v2653, 7
      %v2655 = vsub.s32 %v2652, %v2654
      %v2656 = vrot.slane %v2648, %v2655
      %v2658 = vunpack.c.l.s4 1966171168
      %v2659 = vunpack.c.0.s8 %v2658
      %v2660 = vlaneseq
      %v2661 = vshrl.u32 %v2660, 7
      %v2662 = vsub.s32 %v2659, %v2661
      %v2663 = vrot.slane %v2649, %v2662
      %v2664 = vcombine.low %v2656, %v2663
      %v2665 = vcombine.low %v2020, %v2022
      %v2666 = vcombine.low %v2047, %v2061
      %v2667 = vcombine.low %v2069, %v2071
      %v2668 = vcombine.low %v2054, %v2068
      %v2670 = vunpack.c.l.s4 1966171168
      %v2671 = vunpack.c.0.s8 %v2670
      %v2672 = vlaneseq
      %v2673 = vshrl.u32 %v2672, 7
      %v2674 = vsub.s32 %v2671, %v2673
      %v2675 = vrot.slane %v2665, %v2674
      %v2677 = vunpack.c.l.s4 1966171168
      %v2678 = vunpack.c.0.s8 %v2677
      %v2679 = vlaneseq
      %v2680 = vshrl.u32 %v2679, 7
      %v2681 = vsub.s32 %v2678, %v2680
      %v2682 = vrot.slane %v2666, %v2681
      %v2684 = vunpack.c.l.s4 1966171168
      %v2685 = vunpack.c.0.s8 %v2684
      %v2686 = vlaneseq
      %v2687 = vshrl.u32 %v2686, 7
      %v2688 = vsub.s32 %v2685, %v2687
      %v2689 = vrot.slane %v2667, %v2688
      %v2691 = vunpack.c.l.s4 1966171168
      %v2692 = vunpack.c.0.s8 %v2691
      %v2693 = vlaneseq
      %v2694 = vshrl.u32 %v2693, 7
      %v2695 = vsub.s32 %v2692, %v2694
      %v2696 = vrot.slane %v2668, %v2695
      %v2697 = vcombine.low %v2675, %v2682
      %v2698 = vcombine.low %v2689, %v2696
      %v2700 = vunpack.c.l.s4 1966171168
      %v2701 = vunpack.c.0.s8 %v2700
      %v2702 = vlaneseq
      %v2703 = vshrl.u32 %v2702, 7
      %v2704 = vsub.s32 %v2701, %v2703
      %v2705 = vrot.slane %v2697, %v2704
      %v2707 = vunpack.c.l.s4 1966171168
      %v2708 = vunpack.c.0.s8 %v2707
      %v2709 = vlaneseq
      %v2710 = vshrl.u32 %v2709, 7
      %v2711 = vsub.s32 %v2708, %v2710
      %v2712 = vrot.slane %v2698, %v2711
      %v2713 = vcombine.low %v2705, %v2712
      %v2714 = vcombine.low %v2070, %v2095
      %v2715 = vcombine.low %v2109, %v2117
      %v2716 = vcombine.low %v2119, %v2102
      %v2717 = vcombine.low %v2116, %v2118
      %v2719 = vunpack.c.l.s4 1966171168
      %v2720 = vunpack.c.0.s8 %v2719
      %v2721 = vlaneseq
      %v2722 = vshrl.u32 %v2721, 7
      %v2723 = vsub.s32 %v2720, %v2722
      %v2724 = vrot.slane %v2714, %v2723
      %v2726 = vunpack.c.l.s4 1966171168
      %v2727 = vunpack.c.0.s8 %v2726
      %v2728 = vlaneseq
      %v2729 = vshrl.u32 %v2728, 7
      %v2730 = vsub.s32 %v2727, %v2729
      %v2731 = vrot.slane %v2715, %v2730
      %v2733 = vunpack.c.l.s4 1966171168
      %v2734 = vunpack.c.0.s8 %v2733
      %v2735 = vlaneseq
      %v2736 = vshrl.u32 %v2735, 7
      %v2737 = vsub.s32 %v2734, %v2736
      %v2738 = vrot.slane %v2716, %v2737
      %v2740 = vunpack.c.l.s4 1966171168
      %v2741 = vunpack.c.0.s8 %v2740
      %v2742 = vlaneseq
      %v2743 = vshrl.u32 %v2742, 7
      %v2744 = vsub.s32 %v2741, %v2743
      %v2745 = vrot.slane %v2717, %v2744
      %v2746 = vcombine.low %v2724, %v2731
      %v2747 = vcombine.low %v2738, %v2745
      %v2749 = vunpack.c.l.s4 1966171168
      %v2750 = vunpack.c.0.s8 %v2749
      %v2751 = vlaneseq
      %v2752 = vshrl.u32 %v2751, 7
      %v2753 = vsub.s32 %v2750, %v2752
      %v2754 = vrot.slane %v2746, %v2753
      %v2756 = vunpack.c.l.s4 1966171168
      %v2757 = vunpack.c.0.s8 %v2756
      %v2758 = vlaneseq
      %v2759 = vshrl.u32 %v2758, 7
      %v2760 = vsub.s32 %v2757, %v2759
      %v2761 = vrot.slane %v2747, %v2760
      %v2762 = vcombine.low %v2754, %v2761
      %v2763 = vcombine.low %v2143, %v2157
      %v2764 = vcombine.low %v2165, %v2167
      %v2765 = vcombine.low %v2150, %v2164
      %v2766 = vcombine.low %v2166, %v2191
      %v2768 = vunpack.c.l.s4 1966171168
      %v2769 = vunpack.c.0.s8 %v2768
      %v2770 = vlaneseq
      %v2771 = vshrl.u32 %v2770, 7
      %v2772 = vsub.s32 %v2769, %v2771
      %v2773 = vrot.slane %v2763, %v2772
      %v2775 = vunpack.c.l.s4 1966171168
      %v2776 = vunpack.c.0.s8 %v2775
      %v2777 = vlaneseq
      %v2778 = vshrl.u32 %v2777, 7
      %v2779 = vsub.s32 %v2776, %v2778
      %v2780 = vrot.slane %v2764, %v2779
      %v2782 = vunpack.c.l.s4 1966171168
      %v2783 = vunpack.c.0.s8 %v2782
      %v2784 = vlaneseq
      %v2785 = vshrl.u32 %v2784, 7
      %v2786 = vsub.s32 %v2783, %v2785
      %v2787 = vrot.slane %v2765, %v2786
      %v2789 = vunpack.c.l.s4 1966171168
      %v2790 = vunpack.c.0.s8 %v2789
      %v2791 = vlaneseq
      %v2792 = vshrl.u32 %v2791, 7
      %v2793 = vsub.s32 %v2790, %v2792
      %v2794 = vrot.slane %v2766, %v2793
      %v2795 = vcombine.low %v2773, %v2780
      %v2796 = vcombine.low %v2787, %v2794
      %v2798 = vunpack.c.l.s4 1966171168
      %v2799 = vunpack.c.0.s8 %v2798
      %v2800 = vlaneseq
      %v2801 = vshrl.u32 %v2800, 7
      %v2802 = vsub.s32 %v2799, %v2801
      %v2803 = vrot.slane %v2795, %v2802
      %v2805 = vunpack.c.l.s4 1966171168
      %v2806 = vunpack.c.0.s8 %v2805
      %v2807 = vlaneseq
      %v2808 = vshrl.u32 %v2807, 7
      %v2809 = vsub.s32 %v2806, %v2808
      %v2810 = vrot.slane %v2796, %v2809
      %v2811 = vcombine.low %v2803, %v2810
      %v2812 = vcombine.low %v2205, %v2213
      %v2813 = vcombine.low %v2215, %v2198
      %v2814 = vcombine.low %v2212, %v2214
      %v2815 = vcombine.low %v2239, %v2253
      %v2817 = vunpack.c.l.s4 1966171168
      %v2818 = vunpack.c.0.s8 %v2817
      %v2819 = vlaneseq
      %v2820 = vshrl.u32 %v2819, 7
      %v2821 = vsub.s32 %v2818, %v2820
      %v2822 = vrot.slane %v2812, %v2821
      %v2824 = vunpack.c.l.s4 1966171168
      %v2825 = vunpack.c.0.s8 %v2824
      %v2826 = vlaneseq
      %v2827 = vshrl.u32 %v2826, 7
      %v2828 = vsub.s32 %v2825, %v2827
      %v2829 = vrot.slane %v2813, %v2828
      %v2831 = vunpack.c.l.s4 1966171168
      %v2832 = vunpack.c.0.s8 %v2831
      %v2833 = vlaneseq
      %v2834 = vshrl.u32 %v2833, 7
      %v2835 = vsub.s32 %v2832, %v2834
      %v2836 = vrot.slane %v2814, %v2835
      %v2838 = vunpack.c.l.s4 1966171168
      %v2839 = vunpack.c.0.s8 %v2838
      %v2840 = vlaneseq
      %v2841 = vshrl.u32 %v2840, 7
      %v2842 = vsub.s32 %v2839, %v2841
      %v2843 = vrot.slane %v2815, %v2842
      %v2844 = vcombine.low %v2822, %v2829
      %v2845 = vcombine.low %v2836, %v2843
      %v2847 = vunpack.c.l.s4 1966171168
      %v2848 = vunpack.c.0.s8 %v2847
      %v2849 = vlaneseq
      %v2850 = vshrl.u32 %v2849, 7
      %v2851 = vsub.s32 %v2848, %v2850
      %v2852 = vrot.slane %v2844, %v2851
      %v2854 = vunpack.c.l.s4 1966171168
      %v2855 = vunpack.c.0.s8 %v2854
      %v2856 = vlaneseq
      %v2857 = vshrl.u32 %v2856, 7
      %v2858 = vsub.s32 %v2855, %v2857
      %v2859 = vrot.slane %v2845, %v2858
      %v2860 = vcombine.low %v2852, %v2859
      %v2861 = vcombine.low %v2261, %v2263
      %v2862 = vcombine.low %v2246, %v2260
      %v2863 = vcombine.low %v2262, %v2287
      %v2864 = vcombine.low %v2301, %v2309
      %v2866 = vunpack.c.l.s4 1966171168
      %v2867 = vunpack.c.0.s8 %v2866
      %v2868 = vlaneseq
      %v2869 = vshrl.u32 %v2868, 7
      %v2870 = vsub.s32 %v2867, %v2869
      %v2871 = vrot.slane %v2861, %v2870
      %v2873 = vunpack.c.l.s4 1966171168
      %v2874 = vunpack.c.0.s8 %v2873
      %v2875 = vlaneseq
      %v2876 = vshrl.u32 %v2875, 7
      %v2877 = vsub.s32 %v2874, %v2876
      %v2878 = vrot.slane %v2862, %v2877
      %v2880 = vunpack.c.l.s4 1966171168
      %v2881 = vunpack.c.0.s8 %v2880
      %v2882 = vlaneseq
      %v2883 = vshrl.u32 %v2882, 7
      %v2884 = vsub.s32 %v2881, %v2883
      %v2885 = vrot.slane %v2863, %v2884
      %v2887 = vunpack.c.l.s4 1966171168
      %v2888 = vunpack.c.0.s8 %v2887
      %v2889 = vlaneseq
      %v2890 = vshrl.u32 %v2889, 7
      %v2891 = vsub.s32 %v2888, %v2890
      %v2892 = vrot.slane %v2864, %v2891
      %v2893 = vcombine.low %v2871, %v2878
      %v2894 = vcombine.low %v2885, %v2892
      %v2896 = vunpack.c.l.s4 1966171168
      %v2897 = vunpack.c.0.s8 %v2896
      %v2898 = vlaneseq
      %v2899 = vshrl.u32 %v2898, 7
      %v2900 = vsub.s32 %v2897, %v2899
      %v2901 = vrot.slane %v2893, %v2900
      %v2903 = vunpack.c.l.s4 1966171168
      %v2904 = vunpack.c.0.s8 %v2903
      %v2905 = vlaneseq
      %v2906 = vshrl.u32 %v2905, 7
      %v2907 = vsub.s32 %v2904, %v2906
      %v2908 = vrot.slane %v2894, %v2907
      %v2909 = vcombine.low %v2901, %v2908
      %v2910 = vcombine.low %v2311, %v2294
      %v2911 = vcombine.low %v2308, %v2310
      %v2912 = vcombine.low %v2335, %v2349
      %v2913 = vcombine.low %v2357, %v2359
      %v2915 = vunpack.c.l.s4 1966171168
      %v2916 = vunpack.c.0.s8 %v2915
      %v2917 = vlaneseq
      %v2918 = vshrl.u32 %v2917, 7
      %v2919 = vsub.s32 %v2916, %v2918
      %v2920 = vrot.slane %v2910, %v2919
      %v2922 = vunpack.c.l.s4 1966171168
      %v2923 = vunpack.c.0.s8 %v2922
      %v2924 = vlaneseq
      %v2925 = vshrl.u32 %v2924, 7
      %v2926 = vsub.s32 %v2923, %v2925
      %v2927 = vrot.slane %v2911, %v2926
      %v2929 = vunpack.c.l.s4 1966171168
      %v2930 = vunpack.c.0.s8 %v2929
      %v2931 = vlaneseq
      %v2932 = vshrl.u32 %v2931, 7
      %v2933 = vsub.s32 %v2930, %v2932
      %v2934 = vrot.slane %v2912, %v2933
      %v2936 = vunpack.c.l.s4 1966171168
      %v2937 = vunpack.c.0.s8 %v2936
      %v2938 = vlaneseq
      %v2939 = vshrl.u32 %v2938, 7
      %v2940 = vsub.s32 %v2937, %v2939
      %v2941 = vrot.slane %v2913, %v2940
      %v2942 = vcombine.low %v2920, %v2927
      %v2943 = vcombine.low %v2934, %v2941
      %v2945 = vunpack.c.l.s4 1966171168
      %v2946 = vunpack.c.0.s8 %v2945
      %v2947 = vlaneseq
      %v2948 = vshrl.u32 %v2947, 7
      %v2949 = vsub.s32 %v2946, %v2948
      %v2950 = vrot.slane %v2942, %v2949
      %v2952 = vunpack.c.l.s4 1966171168
      %v2953 = vunpack.c.0.s8 %v2952
      %v2954 = vlaneseq
      %v2955 = vshrl.u32 %v2954, 7
      %v2956 = vsub.s32 %v2953, %v2955
      %v2957 = vrot.slane %v2943, %v2956
      %v2958 = vcombine.low %v2950, %v2957
      %v2959 = vcombine.low %v2342, %v2356
      %v2960 = vcombine.low %v2358, %v2383
      %v2961 = vcombine.low %v2397, %v2405
      %v2962 = vcombine.low %v2407, %v2390
      %v2964 = vunpack.c.l.s4 1966171168
      %v2965 = vunpack.c.0.s8 %v2964
      %v2966 = vlaneseq
      %v2967 = vshrl.u32 %v2966, 7
      %v2968 = vsub.s32 %v2965, %v2967
      %v2969 = vrot.slane %v2959, %v2968
      %v2971 = vunpack.c.l.s4 1966171168
      %v2972 = vunpack.c.0.s8 %v2971
      %v2973 = vlaneseq
      %v2974 = vshrl.u32 %v2973, 7
      %v2975 = vsub.s32 %v2972, %v2974
      %v2976 = vrot.slane %v2960, %v2975
      %v2978 = vunpack.c.l.s4 1966171168
      %v2979 = vunpack.c.0.s8 %v2978
      %v2980 = vlaneseq
      %v2981 = vshrl.u32 %v2980, 7
      %v2982 = vsub.s32 %v2979, %v2981
      %v2983 = vrot.slane %v2961, %v2982
      %v2985 = vunpack.c.l.s4 1966171168
      %v2986 = vunpack.c.0.s8 %v2985
      %v2987 = vlaneseq
      %v2988 = vshrl.u32 %v2987, 7
      %v2989 = vsub.s32 %v2986, %v2988
      %v2990 = vrot.slane %v2962, %v2989
      %v2991 = vcombine.low %v2969, %v2976
      %v2992 = vcombine.low %v2983, %v2990
      %v2994 = vunpack.c.l.s4 1966171168
      %v2995 = vunpack.c.0.s8 %v2994
      %v2996 = vlaneseq
      %v2997 = vshrl.u32 %v2996, 7
      %v2998 = vsub.s32 %v2995, %v2997
      %v2999 = vrot.slane %v2991, %v2998
      %v3001 = vunpack.c.l.s4 1966171168
      %v3002 = vunpack.c.0.s8 %v3001
      %v3003 = vlaneseq
      %v3004 = vshrl.u32 %v3003, 7
      %v3005 = vsub.s32 %v3002, %v3004
      %v3006 = vrot.slane %v2992, %v3005
      %v3007 = vcombine.low %v2999, %v3006
      %v3008 = vcombine.low %v2404, %v2406
      %v3010 = vunpack.c.l.s4 1966171168
      %v3011 = vunpack.c.0.s8 %v3010
      %v3012 = vlaneseq
      %v3013 = vshrl.u32 %v3012, 7
      %v3014 = vsub.s32 %v3011, %v3013
      %v3015 = vrot.slane %v3008, %v3014
      %v3017 = vunpack.c.l.s4 1966171168
      %v3018 = vunpack.c.0.s8 %v3017
      %v3019 = vlaneseq
      %v3020 = vshrl.u32 %v3019, 7
      %v3021 = vsub.s32 %v3018, %v3020
      %v3022 = vrot.slane %v3015, %v3021
      %v3028 = vunpack.c.l.b16 %v2408
      %v3029 = vunpack.c.l.b16 %v2409
      %v3030 = vunpack.c.l.b16 %v2410
      %v3031 = vunpack.c.l.b16 %v2411
      %v3032 = vunpack.c.l.b16 %v2412
      %v3033 = vpack.c.b16 %v3029, %v3028
      %v3034 = vpack.c.b16 %v3031, %v3030
      %v3035 = vpack.c.b16 %v3032, %v3032
      %vm3038 = vcmask 293888
      %v3040 = vsel %vm3038, %v2468, 0
      %v3043 = vsel %vm3038, %v2517, 0
      %v3046 = vsel %vm3038, %v2566, 0
      %v3049 = vsel %vm3038, %v2615, 0
      %v3052 = vsel %vm3038, %v2664, 0
      %v3055 = vsel %vm3038, %v2713, 0
      %v3058 = vsel %vm3038, %v2762, 0
      %v3061 = vsel %vm3038, %v2811, 0
      %v3064 = vsel %vm3038, %v2860, 0
      %v3067 = vsel %vm3038, %v2909, 0
      %v3070 = vsel %vm3038, %v2958, 0
      %v3073 = vsel %vm3038, %v3007, 0
      %v3076 = vsel %vm3038, %v3022, 0
      %vm3078 = vcmask 1041408
      %v3080 = vsel %vm3078, %v3035, 0
      %3082 = vmatprep.subr.bf16.mxu0 0
      %3083 = vmatpush1.bf16.msra.mxu0 0
      %3084 = vmatprep.subr.bf16.mxu0 0
      %3085 = vmatpush1.bf16.msra.mxu0 0
      %3086 = vmatprep.subr.bf16.mxu0 0
      %3087 = vmatpush1.bf16.msra.mxu0 0
      %3088 = vmatprep.subr.bf16.mxu0 0
      %3089 = vmatpush1.bf16.msra.mxu0 0
      %3090 = vmatprep.subr.bf16.mxu0 0
      %3091 = vmatpush1.bf16.msra.mxu0 0
      %3092 = vmatprep.subr.bf16.mxu0 0
      %3093 = vmatpush1.bf16.msra.mxu0 %v3080
      %3094 = vmatprep.subr.bf16.mxu0 0
      %3095 = vmatpush1.bf16.msra.mxu0 %v3034
      %3096 = vmatprep.subr.bf16.mxu0 0
      %3097 = vmatpush1.bf16.msra.mxu0 %v3033
      %3098 = vmatprep.subr.bf16.mxu0 0
      %3099 = vmatpush2.bf16.msra.mxu0 0
      %3100 = vmatprep.subr.bf16.mxu0 0
      %3101 = vmatpush2.bf16.msra.mxu0 0
      %3102 = vmatprep.subr.bf16.mxu0 0
      %3103 = vmatpush2.bf16.msra.mxu0 0
      %3104 = vmatprep.subr.bf16.mxu0 0
      %3105 = vmatpush2.bf16.msra.mxu0 0
      %3106 = vmatprep.subr.bf16.mxu0 0
      %3107 = vmatpush2.bf16.msra.mxu0 0
      %3108 = vmatprep.subr.bf16.mxu0 0
      %3109 = vmatpush2.bf16.msra.mxu0 0
      %3110 = vmatprep.subr.bf16.mxu0 0
      %3111 = vmatpush2.bf16.msra.mxu0 0
      %3112 = vmatprep.subr.bf16.mxu0 0
      %3113 = vmatpush2.bf16.msra.mxu0 0
      %3114 = vmatprep.mubr.bf16.mxu0 0
      %3115 = vmatmul.mubr.bf16.gmra.mxu0 %v3040
      %v3116 = vpop.f32.mrf.mxu0
      %v3117 = vadd.f32 %v2418, %v3116
      %v3118 = vpop.f32.mrf.mxu0
      %v3119 = vpop.f32.mrf.mxu0
      %v3120 = vadd.f32 %v2418, %v3119
      %v3121 = vpop.f32.mrf.mxu0
      %3122 = vmatprep.mubr.bf16.mxu0 0
      %3123 = vmatmul.mubr.bf16.gmra.mxu0 %v3043
      %v3124 = vpop.f32.mrf.mxu0
      %v3125 = vadd.f32 %v2418, %v3124
      %v3126 = vpop.f32.mrf.mxu0
      %v3127 = vpop.f32.mrf.mxu0
      %v3128 = vadd.f32 %v2418, %v3127
      %v3129 = vpop.f32.mrf.mxu0
      %3130 = vmatprep.mubr.bf16.mxu0 0
      %3131 = vmatmul.mubr.bf16.gmra.mxu0 %v3046
      %v3132 = vpop.f32.mrf.mxu0
      %v3133 = vadd.f32 %v2418, %v3132
      %v3134 = vpop.f32.mrf.mxu0
      %v3135 = vpop.f32.mrf.mxu0
      %v3136 = vadd.f32 %v2418, %v3135
      %v3137 = vpop.f32.mrf.mxu0
      %3138 = vmatprep.mubr.bf16.mxu0 0
      %3139 = vmatmul.mubr.bf16.gmra.mxu0 %v3049
      %v3140 = vpop.f32.mrf.mxu0
      %v3141 = vadd.f32 %v2418, %v3140
      %v3142 = vpop.f32.mrf.mxu0
      %v3143 = vpop.f32.mrf.mxu0
      %v3144 = vadd.f32 %v2418, %v3143
      %v3145 = vpop.f32.mrf.mxu0
      %3146 = vmatprep.mubr.bf16.mxu0 0
      %3147 = vmatmul.mubr.bf16.gmra.mxu0 %v3052
      %v3148 = vpop.f32.mrf.mxu0
      %v3149 = vadd.f32 %v2418, %v3148
      %v3150 = vpop.f32.mrf.mxu0
      %v3151 = vpop.f32.mrf.mxu0
      %v3152 = vadd.f32 %v2418, %v3151
      %v3153 = vpop.f32.mrf.mxu0
      %3154 = vmatprep.mubr.bf16.mxu0 0
      %3155 = vmatmul.mubr.bf16.gmra.mxu0 %v3055
      %v3156 = vpop.f32.mrf.mxu0
      %v3157 = vadd.f32 %v2418, %v3156
      %v3158 = vpop.f32.mrf.mxu0
      %v3159 = vpop.f32.mrf.mxu0
      %v3160 = vadd.f32 %v2418, %v3159
      %v3161 = vpop.f32.mrf.mxu0
      %3162 = vmatprep.mubr.bf16.mxu0 0
      %3163 = vmatmul.mubr.bf16.gmra.mxu0 %v3058
      %v3164 = vpop.f32.mrf.mxu0
      %v3165 = vadd.f32 %v2418, %v3164
      %v3166 = vpop.f32.mrf.mxu0
      %v3167 = vpop.f32.mrf.mxu0
      %v3168 = vadd.f32 %v2418, %v3167
      %v3169 = vpop.f32.mrf.mxu0
      %3170 = vmatprep.mubr.bf16.mxu0 0
      %3171 = vmatmul.mubr.bf16.gmra.mxu0 %v3061
      %v3172 = vpop.f32.mrf.mxu0
      %v3173 = vadd.f32 %v2418, %v3172
      %v3174 = vpop.f32.mrf.mxu0
      %v3175 = vpop.f32.mrf.mxu0
      %v3176 = vadd.f32 %v2418, %v3175
      %v3177 = vpop.f32.mrf.mxu0
      %3178 = vmatprep.mubr.bf16.mxu0 0
      %3179 = vmatmul.mubr.bf16.gmra.mxu0 %v3064
      %v3180 = vpop.f32.mrf.mxu0
      %v3181 = vadd.f32 %v2418, %v3180
      %v3182 = vpop.f32.mrf.mxu0
      %v3183 = vpop.f32.mrf.mxu0
      %v3184 = vadd.f32 %v2418, %v3183
      %v3185 = vpop.f32.mrf.mxu0
      %3186 = vmatprep.mubr.bf16.mxu0 0
      %3187 = vmatmul.mubr.bf16.gmra.mxu0 %v3067
      %v3188 = vpop.f32.mrf.mxu0
      %v3189 = vadd.f32 %v2418, %v3188
      %v3190 = vpop.f32.mrf.mxu0
      %v3191 = vpop.f32.mrf.mxu0
      %v3192 = vadd.f32 %v2418, %v3191
      %v3193 = vpop.f32.mrf.mxu0
      %3194 = vmatprep.mubr.bf16.mxu0 0
      %3195 = vmatmul.mubr.bf16.gmra.mxu0 %v3070
      %v3196 = vpop.f32.mrf.mxu0
      %v3197 = vadd.f32 %v2418, %v3196
      %v3198 = vpop.f32.mrf.mxu0
      %v3199 = vpop.f32.mrf.mxu0
      %v3200 = vadd.f32 %v2418, %v3199
      %v3201 = vpop.f32.mrf.mxu0
      %3202 = vmatprep.mubr.bf16.mxu0 0
      %3203 = vmatmul.mubr.bf16.gmra.mxu0 %v3073
      %v3204 = vpop.f32.mrf.mxu0
      %v3205 = vadd.f32 %v2418, %v3204
      %v3206 = vpop.f32.mrf.mxu0
      %v3207 = vpop.f32.mrf.mxu0
      %v3208 = vadd.f32 %v2418, %v3207
      %v3209 = vpop.f32.mrf.mxu0
      %3210 = vmatprep.mubr.bf16.mxu0 0
      %3211 = vmatmul.mubr.bf16.gmra.mxu0 %v3076
      %v3212 = vpop.f32.mrf.mxu0
      %v3213 = vadd.f32 %v2418, %v3212
      %v3214 = vpop.f32.mrf.mxu0
      %v3215 = vpop.f32.mrf.mxu0
      %v3216 = vpop.f32.mrf.mxu0
      %3217 = vdwg.mxu0
      %v3218 = vmax.f32 %v3117, 0.0
      %v3219 = vmax.f32 %v3120, 0.0
      %v3220 = vmax.f32 %v3125, 0.0
      %v3221 = vmax.f32 %v3128, 0.0
      %v3222 = vmax.f32 %v3133, 0.0
      %v3223 = vmax.f32 %v3136, 0.0
      %v3224 = vmax.f32 %v3141, 0.0
      %v3225 = vmax.f32 %v3144, 0.0
      %v3226 = vmax.f32 %v3149, 0.0
      %v3227 = vmax.f32 %v3152, 0.0
      %v3228 = vmax.f32 %v3157, 0.0
      %v3229 = vmax.f32 %v3160, 0.0
      %v3230 = vmax.f32 %v3165, 0.0
      %v3231 = vmax.f32 %v3168, 0.0
      %v3232 = vmax.f32 %v3173, 0.0
      %v3233 = vmax.f32 %v3176, 0.0
      %v3234 = vmax.f32 %v3181, 0.0
      %v3235 = vmax.f32 %v3184, 0.0
      %v3236 = vmax.f32 %v3189, 0.0
      %v3237 = vmax.f32 %v3192, 0.0
      %v3238 = vmax.f32 %v3197, 0.0
      %v3239 = vmax.f32 %v3200, 0.0
      %v3240 = vmax.f32 %v3205, 0.0
      %v3241 = vmax.f32 %v3208, 0.0
      %v3242 = vmax.f32 %v3213, 0.0
      %v3268 = vcombine.high %v3218, %v3218
      %v3270 = vunpack.c.l.s4 1983009808
      %v3271 = vunpack.c.0.s8 %v3270
      %v3272 = vlaneseq
      %v3273 = vshrl.u32 %v3272, 7
      %v3274 = vsub.s32 %v3271, %v3273
      %v3275 = vrot.slane %v3218, %v3274
      %v3277 = vunpack.c.l.s4 1983009808
      %v3278 = vunpack.c.0.s8 %v3277
      %v3279 = vlaneseq
      %v3280 = vshrl.u32 %v3279, 7
      %v3281 = vsub.s32 %v3278, %v3280
      %v3282 = vrot.slane %v3268, %v3281
      %v3283 = vcombine.high %v3275, %v3275
      %v3284 = vcombine.high %v3282, %v3282
      %v3285 = vcombine.high %v3219, %v3219
      %v3287 = vunpack.c.l.s4 1983009808
      %v3288 = vunpack.c.0.s8 %v3287
      %v3289 = vlaneseq
      %v3290 = vshrl.u32 %v3289, 7
      %v3291 = vsub.s32 %v3288, %v3290
      %v3292 = vrot.slane %v3219, %v3291
      %v3294 = vunpack.c.l.s4 1983009808
      %v3295 = vunpack.c.0.s8 %v3294
      %v3296 = vlaneseq
      %v3297 = vshrl.u32 %v3296, 7
      %v3298 = vsub.s32 %v3295, %v3297
      %v3299 = vrot.slane %v3285, %v3298
      %v3300 = vcombine.high %v3292, %v3292
      %v3301 = vcombine.high %v3299, %v3299
      %v3302 = vcombine.high %v3220, %v3220
      %v3304 = vunpack.c.l.s4 1983009808
      %v3305 = vunpack.c.0.s8 %v3304
      %v3306 = vlaneseq
      %v3307 = vshrl.u32 %v3306, 7
      %v3308 = vsub.s32 %v3305, %v3307
      %v3309 = vrot.slane %v3220, %v3308
      %v3311 = vunpack.c.l.s4 1983009808
      %v3312 = vunpack.c.0.s8 %v3311
      %v3313 = vlaneseq
      %v3314 = vshrl.u32 %v3313, 7
      %v3315 = vsub.s32 %v3312, %v3314
      %v3316 = vrot.slane %v3302, %v3315
      %v3317 = vcombine.high %v3309, %v3309
      %v3318 = vcombine.high %v3316, %v3316
      %v3319 = vcombine.high %v3221, %v3221
      %v3321 = vunpack.c.l.s4 1983009808
      %v3322 = vunpack.c.0.s8 %v3321
      %v3323 = vlaneseq
      %v3324 = vshrl.u32 %v3323, 7
      %v3325 = vsub.s32 %v3322, %v3324
      %v3326 = vrot.slane %v3221, %v3325
      %v3328 = vunpack.c.l.s4 1983009808
      %v3329 = vunpack.c.0.s8 %v3328
      %v3330 = vlaneseq
      %v3331 = vshrl.u32 %v3330, 7
      %v3332 = vsub.s32 %v3329, %v3331
      %v3333 = vrot.slane %v3319, %v3332
      %v3334 = vcombine.high %v3326, %v3326
      %v3335 = vcombine.high %v3333, %v3333
      %v3336 = vcombine.high %v3222, %v3222
      %v3338 = vunpack.c.l.s4 1983009808
      %v3339 = vunpack.c.0.s8 %v3338
      %v3340 = vlaneseq
      %v3341 = vshrl.u32 %v3340, 7
      %v3342 = vsub.s32 %v3339, %v3341
      %v3343 = vrot.slane %v3222, %v3342
      %v3345 = vunpack.c.l.s4 1983009808
      %v3346 = vunpack.c.0.s8 %v3345
      %v3347 = vlaneseq
      %v3348 = vshrl.u32 %v3347, 7
      %v3349 = vsub.s32 %v3346, %v3348
      %v3350 = vrot.slane %v3336, %v3349
      %v3351 = vcombine.high %v3343, %v3343
      %v3352 = vcombine.high %v3350, %v3350
      %v3353 = vcombine.high %v3223, %v3223
      %v3355 = vunpack.c.l.s4 1983009808
      %v3356 = vunpack.c.0.s8 %v3355
      %v3357 = vlaneseq
      %v3358 = vshrl.u32 %v3357, 7
      %v3359 = vsub.s32 %v3356, %v3358
      %v3360 = vrot.slane %v3223, %v3359
      %v3362 = vunpack.c.l.s4 1983009808
      %v3363 = vunpack.c.0.s8 %v3362
      %v3364 = vlaneseq
      %v3365 = vshrl.u32 %v3364, 7
      %v3366 = vsub.s32 %v3363, %v3365
      %v3367 = vrot.slane %v3353, %v3366
      %v3368 = vcombine.high %v3360, %v3360
      %v3369 = vcombine.high %v3367, %v3367
      %v3370 = vcombine.high %v3224, %v3224
      %v3372 = vunpack.c.l.s4 1983009808
      %v3373 = vunpack.c.0.s8 %v3372
      %v3374 = vlaneseq
      %v3375 = vshrl.u32 %v3374, 7
      %v3376 = vsub.s32 %v3373, %v3375
      %v3377 = vrot.slane %v3224, %v3376
      %v3379 = vunpack.c.l.s4 1983009808
      %v3380 = vunpack.c.0.s8 %v3379
      %v3381 = vlaneseq
      %v3382 = vshrl.u32 %v3381, 7
      %v3383 = vsub.s32 %v3380, %v3382
      %v3384 = vrot.slane %v3370, %v3383
      %v3385 = vcombine.high %v3377, %v3377
      %v3386 = vcombine.high %v3384, %v3384
      %v3387 = vcombine.high %v3225, %v3225
      %v3389 = vunpack.c.l.s4 1983009808
      %v3390 = vunpack.c.0.s8 %v3389
      %v3391 = vlaneseq
      %v3392 = vshrl.u32 %v3391, 7
      %v3393 = vsub.s32 %v3390, %v3392
      %v3394 = vrot.slane %v3225, %v3393
      %v3396 = vunpack.c.l.s4 1983009808
      %v3397 = vunpack.c.0.s8 %v3396
      %v3398 = vlaneseq
      %v3399 = vshrl.u32 %v3398, 7
      %v3400 = vsub.s32 %v3397, %v3399
      %v3401 = vrot.slane %v3387, %v3400
      %v3402 = vcombine.high %v3394, %v3394
      %v3403 = vcombine.high %v3401, %v3401
      %v3404 = vcombine.high %v3226, %v3226
      %v3406 = vunpack.c.l.s4 1983009808
      %v3407 = vunpack.c.0.s8 %v3406
      %v3408 = vlaneseq
      %v3409 = vshrl.u32 %v3408, 7
      %v3410 = vsub.s32 %v3407, %v3409
      %v3411 = vrot.slane %v3226, %v3410
      %v3413 = vunpack.c.l.s4 1983009808
      %v3414 = vunpack.c.0.s8 %v3413
      %v3415 = vlaneseq
      %v3416 = vshrl.u32 %v3415, 7
      %v3417 = vsub.s32 %v3414, %v3416
      %v3418 = vrot.slane %v3404, %v3417
      %v3419 = vcombine.high %v3411, %v3411
      %v3420 = vcombine.high %v3418, %v3418
      %v3421 = vcombine.high %v3227, %v3227
      %v3423 = vunpack.c.l.s4 1983009808
      %v3424 = vunpack.c.0.s8 %v3423
      %v3425 = vlaneseq
      %v3426 = vshrl.u32 %v3425, 7
      %v3427 = vsub.s32 %v3424, %v3426
      %v3428 = vrot.slane %v3227, %v3427
      %v3430 = vunpack.c.l.s4 1983009808
      %v3431 = vunpack.c.0.s8 %v3430
      %v3432 = vlaneseq
      %v3433 = vshrl.u32 %v3432, 7
      %v3434 = vsub.s32 %v3431, %v3433
      %v3435 = vrot.slane %v3421, %v3434
      %v3436 = vcombine.high %v3428, %v3428
      %v3437 = vcombine.high %v3435, %v3435
      %v3438 = vcombine.high %v3228, %v3228
      %v3440 = vunpack.c.l.s4 1983009808
      %v3441 = vunpack.c.0.s8 %v3440
      %v3442 = vlaneseq
      %v3443 = vshrl.u32 %v3442, 7
      %v3444 = vsub.s32 %v3441, %v3443
      %v3445 = vrot.slane %v3228, %v3444
      %v3447 = vunpack.c.l.s4 1983009808
      %v3448 = vunpack.c.0.s8 %v3447
      %v3449 = vlaneseq
      %v3450 = vshrl.u32 %v3449, 7
      %v3451 = vsub.s32 %v3448, %v3450
      %v3452 = vrot.slane %v3438, %v3451
      %v3453 = vcombine.high %v3445, %v3445
      %v3454 = vcombine.high %v3452, %v3452
      %v3455 = vcombine.high %v3229, %v3229
      %v3457 = vunpack.c.l.s4 1983009808
      %v3458 = vunpack.c.0.s8 %v3457
      %v3459 = vlaneseq
      %v3460 = vshrl.u32 %v3459, 7
      %v3461 = vsub.s32 %v3458, %v3460
      %v3462 = vrot.slane %v3229, %v3461
      %v3464 = vunpack.c.l.s4 1983009808
      %v3465 = vunpack.c.0.s8 %v3464
      %v3466 = vlaneseq
      %v3467 = vshrl.u32 %v3466, 7
      %v3468 = vsub.s32 %v3465, %v3467
      %v3469 = vrot.slane %v3455, %v3468
      %v3470 = vcombine.high %v3462, %v3462
      %v3471 = vcombine.high %v3469, %v3469
      %v3472 = vcombine.high %v3230, %v3230
      %v3474 = vunpack.c.l.s4 1983009808
      %v3475 = vunpack.c.0.s8 %v3474
      %v3476 = vlaneseq
      %v3477 = vshrl.u32 %v3476, 7
      %v3478 = vsub.s32 %v3475, %v3477
      %v3479 = vrot.slane %v3230, %v3478
      %v3481 = vunpack.c.l.s4 1983009808
      %v3482 = vunpack.c.0.s8 %v3481
      %v3483 = vlaneseq
      %v3484 = vshrl.u32 %v3483, 7
      %v3485 = vsub.s32 %v3482, %v3484
      %v3486 = vrot.slane %v3472, %v3485
      %v3487 = vcombine.high %v3479, %v3479
      %v3488 = vcombine.high %v3486, %v3486
      %v3489 = vcombine.high %v3231, %v3231
      %v3491 = vunpack.c.l.s4 1983009808
      %v3492 = vunpack.c.0.s8 %v3491
      %v3493 = vlaneseq
      %v3494 = vshrl.u32 %v3493, 7
      %v3495 = vsub.s32 %v3492, %v3494
      %v3496 = vrot.slane %v3231, %v3495
      %v3498 = vunpack.c.l.s4 1983009808
      %v3499 = vunpack.c.0.s8 %v3498
      %v3500 = vlaneseq
      %v3501 = vshrl.u32 %v3500, 7
      %v3502 = vsub.s32 %v3499, %v3501
      %v3503 = vrot.slane %v3489, %v3502
      %v3504 = vcombine.high %v3496, %v3496
      %v3505 = vcombine.high %v3503, %v3503
      %v3506 = vcombine.high %v3232, %v3232
      %v3508 = vunpack.c.l.s4 1983009808
      %v3509 = vunpack.c.0.s8 %v3508
      %v3510 = vlaneseq
      %v3511 = vshrl.u32 %v3510, 7
      %v3512 = vsub.s32 %v3509, %v3511
      %v3513 = vrot.slane %v3232, %v3512
      %v3515 = vunpack.c.l.s4 1983009808
      %v3516 = vunpack.c.0.s8 %v3515
      %v3517 = vlaneseq
      %v3518 = vshrl.u32 %v3517, 7
      %v3519 = vsub.s32 %v3516, %v3518
      %v3520 = vrot.slane %v3506, %v3519
      %v3521 = vcombine.high %v3513, %v3513
      %v3522 = vcombine.high %v3520, %v3520
      %v3523 = vcombine.high %v3233, %v3233
      %v3525 = vunpack.c.l.s4 1983009808
      %v3526 = vunpack.c.0.s8 %v3525
      %v3527 = vlaneseq
      %v3528 = vshrl.u32 %v3527, 7
      %v3529 = vsub.s32 %v3526, %v3528
      %v3530 = vrot.slane %v3233, %v3529
      %v3532 = vunpack.c.l.s4 1983009808
      %v3533 = vunpack.c.0.s8 %v3532
      %v3534 = vlaneseq
      %v3535 = vshrl.u32 %v3534, 7
      %v3536 = vsub.s32 %v3533, %v3535
      %v3537 = vrot.slane %v3523, %v3536
      %v3538 = vcombine.high %v3530, %v3530
      %v3539 = vcombine.high %v3537, %v3537
      %v3540 = vcombine.high %v3234, %v3234
      %v3542 = vunpack.c.l.s4 1983009808
      %v3543 = vunpack.c.0.s8 %v3542
      %v3544 = vlaneseq
      %v3545 = vshrl.u32 %v3544, 7
      %v3546 = vsub.s32 %v3543, %v3545
      %v3547 = vrot.slane %v3234, %v3546
      %v3549 = vunpack.c.l.s4 1983009808
      %v3550 = vunpack.c.0.s8 %v3549
      %v3551 = vlaneseq
      %v3552 = vshrl.u32 %v3551, 7
      %v3553 = vsub.s32 %v3550, %v3552
      %v3554 = vrot.slane %v3540, %v3553
      %v3555 = vcombine.high %v3547, %v3547
      %v3556 = vcombine.high %v3554, %v3554
      %v3557 = vcombine.high %v3235, %v3235
      %v3559 = vunpack.c.l.s4 1983009808
      %v3560 = vunpack.c.0.s8 %v3559
      %v3561 = vlaneseq
      %v3562 = vshrl.u32 %v3561, 7
      %v3563 = vsub.s32 %v3560, %v3562
      %v3564 = vrot.slane %v3235, %v3563
      %v3566 = vunpack.c.l.s4 1983009808
      %v3567 = vunpack.c.0.s8 %v3566
      %v3568 = vlaneseq
      %v3569 = vshrl.u32 %v3568, 7
      %v3570 = vsub.s32 %v3567, %v3569
      %v3571 = vrot.slane %v3557, %v3570
      %v3572 = vcombine.high %v3564, %v3564
      %v3573 = vcombine.high %v3571, %v3571
      %v3574 = vcombine.high %v3236, %v3236
      %v3576 = vunpack.c.l.s4 1983009808
      %v3577 = vunpack.c.0.s8 %v3576
      %v3578 = vlaneseq
      %v3579 = vshrl.u32 %v3578, 7
      %v3580 = vsub.s32 %v3577, %v3579
      %v3581 = vrot.slane %v3236, %v3580
      %v3583 = vunpack.c.l.s4 1983009808
      %v3584 = vunpack.c.0.s8 %v3583
      %v3585 = vlaneseq
      %v3586 = vshrl.u32 %v3585, 7
      %v3587 = vsub.s32 %v3584, %v3586
      %v3588 = vrot.slane %v3574, %v3587
      %v3589 = vcombine.high %v3581, %v3581
      %v3590 = vcombine.high %v3588, %v3588
      %v3591 = vcombine.high %v3237, %v3237
      %v3593 = vunpack.c.l.s4 1983009808
      %v3594 = vunpack.c.0.s8 %v3593
      %v3595 = vlaneseq
      %v3596 = vshrl.u32 %v3595, 7
      %v3597 = vsub.s32 %v3594, %v3596
      %v3598 = vrot.slane %v3237, %v3597
      %v3600 = vunpack.c.l.s4 1983009808
      %v3601 = vunpack.c.0.s8 %v3600
      %v3602 = vlaneseq
      %v3603 = vshrl.u32 %v3602, 7
      %v3604 = vsub.s32 %v3601, %v3603
      %v3605 = vrot.slane %v3591, %v3604
      %v3606 = vcombine.high %v3598, %v3598
      %v3607 = vcombine.high %v3605, %v3605
      %v3608 = vcombine.high %v3238, %v3238
      %v3610 = vunpack.c.l.s4 1983009808
      %v3611 = vunpack.c.0.s8 %v3610
      %v3612 = vlaneseq
      %v3613 = vshrl.u32 %v3612, 7
      %v3614 = vsub.s32 %v3611, %v3613
      %v3615 = vrot.slane %v3238, %v3614
      %v3617 = vunpack.c.l.s4 1983009808
      %v3618 = vunpack.c.0.s8 %v3617
      %v3619 = vlaneseq
      %v3620 = vshrl.u32 %v3619, 7
      %v3621 = vsub.s32 %v3618, %v3620
      %v3622 = vrot.slane %v3608, %v3621
      %v3623 = vcombine.high %v3615, %v3615
      %v3624 = vcombine.high %v3622, %v3622
      %v3625 = vcombine.high %v3239, %v3239
      %v3627 = vunpack.c.l.s4 1983009808
      %v3628 = vunpack.c.0.s8 %v3627
      %v3629 = vlaneseq
      %v3630 = vshrl.u32 %v3629, 7
      %v3631 = vsub.s32 %v3628, %v3630
      %v3632 = vrot.slane %v3239, %v3631
      %v3634 = vunpack.c.l.s4 1983009808
      %v3635 = vunpack.c.0.s8 %v3634
      %v3636 = vlaneseq
      %v3637 = vshrl.u32 %v3636, 7
      %v3638 = vsub.s32 %v3635, %v3637
      %v3639 = vrot.slane %v3625, %v3638
      %v3640 = vcombine.high %v3632, %v3632
      %v3641 = vcombine.high %v3639, %v3639
      %v3642 = vcombine.high %v3240, %v3240
      %v3644 = vunpack.c.l.s4 1983009808
      %v3645 = vunpack.c.0.s8 %v3644
      %v3646 = vlaneseq
      %v3647 = vshrl.u32 %v3646, 7
      %v3648 = vsub.s32 %v3645, %v3647
      %v3649 = vrot.slane %v3240, %v3648
      %v3651 = vunpack.c.l.s4 1983009808
      %v3652 = vunpack.c.0.s8 %v3651
      %v3653 = vlaneseq
      %v3654 = vshrl.u32 %v3653, 7
      %v3655 = vsub.s32 %v3652, %v3654
      %v3656 = vrot.slane %v3642, %v3655
      %v3657 = vcombine.high %v3649, %v3649
      %v3658 = vcombine.high %v3656, %v3656
      %v3659 = vcombine.high %v3241, %v3241
      %v3661 = vunpack.c.l.s4 1983009808
      %v3662 = vunpack.c.0.s8 %v3661
      %v3663 = vlaneseq
      %v3664 = vshrl.u32 %v3663, 7
      %v3665 = vsub.s32 %v3662, %v3664
      %v3666 = vrot.slane %v3241, %v3665
      %v3668 = vunpack.c.l.s4 1983009808
      %v3669 = vunpack.c.0.s8 %v3668
      %v3670 = vlaneseq
      %v3671 = vshrl.u32 %v3670, 7
      %v3672 = vsub.s32 %v3669, %v3671
      %v3673 = vrot.slane %v3659, %v3672
      %v3674 = vcombine.high %v3666, %v3666
      %v3675 = vcombine.high %v3673, %v3673
      %v3677 = vunpack.c.l.s4 1983009808
      %v3678 = vunpack.c.0.s8 %v3677
      %v3679 = vlaneseq
      %v3680 = vshrl.u32 %v3679, 7
      %v3681 = vsub.s32 %v3678, %v3680
      %v3682 = vrot.slane %v3242, %v3681
      %v3683 = vcombine.high %v3682, %v3682
      %v3782 = vadd.f32 %v3275, %v3301
      %v3783 = vadd.f32 %v3283, %v3309
      %v3784 = vadd.f32 %v3282, %v3317
      %v3785 = vadd.f32 %v3284, %v3316
      %v3786 = vadd.f32 %v3292, %v3318
      %v3787 = vadd.f32 %v3300, %v3326
      %v3788 = vadd.f32 %v3299, %v3334
      %v3789 = vadd.f32 %v3333, %v3368
      %v3790 = vadd.f32 %v3335, %v3367
      %v3791 = vadd.f32 %v3343, %v3369
      %v3792 = vadd.f32 %v3351, %v3377
      %v3793 = vadd.f32 %v3350, %v3385
      %v3794 = vadd.f32 %v3352, %v3384
      %v3795 = vadd.f32 %v3360, %v3386
      %v3796 = vadd.f32 %v3394, %v3420
      %v3797 = vadd.f32 %v3402, %v3428
      %v3798 = vadd.f32 %v3401, %v3436
      %v3799 = vadd.f32 %v3403, %v3435
      %v3800 = vadd.f32 %v3411, %v3437
      %v3801 = vadd.f32 %v3419, %v3445
      %v3802 = vadd.f32 %v3418, %v3453
      %v3803 = vadd.f32 %v3452, %v3487
      %v3804 = vadd.f32 %v3454, %v3486
      %v3805 = vadd.f32 %v3462, %v3488
      %v3806 = vadd.f32 %v3470, %v3496
      %v3807 = vadd.f32 %v3469, %v3504
      %v3808 = vadd.f32 %v3471, %v3503
      %v3809 = vadd.f32 %v3479, %v3505
      %v3810 = vadd.f32 %v3513, %v3539
      %v3811 = vadd.f32 %v3521, %v3547
      %v3812 = vadd.f32 %v3520, %v3555
      %v3813 = vadd.f32 %v3522, %v3554
      %v3814 = vadd.f32 %v3530, %v3556
      %v3815 = vadd.f32 %v3538, %v3564
      %v3816 = vadd.f32 %v3537, %v3572
      %v3817 = vadd.f32 %v3571, %v3606
      %v3818 = vadd.f32 %v3573, %v3605
      %v3819 = vadd.f32 %v3581, %v3607
      %v3820 = vadd.f32 %v3589, %v3615
      %v3821 = vadd.f32 %v3588, %v3623
      %v3822 = vadd.f32 %v3590, %v3622
      %v3823 = vadd.f32 %v3598, %v3624
      %v3824 = vadd.f32 %v3632, %v3658
      %v3825 = vadd.f32 %v3640, %v3666
      %v3826 = vadd.f32 %v3639, %v3674
      %v3827 = vadd.f32 %v3641, %v3673
      %v3828 = vadd.f32 %v3649, %v3675
      %v3829 = vadd.f32 %v3657, %v3682
      %v3830 = vadd.f32 %v3656, %v3683
      %v3880 = vrot.slane %v3782, 7
      %v3881 = vrot.slane %v3880, 2
      %v3882 = vrot.slane %v3783, 7
      %v3883 = vrot.slane %v3882, 2
      %v3884 = vrot.slane %v3784, 7
      %v3885 = vrot.slane %v3884, 2
      %v3886 = vrot.slane %v3785, 7
      %v3887 = vrot.slane %v3886, 2
      %v3888 = vrot.slane %v3786, 7
      %v3889 = vrot.slane %v3888, 2
      %v3890 = vrot.slane %v3787, 7
      %v3891 = vrot.slane %v3890, 2
      %v3892 = vrot.slane %v3788, 7
      %v3893 = vrot.slane %v3892, 2
      %v3894 = vrot.slane %v3789, 7
      %v3895 = vrot.slane %v3894, 2
      %v3896 = vrot.slane %v3790, 7
      %v3897 = vrot.slane %v3896, 2
      %v3898 = vrot.slane %v3791, 7
      %v3899 = vrot.slane %v3898, 2
      %v3900 = vrot.slane %v3792, 7
      %v3901 = vrot.slane %v3900, 2
      %v3902 = vrot.slane %v3793, 7
      %v3903 = vrot.slane %v3902, 2
      %v3904 = vrot.slane %v3794, 7
      %v3905 = vrot.slane %v3904, 2
      %v3906 = vrot.slane %v3795, 7
      %v3907 = vrot.slane %v3906, 2
      %v3908 = vrot.slane %v3796, 7
      %v3909 = vrot.slane %v3908, 2
      %v3910 = vrot.slane %v3797, 7
      %v3911 = vrot.slane %v3910, 2
      %v3912 = vrot.slane %v3798, 7
      %v3913 = vrot.slane %v3912, 2
      %v3914 = vrot.slane %v3799, 7
      %v3915 = vrot.slane %v3914, 2
      %v3916 = vrot.slane %v3800, 7
      %v3917 = vrot.slane %v3916, 2
      %v3918 = vrot.slane %v3801, 7
      %v3919 = vrot.slane %v3918, 2
      %v3920 = vrot.slane %v3802, 7
      %v3921 = vrot.slane %v3920, 2
      %v3922 = vrot.slane %v3803, 7
      %v3923 = vrot.slane %v3922, 2
      %v3924 = vrot.slane %v3804, 7
      %v3925 = vrot.slane %v3924, 2
      %v3926 = vrot.slane %v3805, 7
      %v3927 = vrot.slane %v3926, 2
      %v3928 = vrot.slane %v3806, 7
      %v3929 = vrot.slane %v3928, 2
      %v3930 = vrot.slane %v3807, 7
      %v3931 = vrot.slane %v3930, 2
      %v3932 = vrot.slane %v3808, 7
      %v3933 = vrot.slane %v3932, 2
      %v3934 = vrot.slane %v3809, 7
      %v3935 = vrot.slane %v3934, 2
      %v3936 = vrot.slane %v3810, 7
      %v3937 = vrot.slane %v3936, 2
      %v3938 = vrot.slane %v3811, 7
      %v3939 = vrot.slane %v3938, 2
      %v3940 = vrot.slane %v3812, 7
      %v3941 = vrot.slane %v3940, 2
      %v3942 = vrot.slane %v3813, 7
      %v3943 = vrot.slane %v3942, 2
      %v3944 = vrot.slane %v3814, 7
      %v3945 = vrot.slane %v3944, 2
      %v3946 = vrot.slane %v3815, 7
      %v3947 = vrot.slane %v3946, 2
      %v3948 = vrot.slane %v3816, 7
      %v3949 = vrot.slane %v3948, 2
      %v3950 = vrot.slane %v3817, 7
      %v3951 = vrot.slane %v3950, 2
      %v3952 = vrot.slane %v3818, 7
      %v3953 = vrot.slane %v3952, 2
      %v3954 = vrot.slane %v3819, 7
      %v3955 = vrot.slane %v3954, 2
      %v3956 = vrot.slane %v3820, 7
      %v3957 = vrot.slane %v3956, 2
      %v3958 = vrot.slane %v3821, 7
      %v3959 = vrot.slane %v3958, 2
      %v3960 = vrot.slane %v3822, 7
      %v3961 = vrot.slane %v3960, 2
      %v3962 = vrot.slane %v3823, 7
      %v3963 = vrot.slane %v3962, 2
      %v3964 = vrot.slane %v3824, 7
      %v3965 = vrot.slane %v3964, 2
      %v3966 = vrot.slane %v3825, 7
      %v3967 = vrot.slane %v3966, 2
      %v3968 = vrot.slane %v3826, 7
      %v3969 = vrot.slane %v3968, 2
      %v3970 = vrot.slane %v3827, 7
      %v3971 = vrot.slane %v3970, 2
      %v3972 = vrot.slane %v3828, 7
      %v3973 = vrot.slane %v3972, 2
      %v3974 = vrot.slane %v3829, 7
      %v3975 = vrot.slane %v3974, 2
      %v3976 = vrot.slane %v3830, 7
      %v3977 = vrot.slane %v3976, 2
      %v4027 = vadd.f32 %v3782, %v3881
      %v4028 = vadd.f32 %v3783, %v3883
      %v4029 = vadd.f32 %v3784, %v3885
      %v4030 = vadd.f32 %v3785, %v3887
      %v4031 = vadd.f32 %v3786, %v3889
      %v4032 = vadd.f32 %v3787, %v3891
      %v4033 = vadd.f32 %v3788, %v3893
      %v4034 = vadd.f32 %v3789, %v3895
      %v4035 = vadd.f32 %v3790, %v3897
      %v4036 = vadd.f32 %v3791, %v3899
      %v4037 = vadd.f32 %v3792, %v3901
      %v4038 = vadd.f32 %v3793, %v3903
      %v4039 = vadd.f32 %v3794, %v3905
      %v4040 = vadd.f32 %v3795, %v3907
      %v4041 = vadd.f32 %v3796, %v3909
      %v4042 = vadd.f32 %v3797, %v3911
      %v4043 = vadd.f32 %v3798, %v3913
      %v4044 = vadd.f32 %v3799, %v3915
      %v4045 = vadd.f32 %v3800, %v3917
      %v4046 = vadd.f32 %v3801, %v3919
      %v4047 = vadd.f32 %v3802, %v3921
      %v4048 = vadd.f32 %v3803, %v3923
      %v4049 = vadd.f32 %v3804, %v3925
      %v4050 = vadd.f32 %v3805, %v3927
      %v4051 = vadd.f32 %v3806, %v3929
      %v4052 = vadd.f32 %v3807, %v3931
      %v4053 = vadd.f32 %v3808, %v3933
      %v4054 = vadd.f32 %v3809, %v3935
      %v4055 = vadd.f32 %v3810, %v3937
      %v4056 = vadd.f32 %v3811, %v3939
      %v4057 = vadd.f32 %v3812, %v3941
      %v4058 = vadd.f32 %v3813, %v3943
      %v4059 = vadd.f32 %v3814, %v3945
      %v4060 = vadd.f32 %v3815, %v3947
      %v4061 = vadd.f32 %v3816, %v3949
      %v4062 = vadd.f32 %v3817, %v3951
      %v4063 = vadd.f32 %v3818, %v3953
      %v4064 = vadd.f32 %v3819, %v3955
      %v4065 = vadd.f32 %v3820, %v3957
      %v4066 = vadd.f32 %v3821, %v3959
      %v4067 = vadd.f32 %v3822, %v3961
      %v4068 = vadd.f32 %v3823, %v3963
      %v4069 = vadd.f32 %v3824, %v3965
      %v4070 = vadd.f32 %v3825, %v3967
      %v4071 = vadd.f32 %v3826, %v3969
      %v4072 = vadd.f32 %v3827, %v3971
      %v4073 = vadd.f32 %v3828, %v3973
      %v4074 = vadd.f32 %v3829, %v3975
      %v4075 = vadd.f32 %v3830, %v3977
      %v4076 = vmul.f32 %v4027, 0.25
      %v4077 = vmul.f32 %v4028, 0.25
      %v4078 = vmul.f32 %v4029, 0.25
      %v4079 = vmul.f32 %v4030, 0.25
      %v4080 = vmul.f32 %v4031, 0.25
      %v4081 = vmul.f32 %v4032, 0.25
      %v4082 = vmul.f32 %v4033, 0.25
      %v4083 = vmul.f32 %v4034, 0.25
      %v4084 = vmul.f32 %v4035, 0.25
      %v4085 = vmul.f32 %v4036, 0.25
      %v4086 = vmul.f32 %v4037, 0.25
      %v4087 = vmul.f32 %v4038, 0.25
      %v4088 = vmul.f32 %v4039, 0.25
      %v4089 = vmul.f32 %v4040, 0.25
      %v4090 = vmul.f32 %v4041, 0.25
      %v4091 = vmul.f32 %v4042, 0.25
      %v4092 = vmul.f32 %v4043, 0.25
      %v4093 = vmul.f32 %v4044, 0.25
      %v4094 = vmul.f32 %v4045, 0.25
      %v4095 = vmul.f32 %v4046, 0.25
      %v4096 = vmul.f32 %v4047, 0.25
      %v4097 = vmul.f32 %v4048, 0.25
      %v4098 = vmul.f32 %v4049, 0.25
      %v4099 = vmul.f32 %v4050, 0.25
      %v4100 = vmul.f32 %v4051, 0.25
      %v4101 = vmul.f32 %v4052, 0.25
      %v4102 = vmul.f32 %v4053, 0.25
      %v4103 = vmul.f32 %v4054, 0.25
      %v4104 = vmul.f32 %v4055, 0.25
      %v4105 = vmul.f32 %v4056, 0.25
      %v4106 = vmul.f32 %v4057, 0.25
      %v4107 = vmul.f32 %v4058, 0.25
      %v4108 = vmul.f32 %v4059, 0.25
      %v4109 = vmul.f32 %v4060, 0.25
      %v4110 = vmul.f32 %v4061, 0.25
      %v4111 = vmul.f32 %v4062, 0.25
      %v4112 = vmul.f32 %v4063, 0.25
      %v4113 = vmul.f32 %v4064, 0.25
      %v4114 = vmul.f32 %v4065, 0.25
      %v4115 = vmul.f32 %v4066, 0.25
      %v4116 = vmul.f32 %v4067, 0.25
      %v4117 = vmul.f32 %v4068, 0.25
      %v4118 = vmul.f32 %v4069, 0.25
      %v4119 = vmul.f32 %v4070, 0.25
      %v4120 = vmul.f32 %v4071, 0.25
      %v4121 = vmul.f32 %v4072, 0.25
      %v4122 = vmul.f32 %v4073, 0.25
      %v4123 = vmul.f32 %v4074, 0.25
      %v4124 = vmul.f32 %v4075, 0.25
      %v4174 = vlaneseq
      %v4175 = vshrl.u32 %v4174, 7
      %v4176 = vsub.s32 0, %v4175
      %v4177 = vrot.slane %v4076, %v4176
      %v4178 = vlaneseq
      %v4179 = vshrl.u32 %v4178, 7
      %v4180 = vsub.s32 0, %v4179
      %v4181 = vrot.slane %v4077, %v4180
      %v4182 = vlaneseq
      %v4183 = vshrl.u32 %v4182, 7
      %v4184 = vsub.s32 0, %v4183
      %v4185 = vrot.slane %v4078, %v4184
      %v4186 = vlaneseq
      %v4187 = vshrl.u32 %v4186, 7
      %v4188 = vsub.s32 0, %v4187
      %v4189 = vrot.slane %v4079, %v4188
      %v4190 = vlaneseq
      %v4191 = vshrl.u32 %v4190, 7
      %v4192 = vsub.s32 0, %v4191
      %v4193 = vrot.slane %v4080, %v4192
      %v4194 = vlaneseq
      %v4195 = vshrl.u32 %v4194, 7
      %v4196 = vsub.s32 0, %v4195
      %v4197 = vrot.slane %v4081, %v4196
      %v4198 = vlaneseq
      %v4199 = vshrl.u32 %v4198, 7
      %v4200 = vsub.s32 0, %v4199
      %v4201 = vrot.slane %v4082, %v4200
      %v4202 = vlaneseq
      %v4203 = vshrl.u32 %v4202, 7
      %v4204 = vsub.s32 0, %v4203
      %v4205 = vrot.slane %v4083, %v4204
      %v4206 = vlaneseq
      %v4207 = vshrl.u32 %v4206, 7
      %v4208 = vsub.s32 0, %v4207
      %v4209 = vrot.slane %v4084, %v4208
      %v4210 = vlaneseq
      %v4211 = vshrl.u32 %v4210, 7
      %v4212 = vsub.s32 0, %v4211
      %v4213 = vrot.slane %v4085, %v4212
      %v4214 = vlaneseq
      %v4215 = vshrl.u32 %v4214, 7
      %v4216 = vsub.s32 0, %v4215
      %v4217 = vrot.slane %v4086, %v4216
      %v4218 = vlaneseq
      %v4219 = vshrl.u32 %v4218, 7
      %v4220 = vsub.s32 0, %v4219
      %v4221 = vrot.slane %v4087, %v4220
      %v4222 = vlaneseq
      %v4223 = vshrl.u32 %v4222, 7
      %v4224 = vsub.s32 0, %v4223
      %v4225 = vrot.slane %v4088, %v4224
      %v4226 = vlaneseq
      %v4227 = vshrl.u32 %v4226, 7
      %v4228 = vsub.s32 0, %v4227
      %v4229 = vrot.slane %v4089, %v4228
      %v4230 = vlaneseq
      %v4231 = vshrl.u32 %v4230, 7
      %v4232 = vsub.s32 0, %v4231
      %v4233 = vrot.slane %v4090, %v4232
      %v4234 = vlaneseq
      %v4235 = vshrl.u32 %v4234, 7
      %v4236 = vsub.s32 0, %v4235
      %v4237 = vrot.slane %v4091, %v4236
      %v4238 = vlaneseq
      %v4239 = vshrl.u32 %v4238, 7
      %v4240 = vsub.s32 0, %v4239
      %v4241 = vrot.slane %v4092, %v4240
      %v4242 = vlaneseq
      %v4243 = vshrl.u32 %v4242, 7
      %v4244 = vsub.s32 0, %v4243
      %v4245 = vrot.slane %v4093, %v4244
      %v4246 = vlaneseq
      %v4247 = vshrl.u32 %v4246, 7
      %v4248 = vsub.s32 0, %v4247
      %v4249 = vrot.slane %v4094, %v4248
      %v4250 = vlaneseq
      %v4251 = vshrl.u32 %v4250, 7
      %v4252 = vsub.s32 0, %v4251
      %v4253 = vrot.slane %v4095, %v4252
      %v4254 = vlaneseq
      %v4255 = vshrl.u32 %v4254, 7
      %v4256 = vsub.s32 0, %v4255
      %v4257 = vrot.slane %v4096, %v4256
      %v4258 = vlaneseq
      %v4259 = vshrl.u32 %v4258, 7
      %v4260 = vsub.s32 0, %v4259
      %v4261 = vrot.slane %v4097, %v4260
      %v4262 = vlaneseq
      %v4263 = vshrl.u32 %v4262, 7
      %v4264 = vsub.s32 0, %v4263
      %v4265 = vrot.slane %v4098, %v4264
      %v4266 = vlaneseq
      %v4267 = vshrl.u32 %v4266, 7
      %v4268 = vsub.s32 0, %v4267
      %v4269 = vrot.slane %v4099, %v4268
      %v4270 = vlaneseq
      %v4271 = vshrl.u32 %v4270, 7
      %v4272 = vsub.s32 0, %v4271
      %v4273 = vrot.slane %v4100, %v4272
      %v4274 = vlaneseq
      %v4275 = vshrl.u32 %v4274, 7
      %v4276 = vsub.s32 0, %v4275
      %v4277 = vrot.slane %v4101, %v4276
      %v4278 = vlaneseq
      %v4279 = vshrl.u32 %v4278, 7
      %v4280 = vsub.s32 0, %v4279
      %v4281 = vrot.slane %v4102, %v4280
      %v4282 = vlaneseq
      %v4283 = vshrl.u32 %v4282, 7
      %v4284 = vsub.s32 0, %v4283
      %v4285 = vrot.slane %v4103, %v4284
      %v4286 = vlaneseq
      %v4287 = vshrl.u32 %v4286, 7
      %v4288 = vsub.s32 0, %v4287
      %v4289 = vrot.slane %v4104, %v4288
      %v4290 = vlaneseq
      %v4291 = vshrl.u32 %v4290, 7
      %v4292 = vsub.s32 0, %v4291
      %v4293 = vrot.slane %v4105, %v4292
      %v4294 = vlaneseq
      %v4295 = vshrl.u32 %v4294, 7
      %v4296 = vsub.s32 0, %v4295
      %v4297 = vrot.slane %v4106, %v4296
      %v4298 = vlaneseq
      %v4299 = vshrl.u32 %v4298, 7
      %v4300 = vsub.s32 0, %v4299
      %v4301 = vrot.slane %v4107, %v4300
      %v4302 = vlaneseq
      %v4303 = vshrl.u32 %v4302, 7
      %v4304 = vsub.s32 0, %v4303
      %v4305 = vrot.slane %v4108, %v4304
      %v4306 = vlaneseq
      %v4307 = vshrl.u32 %v4306, 7
      %v4308 = vsub.s32 0, %v4307
      %v4309 = vrot.slane %v4109, %v4308
      %v4310 = vlaneseq
      %v4311 = vshrl.u32 %v4310, 7
      %v4312 = vsub.s32 0, %v4311
      %v4313 = vrot.slane %v4110, %v4312
      %v4314 = vlaneseq
      %v4315 = vshrl.u32 %v4314, 7
      %v4316 = vsub.s32 0, %v4315
      %v4317 = vrot.slane %v4111, %v4316
      %v4318 = vlaneseq
      %v4319 = vshrl.u32 %v4318, 7
      %v4320 = vsub.s32 0, %v4319
      %v4321 = vrot.slane %v4112, %v4320
      %v4322 = vlaneseq
      %v4323 = vshrl.u32 %v4322, 7
      %v4324 = vsub.s32 0, %v4323
      %v4325 = vrot.slane %v4113, %v4324
      %v4326 = vlaneseq
      %v4327 = vshrl.u32 %v4326, 7
      %v4328 = vsub.s32 0, %v4327
      %v4329 = vrot.slane %v4114, %v4328
      %v4330 = vlaneseq
      %v4331 = vshrl.u32 %v4330, 7
      %v4332 = vsub.s32 0, %v4331
      %v4333 = vrot.slane %v4115, %v4332
      %v4334 = vlaneseq
      %v4335 = vshrl.u32 %v4334, 7
      %v4336 = vsub.s32 0, %v4335
      %v4337 = vrot.slane %v4116, %v4336
      %v4338 = vlaneseq
      %v4339 = vshrl.u32 %v4338, 7
      %v4340 = vsub.s32 0, %v4339
      %v4341 = vrot.slane %v4117, %v4340
      %v4342 = vlaneseq
      %v4343 = vshrl.u32 %v4342, 7
      %v4344 = vsub.s32 0, %v4343
      %v4345 = vrot.slane %v4118, %v4344
      %v4346 = vlaneseq
      %v4347 = vshrl.u32 %v4346, 7
      %v4348 = vsub.s32 0, %v4347
      %v4349 = vrot.slane %v4119, %v4348
      %v4350 = vlaneseq
      %v4351 = vshrl.u32 %v4350, 7
      %v4352 = vsub.s32 0, %v4351
      %v4353 = vrot.slane %v4120, %v4352
      %v4354 = vlaneseq
      %v4355 = vshrl.u32 %v4354, 7
      %v4356 = vsub.s32 0, %v4355
      %v4357 = vrot.slane %v4121, %v4356
      %v4358 = vlaneseq
      %v4359 = vshrl.u32 %v4358, 7
      %v4360 = vsub.s32 0, %v4359
      %v4361 = vrot.slane %v4122, %v4360
      %v4362 = vlaneseq
      %v4363 = vshrl.u32 %v4362, 7
      %v4364 = vsub.s32 0, %v4363
      %v4365 = vrot.slane %v4123, %v4364
      %v4366 = vlaneseq
      %v4367 = vshrl.u32 %v4366, 7
      %v4368 = vsub.s32 0, %v4367
      %v4369 = vrot.slane %v4124, %v4368
      %vm4370 = vcmask 1041409
      %v4371 = vsel %vm4370, %v4181, %v4177
      %vm4372 = vcmask 1042434
      %v4373 = vsel %vm4372, %v4185, %v4371
      %vm4374 = vcmask 1043459
      %v4375 = vsel %vm4374, %v4189, %v4373
      %vm4376 = vcmask 1044484
      %v4377 = vsel %vm4376, %v4193, %v4375
      %vm4378 = vcmask 1045509
      %v4379 = vsel %vm4378, %v4197, %v4377
      %vm4380 = vcmask 1046534
      %v4381 = vsel %vm4380, %v4201, %v4379
      %vm4382 = vcmask 1047559
      %v4383 = vsel %vm4382, %v4205, %v4381
      %v4384 = vsel %vm4370, %v4213, %v4209
      %v4385 = vsel %vm4372, %v4217, %v4384
      %v4386 = vsel %vm4374, %v4221, %v4385
      %v4387 = vsel %vm4376, %v4225, %v4386
      %v4388 = vsel %vm4378, %v4229, %v4387
      %v4389 = vsel %vm4380, %v4233, %v4388
      %v4390 = vsel %vm4382, %v4237, %v4389
      %v4391 = vsel %vm4370, %v4245, %v4241
      %v4392 = vsel %vm4372, %v4249, %v4391
      %v4393 = vsel %vm4374, %v4253, %v4392
      %v4394 = vsel %vm4376, %v4257, %v4393
      %v4395 = vsel %vm4378, %v4261, %v4394
      %v4396 = vsel %vm4380, %v4265, %v4395
      %v4397 = vsel %vm4382, %v4269, %v4396
      %v4398 = vsel %vm4370, %v4277, %v4273
      %v4399 = vsel %vm4372, %v4281, %v4398
      %v4400 = vsel %vm4374, %v4285, %v4399
      %v4401 = vsel %vm4376, %v4289, %v4400
      %v4402 = vsel %vm4378, %v4293, %v4401
      %v4403 = vsel %vm4380, %v4297, %v4402
      %v4404 = vsel %vm4382, %v4301, %v4403
      %v4405 = vsel %vm4370, %v4309, %v4305
      %v4406 = vsel %vm4372, %v4313, %v4405
      %v4407 = vsel %vm4374, %v4317, %v4406
      %v4408 = vsel %vm4376, %v4321, %v4407
      %v4409 = vsel %vm4378, %v4325, %v4408
      %v4410 = vsel %vm4380, %v4329, %v4409
      %v4411 = vsel %vm4382, %v4333, %v4410
      %v4412 = vsel %vm4370, %v4341, %v4337
      %v4413 = vsel %vm4372, %v4345, %v4412
      %v4414 = vsel %vm4374, %v4349, %v4413
      %v4415 = vsel %vm4376, %v4353, %v4414
      %v4416 = vsel %vm4378, %v4357, %v4415
      %v4417 = vsel %vm4380, %v4361, %v4416
      %v4418 = vsel %vm4382, %v4365, %v4417
      %4426 = vst [vmem:[%s259] sm:$0xff] %v4383
      %4427 = vst [vmem:[%s259 + $0x8] sm:$0xff] %v4390
      %4428 = vst [vmem:[%s259 + $0x10] sm:$0xff] %v4397
      %4429 = vst [vmem:[%s259 + $0x18] sm:$0xff] %v4404
      %4430 = vst [vmem:[%s259 + $0x20] sm:$0xff] %v4411
      %4431 = vst [vmem:[%s259 + $0x28] sm:$0xff] %v4418
      %4432 = vst [vmem:[%s259 + $0x30] sm:$0x1] %v4369
      %s4433 = smul.u32 %s22, 7
      %s4434 = ssub.s32 7, %s4433
      %p4435 = scmp.lt.s32.totalorder %s4434, 7
      %s4436 = scalar_select %p4435, %s4434, 7
      %s4437 = smul.u32 %s4436, 7
      %v4438 = vlaneseq
      %v4439 = vshrl.u32 %v4438, 7
      %v4440 = vadd.s32 %v4439, 8
      %v4441 = vadd.s32 %v4439, 16
      %v4442 = vadd.s32 %v4439, 24
      %v4443 = vadd.s32 %v4439, 32
      %v4444 = vadd.s32 %v4439, 40
      %v4445 = vadd.s32 %v4439, 48
      %v4446 = vstv %s4437
      %vm4447 = vcmp.lt.s32.totalorder %v4439, %v4446
      %vm4448 = vcmp.lt.s32.totalorder %v4440, %v4446
      %vm4449 = vcmp.lt.s32.totalorder %v4441, %v4446
      %vm4450 = vcmp.lt.s32.totalorder %v4442, %v4446
      %vm4451 = vcmp.lt.s32.totalorder %v4443, %v4446
      %vm4452 = vcmp.lt.s32.totalorder %v4444, %v4446
      %vm4453 = vcmp.lt.s32.totalorder %v4445, %v4446
      %v4454 = vsel %vm4447, 1, 0
      %v4455 = vsel %vm4448, 1, 0
      %v4456 = vsel %vm4449, 1, 0
      %v4457 = vsel %vm4450, 1, 0
      %v4458 = vsel %vm4451, 1, 0
      %v4459 = vsel %vm4452, 1, 0
      %v4460 = vsel %vm4453, 1, 0
      %vm4461 = vcmp.eq.s32.totalorder %v4454, 1
      %vm4462 = vcmp.eq.s32.totalorder %v4455, 1
      %vm4463 = vcmp.eq.s32.totalorder %v4456, 1
      %vm4464 = vcmp.eq.s32.totalorder %v4457, 1
      %vm4465 = vcmp.eq.s32.totalorder %v4458, 1
      %vm4466 = vcmp.eq.s32.totalorder %v4459, 1
      %vm4467 = vcmp.eq.s32.totalorder %v4460, 1
      %v4468 = vsel %vm4461, %v4383, 0.0
      %v4469 = vsel %vm4462, %v4390, 0.0
      %v4470 = vsel %vm4463, %v4397, 0.0
      %v4471 = vsel %vm4464, %v4404, 0.0
      %v4472 = vsel %vm4465, %v4411, 0.0
      %v4473 = vsel %vm4466, %v4418, 0.0
      %v4474 = vsel %vm4467, %v4369, 0.0
      %v4475 = vadd.f32 %v4468, %v4469
      %v4476 = vadd.f32 %v4475, %v4470
      %v4477 = vadd.f32 %v4476, %v4471
      %v4478 = vadd.f32 %v4477, %v4472
      %v4479 = vadd.f32 %v4478, %v4473
      %vm4480 = vcmask 1040384
      %v4481 = vsel %vm4480, %v4474, 0.0
      %v4482 = vadd.f32 %v4479, %v4481
      %v4483 = vrot.slane %v4482, 4
      %v4484 = vadd.f32 %v4482, %v4483
      %v4485 = vrot.slane %v4484, 2
      %v4486 = vadd.f32 %v4484, %v4485
      %v4487 = vrot.slane %v4486, 1
      %v4488 = vadd.f32 %v4486, %v4487
      %v4489 = vmul.f32 %v4468, %v4468
      %v4490 = vmul.f32 %v4469, %v4469
      %v4491 = vmul.f32 %v4470, %v4470
      %v4492 = vmul.f32 %v4471, %v4471
      %v4493 = vmul.f32 %v4472, %v4472
      %v4494 = vmul.f32 %v4473, %v4473
      %v4495 = vmul.f32 %v4474, %v4474
      %v4496 = vadd.f32 %v4489, %v4490
      %v4497 = vadd.f32 %v4496, %v4491
      %v4498 = vadd.f32 %v4497, %v4492
      %v4499 = vadd.f32 %v4498, %v4493
      %v4500 = vadd.f32 %v4499, %v4494
      %v4501 = vsel %vm4480, %v4495, 0.0
      %v4502 = vadd.f32 %v4500, %v4501
      %v4503 = vrot.slane %v4502, 4
      %v4504 = vadd.f32 %v4502, %v4503
      %v4505 = vrot.slane %v4504, 2
      %v4506 = vadd.f32 %v4504, %v4505
      %v4507 = vrot.slane %v4506, 1
      %v4508 = vadd.f32 %v4506, %v4507
      %4509 = vst [vmem:[%s265] sm:$0xff] %v4488
      %4510 = vst [vmem:[%s271] sm:$0xff] %v4508
      %s4511 = sadd.s32 %s21, %s22
      %p4512 = scmp.lt.s32.totalorder %s4511, 1
      %s4513 = scalar_select %p4512, %s4511, 1
      %s4514 = smul.addr %s4513, 7
      %s4515 = smul.addr %s4514, 8
      %s4516 = scalar_lea.vmem %s3, %s4515
      %s4517 = sadd.s32 %s21, %s22
      %p4518 = scmp.lt.s32.totalorder %s4517, 1
      %s4519 = scalar_select %p4518, %s4517, 1
      %s4520 = smul.addr %s4519, 8
      %s4521 = scalar_lea.vmem %s4, %s4520
      %s4522 = sadd.s32 %s21, %s22
      %p4523 = scmp.lt.s32.totalorder %s4522, 1
      %s4524 = scalar_select %p4523, %s4522, 1
      %s4525 = smul.addr %s4524, 8
      %s4526 = scalar_lea.vmem %s5, %s4525
      // Predicated region
      $region33: #{conv_block_forward.2} parent=31 // pred_check
        %p4527 = pneg %p117
      $region34: #{conv_block_forward.2} parent=31 // pred_check_branch
        %4529 = sbr.rel (%p4527) target = $region36
      $region35: #{conv_block_forward.2} parent=31 // pred_region
        %s4530 = sadd.s32 %s21, %s22
      $region36: #{conv_block_forward.2} parent=31 // pred_fallthru
        _
      // Predicated region
      $region37: #{conv_block_forward.2} parent=31 // pred_check
        %p4531 = pneg %p145
      $region38: #{conv_block_forward.2} parent=31 // pred_check_branch
        %4533 = sbr.rel (%p4531) target = $region40
      $region39: #{conv_block_forward.2} parent=31 // pred_region
        %s4534 = sadd.s32 %s21, %s22
      $region40: #{conv_block_forward.2} parent=31 // pred_fallthru
        _
      // Predicated region
      $region41: #{conv_block_forward.2} parent=31 // pred_check
        %p4535 = pneg %p173
      $region42: #{conv_block_forward.2} parent=31 // pred_check_branch
        %4537 = sbr.rel (%p4535) target = $region44
      $region43: #{conv_block_forward.2} parent=31 // pred_region
        %s4538 = sadd.s32 %s21, %s22
      $region44: #{conv_block_forward.2} parent=31 // pred_fallthru
        _
    $region32: #{conv_block_forward.2} parent=5 // pred_fallthru
      _
    %p4539 = scmp.le.s32.totalorder 2, %s12
    // Predicated region
    $region45: #{conv_block_forward.2} parent=5 // pred_check
      %p4540 = pneg %p4539
    $region46: #{conv_block_forward.2} parent=5 // pred_check_branch
      %4542 = sbr.rel (%p4540) target = $region48
    $region47: #{conv_block_forward.2} parent=5 // pred_region
      %s4543 = ssub.s32 %s12, 2
      // Predicated region
      $region49: #{conv_block_forward.2} parent=47 // pred_check
        %p4544 = pneg %p123
      $region50: #{conv_block_forward.2} parent=47 // pred_check_branch
        %4546 = sbr.rel (%p4544) target = $region52
      $region51: #{conv_block_forward.2} parent=47 // pred_region
        %s4547 = sadd.s32 %s23, %s24
        %p4548 = scmp.lt.s32.totalorder %s4547, 1
        %s4549 = scalar_select %p4548, %s4547, 1
        %s4550 = smul.addr %s4549, 7
        %s4551 = smul.addr %s4550, 8
        %s4552 = scalar_lea.vmem %s3, %s4551
      $region52: #{conv_block_forward.2} parent=47 // pred_fallthru
        _
      // Predicated region
      $region53: #{conv_block_forward.2} parent=47 // pred_check
        %p4553 = pneg %p151
      $region54: #{conv_block_forward.2} parent=47 // pred_check_branch
        %4555 = sbr.rel (%p4553) target = $region56
      $region55: #{conv_block_forward.2} parent=47 // pred_region
        %s4556 = sadd.s32 %s23, %s24
        %p4557 = scmp.lt.s32.totalorder %s4556, 1
        %s4558 = scalar_select %p4557, %s4556, 1
        %s4559 = smul.addr %s4558, 8
        %s4560 = scalar_lea.vmem %s4, %s4559
      $region56: #{conv_block_forward.2} parent=47 // pred_fallthru
        _
      // Predicated region
      $region57: #{conv_block_forward.2} parent=47 // pred_check
        %p4561 = pneg %p179
      $region58: #{conv_block_forward.2} parent=47 // pred_check_branch
        %4563 = sbr.rel (%p4561) target = $region60
      $region59: #{conv_block_forward.2} parent=47 // pred_region
        %s4564 = sadd.s32 %s23, %s24
        %p4565 = scmp.lt.s32.totalorder %s4564, 1
        %s4566 = scalar_select %p4565, %s4564, 1
        %s4567 = smul.addr %s4566, 8
        %s4568 = scalar_lea.vmem %s5, %s4567
      $region60: #{conv_block_forward.2} parent=47 // pred_fallthru
        _
    $region48: #{conv_block_forward.2} parent=5 // pred_fallthru
      _
  $region6: #{conv_block_forward.2} parent=0 // loop_footer
    %s16 = sadd.s32 1, %s12
  $region7: #{conv_block_forward.2} parent=0 // loop_footer_branch
    %11 = sbr.rel target = $region3
  $region8: #{conv_block_forward.2} parent=0 // loop_exit
    _

</llo_original>
